<compile_context>
chip_gen: v7x
topology: tpu7x:2x2x1
jax: 0.10.0
libtpu: 0.0.40
codegen_flags: <defaults>
</compile_context>

<pallas_src>
import jax
import jax.numpy as jnp
from jax import lax
from jax.experimental import pallas as pl
from jax.experimental.pallas import tpu as pltpu


def _round_up(x, m):
    return (x + m - 1) // m * m


def veconv_kernel(src_ref, dst_ref, rbf_ref, edgef_ref, node_ref,
                  w1_ref, b1_ref, w2_ref, b2_ref, w3_ref, b3_ref, out_ref):
    f32, bf16 = jnp.float32, jnp.bfloat16
    te = rbf_ref.shape[0]            # edge tile
    n_p = node_ref.shape[0]          # full padded node count (lane axis of src one-hot)
    tn = out_ref.shape[0]            # node tile owned by this program (grid axis 0)
    dim_p = node_ref.shape[1]

    n_idx = pl.program_id(0)         # node-tile index ("parallel")
    e_idx = pl.program_id(1)         # edge-tile index ("arbitrary" reduction)

    @pl.when(e_idx == 0)
    def _():
        out_ref[...] = jnp.zeros_like(out_ref)

    # --- update_rbf part 1: h = softplus_{beta=0.5, threshold=14}(rbf @ W1 + b1)
    h = jnp.dot(rbf_ref[...], w1_ref[...], preferred_element_type=f32) + b1_ref[...]
    z = 0.5 * h
    sp = 2.0 * jnp.log1p(jnp.exp(jnp.minimum(z, 14.0)))
    h = jnp.where(z > 14.0, h, sp)

    # --- linear2 (on h) and linear3 (on edge_f): two separate K=dim_p GEMMs.
    h2 = jnp.dot(h.astype(bf16), w2_ref[...], preferred_element_type=f32) + b2_ref[...]
    ef2 = jnp.dot(edgef_ref[...], w3_ref[...], preferred_element_type=f32) + b3_ref[...]

    # --- gather src node features: exact 0/1 one-hot (bf16) @ node table (bf16).
    lanes = lax.broadcasted_iota(jnp.int32, (te, n_p), 1)
    src_oh = (lanes == src_ref[...]).astype(bf16)                          # (te, n_p)
    src_feat = jnp.dot(src_oh, node_ref[...], preferred_element_type=f32)  # (te, dim_p)

    # --- message: m = u_mul_e(new_node, h) + copy_e(edge_f)
    msg = (src_feat * h2 + ef2).astype(bf16)                               # (te, dim_p)

    # --- scatter-sum onto this node tile.  The one-hot is built already
    #     transposed (node index on sublanes) so the reduction is a plain
    #     last-dim matmul.  Padded edges have dst = -1 -> zero row -> no-op.
    node_ids = lax.broadcasted_iota(jnp.int32, (tn, te), 0) + n_idx * tn
    dst_oh_t = (node_ids == dst_ref[...]).astype(bf16)                     # (tn, te)
    out_ref[...] += jnp.dot(dst_oh_t, msg, preferred_element_type=f32)     # (tn, dim_p)


def pack_params(params, rbf_dim, dim):
    """Pad/cast the six Linear params once, outside the per-step hot path."""
    w1, b1, w2, b2, w3, b3 = params
    f32, bf16 = jnp.float32, jnp.bfloat16
    dim_p = _round_up(dim, 128)

    def pad_w(w, rows, cols):
        w = jnp.asarray(w, bf16)
        return jnp.pad(w, ((0, rows - w.shape[0]), (0, cols - w.shape[1])))

    def pad_b(b, cols):
        b = jnp.asarray(b, f32).reshape(1, -1)
        return jnp.pad(b, ((0, 0), (0, cols - b.shape[-1])))

    return dict(
        w1=pad_w(w1, rbf_dim, dim_p), b1=pad_b(b1, dim_p),
        w2=pad_w(w2, dim_p, dim_p), b2=pad_b(b2, dim_p),
        w3=pad_w(w3, dim_p, dim_p), b3=pad_b(b3, dim_p),
        dim=dim, rbf_dim=rbf_dim, dim_p=dim_p,
    )


def veconv(node_feat, rbf, edge_f, src_ids, dst_ids, packed, *,
           edge_tile=512, node_tile=None):
    """VEConv forward. Returns updated node features (N, dim), float32."""
    num_nodes, dim = node_feat.shape
    num_edges, rbf_dim = rbf.shape
    assert dim == packed["dim"] and rbf_dim == packed["rbf_dim"]

    f32, bf16 = jnp.float32, jnp.bfloat16
    dim_p = packed["dim_p"]
    n_p = _round_up(num_nodes, 128)          # lane-dense one-hot / tile-aligned table
    te = edge_tile
    e_p = _round_up(max(num_edges, 1), te)
    tn = n_p if node_tile is None else node_tile
    assert tn % 8 == 0 and n_p % tn == 0

    # ---- per-call data padding (single jnp.pad each).  dst is padded with the
    #      -1 sentinel so padded edges scatter nowhere; do not change this.
    node_p = jnp.pad(node_feat.astype(bf16),
                     ((0, n_p - num_nodes), (0, dim_p - dim)))
    rbf_p = jnp.pad(rbf.astype(bf16), ((0, e_p - num_edges), (0, 0)))
    edgef_p = jnp.pad(edge_f.astype(bf16),
                      ((0, e_p - num_edges), (0, dim_p - dim)))
    src_p = jnp.pad(src_ids.astype(jnp.int32), (0, e_p - num_edges),
                    constant_values=0).reshape(e_p, 1)
    dst_p = jnp.pad(dst_ids.astype(jnp.int32), (0, e_p - num_edges),
                    constant_values=-1).reshape(1, e_p)

    grid = (n_p // tn, e_p // te)

    def edge_block(shape, idx):
        # idx selects which axis of the padded edge array carries E.
        if idx == 0:
            return pl.BlockSpec(shape, lambda n, i: (i, 0))
        return pl.BlockSpec(shape, lambda n, i: (0, i))

    def const_block(shape):
        return pl.BlockSpec(shape, lambda n, i: (0, 0))

    # ---- VMEM budget (double-buffered edge streams + resident table/weights
    #      + one-hot / f32 intermediates), with 2x headroom, clamped.
    const_bytes = (n_p * dim_p * 2                                  # node table (bf16)
                   + (rbf_dim + 2 * dim_p) * dim_p * 2              # W1, W2, W3 (bf16)
                   + 3 * 8 * dim_p * 4)                             # biases (sublane-padded)
    edge_step_bytes = (te * 128 * 4                                 # src ids (lane-padded)
                       + 8 * te * 4                                 # dst ids (sublane-padded)
                       + te * _round_up(rbf_dim, 128) * 2           # rbf block
                       + te * dim_p * 2)                            # edge_f block
    scratch_bytes = (te * n_p + tn * te) * 2 + 6 * te * dim_p * 4   # one-hots + f32 temps
    out_bytes = 2 * tn * dim_p * 4
    vmem_limit = int(min(max(2 * (const_bytes + 2 * edge_step_bytes
                                  + scratch_bytes + out_bytes), 16 << 20), 96 << 20))

    out_p = pl.pallas_call(
        veconv_kernel,
        out_shape=jax.ShapeDtypeStruct((n_p, dim_p), f32),
        grid_spec=pltpu.PrefetchScalarGridSpec(
            num_scalar_prefetch=0,
            grid=grid,
            in_specs=[
                edge_block((te, 1), 0),              # src ids   (E-blocked, column)
                edge_block((1, te), 1),              # dst ids   (E-blocked, row)
                edge_block((te, rbf_dim), 0),        # rbf       (E-blocked)
                edge_block((te, dim_p), 0),          # edge_f    (E-blocked)
                const_block((n_p, dim_p)),           # node table (VMEM-resident)
                const_block((rbf_dim, dim_p)),       # W1
                const_block((1, dim_p)),             # b1
                const_block((dim_p, dim_p)),         # W2
                const_block((1, dim_p)),             # b2
                const_block((dim_p, dim_p)),         # W3
                const_block((1, dim_p)),             # b3
            ],
            out_specs=pl.BlockSpec((tn, dim_p), lambda n, i: (n, 0)),  # resident accumulator
        ),
        compiler_params=pltpu.CompilerParams(
            dimension_semantics=("parallel", "arbitrary"),  # node tiles || , edge axis = reduction
            vmem_limit_bytes=vmem_limit,
        ),
    )(src_p, dst_p, rbf_p, edgef_p, node_p,
      packed["w1"], packed["b1"], packed["w2"], packed["b2"],
      packed["w3"], packed["b3"])

    return out_p[:num_nodes, :dim]


def veconv_ref(node_feat, rbf, edge_f, src_ids, dst_ids, params):
    """Pure-JAX f32 reference mirroring the PyTorch forward."""
    w1, b1, w2, b2, w3, b3 = params
    h = rbf @ w1 + b1
    z = 0.5 * h
    h = jnp.where(z > 14.0, h, 2.0 * jnp.log1p(jnp.exp(jnp.minimum(z, 14.0))))
    h = h @ w2 + b2
    ef = edge_f @ w3 + b3
    m = node_feat[src_ids] * h + ef
    out = jnp.zeros_like(node_feat)
    return out.at[dst_ids].add(m)


if __name__ == "__main__":
    N, E, RBF_DIM, DIM = 200, 1000, 32, 64

    key = jax.random.PRNGKey(0)
    k = jax.random.split(key, 11)

    node_feat = jax.random.normal(k[0], (N, DIM), dtype=jnp.float32)     # g.ndata['new_node']
    rbf = jax.random.normal(k[1], (E, RBF_DIM), dtype=jnp.float32)       # g.edata['rbf']
    edge_f = jax.random.normal(k[2], (E, DIM), dtype=jnp.float32)        # g.edata['edge_f']

    # deterministic synthetic weights, stored as (in, out); biases as (1, out)
    w1 = 0.1 * jax.random.normal(k[3], (RBF_DIM, DIM), dtype=jnp.float32)
    b1 = 0.1 * jax.random.normal(k[4], (1, DIM), dtype=jnp.float32)
    w2 = 0.1 * jax.random.normal(k[5], (DIM, DIM), dtype=jnp.float32)
    b2 = 0.1 * jax.random.normal(k[6], (1, DIM), dtype=jnp.float32)
    w3 = 0.1 * jax.random.normal(k[7], (DIM, DIM), dtype=jnp.float32)
    b3 = 0.1 * jax.random.normal(k[8], (1, DIM), dtype=jnp.float32)
    params = (w1, b1, w2, b2, w3, b3)

    # deterministic synthetic directed graph (E edges over N nodes)
    src_ids = jax.random.randint(k[9], (E,), 0, N, dtype=jnp.int32)
    dst_ids = jax.random.randint(k[10], (E,), 0, N, dtype=jnp.int32)
    assert int(jnp.max(src_ids)) < N and int(jnp.max(dst_ids)) < N        # trusted-id check

    packed = pack_params(params, RBF_DIM, DIM)                            # once, outside hot path

    # node_tile=128 (n_p=256 -> 2 parallel node tiles) and edge_tile=512
    # (e_p=1024 -> 2 reduction steps): exercises both grid axes and the
    # resident-accumulator path.
    out = veconv(node_feat, rbf, edge_f, src_ids, dst_ids, packed,
                 edge_tile=512, node_tile=128)
    out = jax.block_until_ready(out)

    ref = veconv_ref(node_feat, rbf, edge_f, src_ids, dst_ids, params)
    assert out.shape == (N, DIM)

    # bf16 MXU operands (exact 0/1 one-hots, bf16 features/weights, f32
    # accumulation) give ~1e-2-level error on the edge-summed outputs; check
    # error relative to output scale.
    max_err = float(jnp.max(jnp.abs(out - ref)))
    scale = max(float(jnp.max(jnp.abs(ref))), 1.0)
    assert max_err <= 2e-2 * scale, (max_err, scale)

    print("KERNEL_OK")
</pallas_src>

<mosaic_0001>
module attributes {stable_mosaic.version = 11 : i64} {
  func.func @veconv_kernel(%arg0: i32, %arg1: i32, %arg2: memref<512x1xi32, #tpu.memory_space<vmem>>, %arg3: memref<1x512xi32, #tpu.memory_space<vmem>>, %arg4: memref<512x32xbf16, #tpu.memory_space<vmem>>, %arg5: memref<512x128xbf16, #tpu.memory_space<vmem>>, %arg6: memref<256x128xbf16, #tpu.memory_space<vmem>>, %arg7: memref<32x128xbf16, #tpu.memory_space<vmem>>, %arg8: memref<1x128xf32, #tpu.memory_space<vmem>>, %arg9: memref<128x128xbf16, #tpu.memory_space<vmem>>, %arg10: memref<1x128xf32, #tpu.memory_space<vmem>>, %arg11: memref<128x128xbf16, #tpu.memory_space<vmem>>, %arg12: memref<1x128xf32, #tpu.memory_space<vmem>>, %arg13: memref<128x128xf32, #tpu.memory_space<vmem>>) attributes {dimension_semantics = [#tpu.dimension_semantics<parallel>, #tpu.dimension_semantics<arbitrary>], iteration_bounds = array<i64: 2, 2>, scalar_prefetch = 0 : i64, scratch_operands = 0 : i64, tpu.core_type = #tpu.core_type<tc>, window_params = [{transform_indices = @transform_0, window_bounds = array<i64: 512, 1>}, {transform_indices = @transform_1, window_bounds = array<i64: 1, 512>}, {transform_indices = @transform_2, window_bounds = array<i64: 512, 32>}, {transform_indices = @transform_3, window_bounds = array<i64: 512, 128>}, {pipeline_mode = #tpu.pipeline_mode<synchronous>, transform_indices = @transform_4, window_bounds = array<i64: 256, 128>}, {pipeline_mode = #tpu.pipeline_mode<synchronous>, transform_indices = @transform_5, window_bounds = array<i64: 32, 128>}, {pipeline_mode = #tpu.pipeline_mode<synchronous>, transform_indices = @transform_6, window_bounds = array<i64: 1, 128>}, {pipeline_mode = #tpu.pipeline_mode<synchronous>, transform_indices = @transform_7, window_bounds = array<i64: 128, 128>}, {pipeline_mode = #tpu.pipeline_mode<synchronous>, transform_indices = @transform_8, window_bounds = array<i64: 1, 128>}, {pipeline_mode = #tpu.pipeline_mode<synchronous>, transform_indices = @transform_9, window_bounds = array<i64: 128, 128>}, {pipeline_mode = #tpu.pipeline_mode<synchronous>, transform_indices = @transform_10, window_bounds = array<i64: 1, 128>}, {transform_indices = @transform_11, window_bounds = array<i64: 128, 128>}]} {
    %c0_i32 = arith.constant 0 : i32
    %0 = arith.cmpi eq, %arg1, %c0_i32 : i32
    %1 = arith.extui %0 : i1 to i32
    %c0_i32_0 = arith.constant 0 : i32
    %2 = arith.cmpi ne, %1, %c0_i32_0 : i32
    scf.if %2 {
      %cst_34 = arith.constant 0.000000e+00 : f32
      %58 = vector.broadcast %cst_34 : f32 to vector<128x128xf32>
      %c0_35 = arith.constant 0 : index
      %c0_36 = arith.constant 0 : index
      %59 = vector.load %arg13[%c0_35, %c0_36] : memref<128x128xf32, #tpu.memory_space<vmem>>, vector<128x128xf32>
      tpu.vector_store %arg13[%c0_35, %c0_36], %58 {strides = array<i32>} : memref<128x128xf32, #tpu.memory_space<vmem>>, vector<128x128xf32>,
    } else {
    }
    %c0 = arith.constant 0 : index
    %c0_1 = arith.constant 0 : index
    %3 = vector.load %arg4[%c0, %c0_1] : memref<512x32xbf16, #tpu.memory_space<vmem>>, vector<512x32xbf16>
    %c0_2 = arith.constant 0 : index
    %c0_3 = arith.constant 0 : index
    %4 = vector.load %arg7[%c0_2, %c0_3] : memref<32x128xbf16, #tpu.memory_space<vmem>>, vector<32x128xbf16>
    %cst = arith.constant dense<0.000000e+00> : vector<512x128xf32>
    %5 = tpu.matmul %3, %4, %cst {dimension_numbers = #tpu.dot_dimension_numbers<[1], [0], [0], [1], [0, 0, 1, 1], [], []>} : vector<512x32xbf16>, vector<32x128xbf16>, vector<512x128xf32> -> vector<512x128xf32>
    %c0_4 = arith.constant 0 : index
    %c0_5 = arith.constant 0 : index
    %6 = vector.load %arg8[%c0_4, %c0_5] : memref<1x128xf32, #tpu.memory_space<vmem>>, vector<1x128xf32>
    %7 = vector.broadcast %6 : vector<1x128xf32> to vector<512x128xf32>
    %8 = arith.addf %5, %7 : vector<512x128xf32>
    %cst_6 = arith.constant 5.000000e-01 : f32
    %9 = vector.broadcast %cst_6 : f32 to vector<512x128xf32>
    %10 = arith.mulf %9, %8 : vector<512x128xf32>
    %cst_7 = arith.constant 1.400000e+01 : f32
    %11 = vector.broadcast %cst_7 : f32 to vector<512x128xf32>
    %12 = arith.minimumf %10, %11 : vector<512x128xf32>
    %13 = math.exp %12 : vector<512x128xf32>
    %14 = math.log1p %13 : vector<512x128xf32>
    %cst_8 = arith.constant 2.000000e+00 : f32
    %15 = vector.broadcast %cst_8 : f32 to vector<512x128xf32>
    %16 = arith.mulf %15, %14 : vector<512x128xf32>
    %cst_9 = arith.constant 1.400000e+01 : f32
    %17 = vector.broadcast %cst_9 : f32 to vector<512x128xf32>
    %18 = arith.cmpf ogt, %10, %17 : vector<512x128xf32>
    %19 = arith.select %18, %8, %16 : vector<512x128xi1>, vector<512x128xf32>
    %20 = arith.truncf %19 : vector<512x128xf32> to vector<512x128xbf16>
    %c0_10 = arith.constant 0 : index
    %c0_11 = arith.constant 0 : index
    %21 = vector.load %arg9[%c0_10, %c0_11] : memref<128x128xbf16, #tpu.memory_space<vmem>>, vector<128x128xbf16>
    %cst_12 = arith.constant dense<0.000000e+00> : vector<512x128xf32>
    %22 = tpu.matmul %20, %21, %cst_12 {dimension_numbers = #tpu.dot_dimension_numbers<[1], [0], [0], [1], [0, 0, 1, 1], [], []>} : vector<512x128xbf16>, vector<128x128xbf16>, vector<512x128xf32> -> vector<512x128xf32>
    %c0_13 = arith.constant 0 : index
    %c0_14 = arith.constant 0 : index
    %23 = vector.load %arg10[%c0_13, %c0_14] : memref<1x128xf32, #tpu.memory_space<vmem>>, vector<1x128xf32>
    %24 = vector.broadcast %23 : vector<1x128xf32> to vector<512x128xf32>
    %25 = arith.addf %22, %24 : vector<512x128xf32>
    %c0_15 = arith.constant 0 : index
    %c0_16 = arith.constant 0 : index
    %26 = vector.load %arg5[%c0_15, %c0_16] : memref<512x128xbf16, #tpu.memory_space<vmem>>, vector<512x128xbf16>
    %c0_17 = arith.constant 0 : index
    %c0_18 = arith.constant 0 : index
    %27 = vector.load %arg11[%c0_17, %c0_18] : memref<128x128xbf16, #tpu.memory_space<vmem>>, vector<128x128xbf16>
    %cst_19 = arith.constant dense<0.000000e+00> : vector<512x128xf32>
    %28 = tpu.matmul %26, %27, %cst_19 {dimension_numbers = #tpu.dot_dimension_numbers<[1], [0], [0], [1], [0, 0, 1, 1], [], []>} : vector<512x128xbf16>, vector<128x128xbf16>, vector<512x128xf32> -> vector<512x128xf32>
    %c0_20 = arith.constant 0 : index
    %c0_21 = arith.constant 0 : index
    %29 = vector.load %arg12[%c0_20, %c0_21] : memref<1x128xf32, #tpu.memory_space<vmem>>, vector<1x128xf32>
    %30 = vector.broadcast %29 : vector<1x128xf32> to vector<512x128xf32>
    %31 = arith.addf %28, %30 : vector<512x128xf32>
    %32 = tpu.iota {dimensions = array<i32: 1>} : vector<512x256xi32>
    %c0_22 = arith.constant 0 : index
    %c0_23 = arith.constant 0 : index
    %33 = vector.load %arg2[%c0_22, %c0_23] : memref<512x1xi32, #tpu.memory_space<vmem>>, vector<512x1xi32>
    %34 = vector.broadcast %33 : vector<512x1xi32> to vector<512x256xi32>
    %35 = arith.cmpi eq, %32, %34 : vector<512x256xi32>
    %36 = arith.extui %35 : vector<512x256xi1> to vector<512x256xi32>
    %37 = arith.sitofp %36 : vector<512x256xi32> to vector<512x256xf32>
    %38 = arith.truncf %37 : vector<512x256xf32> to vector<512x256xbf16>
    %c0_24 = arith.constant 0 : index
    %c0_25 = arith.constant 0 : index
    %39 = vector.load %arg6[%c0_24, %c0_25] : memref<256x128xbf16, #tpu.memory_space<vmem>>, vector<256x128xbf16>
    %cst_26 = arith.constant dense<0.000000e+00> : vector<512x128xf32>
    %40 = tpu.matmul %38, %39, %cst_26 {dimension_numbers = #tpu.dot_dimension_numbers<[1], [0], [0], [1], [0, 0, 1, 1], [], []>} : vector<512x256xbf16>, vector<256x128xbf16>, vector<512x128xf32> -> vector<512x128xf32>
    %41 = arith.mulf %40, %25 : vector<512x128xf32>
    %42 = arith.addf %41, %31 : vector<512x128xf32>
    %43 = arith.truncf %42 : vector<512x128xf32> to vector<512x128xbf16>
    %44 = tpu.iota {dimensions = array<i32: 0>} : vector<128x512xi32>
    %c128_i32 = arith.constant 128 : i32
    %45 = arith.muli %arg0, %c128_i32 : i32
    %46 = vector.broadcast %45 : i32 to vector<128x512xi32>
    %47 = arith.addi %44, %46 : vector<128x512xi32>
    %c0_27 = arith.constant 0 : index
    %c0_28 = arith.constant 0 : index
    %48 = vector.load %arg3[%c0_27, %c0_28] : memref<1x512xi32, #tpu.memory_space<vmem>>, vector<1x512xi32>
    %49 = vector.broadcast %48 : vector<1x512xi32> to vector<128x512xi32>
    %50 = arith.cmpi eq, %47, %49 : vector<128x512xi32>
    %51 = arith.extui %50 : vector<128x512xi1> to vector<128x512xi32>
    %52 = arith.sitofp %51 : vector<128x512xi32> to vector<128x512xf32>
    %53 = arith.truncf %52 : vector<128x512xf32> to vector<128x512xbf16>
    %c0_29 = arith.constant 0 : index
    %c0_30 = arith.constant 0 : index
    %54 = vector.load %arg13[%c0_29, %c0_30] : memref<128x128xf32, #tpu.memory_space<vmem>>, vector<128x128xf32>
    %cst_31 = arith.constant dense<0.000000e+00> : vector<128x128xf32>
    %55 = tpu.matmul %53, %43, %cst_31 {dimension_numbers = #tpu.dot_dimension_numbers<[1], [0], [0], [1], [0, 0, 1, 1], [], []>} : vector<128x512xbf16>, vector<512x128xbf16>, vector<128x128xf32> -> vector<128x128xf32>
    %56 = arith.addf %54, %55 : vector<128x128xf32>
    %c0_32 = arith.constant 0 : index
    %c0_33 = arith.constant 0 : index
    %57 = vector.load %arg13[%c0_32, %c0_33] : memref<128x128xf32, #tpu.memory_space<vmem>>, vector<128x128xf32>
    tpu.vector_store %arg13[%c0_32, %c0_33], %56 {strides = array<i32>} : memref<128x128xf32, #tpu.memory_space<vmem>>, vector<128x128xf32>,
    return
  }
  func.func @transform_0(%arg0: i32, %arg1: i32) -> (i32, i32) {
    %c0_i32 = arith.constant 0 : i32
    %c0_i32_0 = arith.constant 0 : i32
    return %arg1, %c0_i32 : i32, i32
  }
  func.func @transform_1(%arg0: i32, %arg1: i32) -> (i32, i32) {
    %c0_i32 = arith.constant 0 : i32
    %c0_i32_0 = arith.constant 0 : i32
    return %c0_i32, %arg1 : i32, i32
  }
  func.func @transform_2(%arg0: i32, %arg1: i32) -> (i32, i32) {
    %c0_i32 = arith.constant 0 : i32
    %c0_i32_0 = arith.constant 0 : i32
    return %arg1, %c0_i32 : i32, i32
  }
  func.func @transform_3(%arg0: i32, %arg1: i32) -> (i32, i32) {
    %c0_i32 = arith.constant 0 : i32
    %c0_i32_0 = arith.constant 0 : i32
    return %arg1, %c0_i32 : i32, i32
  }
  func.func @transform_4(%arg0: i32, %arg1: i32) -> (i32, i32) {
    %c0_i32 = arith.constant 0 : i32
    %c0_i32_0 = arith.constant 0 : i32
    %c0_i32_1 = arith.constant 0 : i32
    return %c0_i32, %c0_i32_0 : i32, i32
  }
  func.func @transform_5(%arg0: i32, %arg1: i32) -> (i32, i32) {
    %c0_i32 = arith.constant 0 : i32
    %c0_i32_0 = arith.constant 0 : i32
    %c0_i32_1 = arith.constant 0 : i32
    return %c0_i32, %c0_i32_0 : i32, i32
  }
  func.func @transform_6(%arg0: i32, %arg1: i32) -> (i32, i32) {
    %c0_i32 = arith.constant 0 : i32
    %c0_i32_0 = arith.constant 0 : i32
    %c0_i32_1 = arith.constant 0 : i32
    return %c0_i32, %c0_i32_0 : i32, i32
  }
  func.func @transform_7(%arg0: i32, %arg1: i32) -> (i32, i32) {
    %c0_i32 = arith.constant 0 : i32
    %c0_i32_0 = arith.constant 0 : i32
    %c0_i32_1 = arith.constant 0 : i32
    return %c0_i32, %c0_i32_0 : i32, i32
  }
  func.func @transform_8(%arg0: i32, %arg1: i32) -> (i32, i32) {
    %c0_i32 = arith.constant 0 : i32
    %c0_i32_0 = arith.constant 0 : i32
    %c0_i32_1 = arith.constant 0 : i32
    return %c0_i32, %c0_i32_0 : i32, i32
  }
  func.func @transform_9(%arg0: i32, %arg1: i32) -> (i32, i32) {
    %c0_i32 = arith.constant 0 : i32
    %c0_i32_0 = arith.constant 0 : i32
    %c0_i32_1 = arith.constant 0 : i32
    return %c0_i32, %c0_i32_0 : i32, i32
  }
  func.func @transform_10(%arg0: i32, %arg1: i32) -> (i32, i32) {
    %c0_i32 = arith.constant 0 : i32
    %c0_i32_0 = arith.constant 0 : i32
    %c0_i32_1 = arith.constant 0 : i32
    return %c0_i32, %c0_i32_0 : i32, i32
  }
  func.func @transform_11(%arg0: i32, %arg1: i32) -> (i32, i32) {
    %c0_i32 = arith.constant 0 : i32
    %c0_i32_0 = arith.constant 0 : i32
    return %arg0, %c0_i32 : i32, i32
  }
}

</mosaic_0001>

<llo_original>
// kernel: tpu_custom_call.1
$region0: #{tpu_custom_call.1}
  #allocation0 [shape = 'u32[]', space=smem, size = 0x4, offset = 0x4, fixed_abs, tag = 'smem constant byte address 0x4 - core index']
  #allocation1 [shape = 'u32[144,128]{1,0:T(1,128)}', space=vmem, size = 0x12000, scoped, tag = 'internal scratch']
  %s0 = inlined_call_operand.vmem [shape: s32[1024,1], index: 0, kind: input, shape index: {}]
  %s1 = inlined_call_operand.vmem [shape: s32[1,1024], index: 1, kind: input, shape index: {}]
  %s2 = inlined_call_operand.vmem [shape: bf16[1024,32], index: 2, kind: input, shape index: {}]
  %s3 = inlined_call_operand.vmem [shape: bf16[1024,128], index: 3, kind: input, shape index: {}]
  %s4 = inlined_call_operand.vmem [shape: bf16[256,128], index: 4, kind: input, shape index: {}]
  %s5 = inlined_call_operand.vmem [shape: bf16[32,128], index: 5, kind: input, shape index: {}]
  %s6 = inlined_call_operand.vmem [shape: f32[1,128], index: 6, kind: input, shape index: {}]
  %s7 = inlined_call_operand.vmem [shape: bf16[128,128], index: 7, kind: input, shape index: {}]
  %s8 = inlined_call_operand.vmem [shape: f32[1,128], index: 8, kind: input, shape index: {}]
  %s9 = inlined_call_operand.vmem [shape: bf16[128,128], index: 9, kind: input, shape index: {}]
  %s10 = inlined_call_operand.vmem [shape: f32[1,128], index: 10, kind: input, shape index: {}]
  %s11 = inlined_call_operand.hbm [shape: f32[256,128], index: 11, kind: output, shape index: {}]
  %s12 = sld [smem:[#allocation0]]
  $region81: #{tpu_custom_call.1} parent=0
    _
  %s14 = ssub.s32 1, %s12
  %s15 = scalar_select 0, %s14, %s12
  $region1: #{tpu_custom_call.1} parent=0
    #allocation2 [shape = 'u8[131072]{0}', space=vmem, size = 0x20000, scoped, tag = 'output window, operand 0']
    #allocation3 [shape = 's32[2]{0}', space=sflag, size = 0x8, scoped, tag = 'scoped memory for tpu_custom_call.1']
    %16 = vsyncpa [#allocation3], 0
    %s17 = scalar_lea.sflag [#allocation3], 1
    %18 = vsyncpa %s17, 0
    loop: start=0, step=1, limit=6
    $region2: #{tpu_custom_call.1} parent=1 // loop_pre_header
      _
    $region3: #{tpu_custom_call.1} parent=1 // loop_header
      %s20 = sphi 0, %s24
      %p21 = scmp.ge.s32.totalorder %s20, 6
      %s27 = sphi 0, %s39
      %s28 = sphi 0, %s35
      %s29 = sphi 0, %s27
      %s30 = sphi 0, %s28
      %s31 = sphi 0, %s29
      %s32 = sphi 0, %s30
      %s42 = sphi 0, %s44
      %s45 = sphi 0, %s42
      %s46 = sphi 0, %s45
      %s62 = sphi 0, %s46
      %s68 = sphi 0, %s70
      %s71 = sphi 0, %s68
      %s72 = sphi 0, %s71
      %s88 = sphi 0, %s72
      %s94 = sphi 0, %s96
      %s97 = sphi 0, %s94
      %s98 = sphi 0, %s97
      %s114 = sphi 0, %s98
      %s120 = sphi 0, %s122
      %s123 = sphi 0, %s120
      %s124 = sphi 0, %s123
      %s140 = sphi 0, %s124
      %s144 = sphi 0, %s144
      %s146 = sphi 0, %s144
      %s147 = sphi 0, %s146
      %s161 = sphi 0, %s147
      %s165 = sphi 0, %s165
      %s167 = sphi 0, %s165
      %s168 = sphi 0, %s167
      %s182 = sphi 0, %s168
      %s186 = sphi 0, %s186
      %s188 = sphi 0, %s186
      %s189 = sphi 0, %s188
      %s203 = sphi 0, %s189
      %s207 = sphi 0, %s207
      %s209 = sphi 0, %s207
      %s210 = sphi 0, %s209
      %s224 = sphi 0, %s210
      %s228 = sphi 0, %s228
      %s230 = sphi 0, %s228
      %s231 = sphi 0, %s230
      %s245 = sphi 0, %s231
      %s249 = sphi 0, %s249
      %s251 = sphi 0, %s249
      %s252 = sphi 0, %s251
      %s266 = sphi 0, %s252
      %s270 = sphi 0, %s270
      %s272 = sphi 0, %s270
      %s273 = sphi 0, %s272
      %s287 = sphi 0, %s273
      %s293 = sphi 0, %s295
      %s296 = sphi 0, %s293
      %s297 = sphi 0, %s296
      %s313 = sphi 0, %s297
    $region4: #{tpu_custom_call.1} parent=1 // loop_header_branch
      %23 = sbr.rel (%p21) target = $region8
    $region5: #{tpu_custom_call.1} parent=1 // loop_body
      %s25 = ssub.s32 %s20, 1
      %s26 = ssub.s32 %s20, 2
      %s33 = sadd.s32 1, %s28
      %p34 = scmp.ge.s32.totalorder %s33, 2
      %s35 = scalar_select %p34, 0, %s33
      %s36 = sadd.s32 1, %s27
      %s37 = scalar_select %p34, %s36, %s27
      %p38 = scmp.ge.s32.totalorder %s37, 2
      %s39 = scalar_select %p38, 0, %s37
      %s40 = ssub.s32 %s28, %s35
      %p41 = scmp.eq.s32.totalorder %s40, 0
      %s43 = sadd.s32 %s42, 1
      %s44 = scalar_select %p41, %s42, %s43
      %p47 = pneg %p41
      %p48 = scmp.eq.s32.totalorder %s20, 3
      %p49 = por %p47, %p48
      %p50 = scmp.ne.s32.totalorder %s42, %s45
      %p51 = scmp.eq.s32.totalorder %s20, 0
      %p52 = por %p50, %p51
      %p53 = scmp.ne.s32.totalorder %s42, %s45
      %p54 = scmp.eq.s32.totalorder %s25, 3
      %p55 = por %p53, %p54
      %p56 = scmp.ne.s32.totalorder %s45, %s46
      %p57 = scmp.eq.s32.totalorder %s25, 0
      %p58 = por %p56, %p57
      %p59 = scmp.ne.s32.totalorder %s45, %s46
      %p60 = scmp.eq.s32.totalorder %s26, 3
      %p61 = por %p59, %p60
      %p63 = scmp.ne.s32.totalorder %s46, %s62
      %p64 = scmp.eq.s32.totalorder %s26, 0
      %p65 = por %p63, %p64
      %s66 = ssub.s32 %s28, %s35
      %p67 = scmp.eq.s32.totalorder %s66, 0
      %s69 = sadd.s32 %s68, 1
      %s70 = scalar_select %p67, %s68, %s69
      %p73 = pneg %p67
      %p74 = scmp.eq.s32.totalorder %s20, 3
      %p75 = por %p73, %p74
      %p76 = scmp.ne.s32.totalorder %s68, %s71
      %p77 = scmp.eq.s32.totalorder %s20, 0
      %p78 = por %p76, %p77
      %p79 = scmp.ne.s32.totalorder %s68, %s71
      %p80 = scmp.eq.s32.totalorder %s25, 3
      %p81 = por %p79, %p80
      %p82 = scmp.ne.s32.totalorder %s71, %s72
      %p83 = scmp.eq.s32.totalorder %s25, 0
      %p84 = por %p82, %p83
      %p85 = scmp.ne.s32.totalorder %s71, %s72
      %p86 = scmp.eq.s32.totalorder %s26, 3
      %p87 = por %p85, %p86
      %p89 = scmp.ne.s32.totalorder %s72, %s88
      %p90 = scmp.eq.s32.totalorder %s26, 0
      %p91 = por %p89, %p90
      %s92 = ssub.s32 %s28, %s35
      %p93 = scmp.eq.s32.totalorder %s92, 0
      %s95 = sadd.s32 %s94, 1
      %s96 = scalar_select %p93, %s94, %s95
      %p99 = pneg %p93
      %p100 = scmp.eq.s32.totalorder %s20, 3
      %p101 = por %p99, %p100
      %p102 = scmp.ne.s32.totalorder %s94, %s97
      %p103 = scmp.eq.s32.totalorder %s20, 0
      %p104 = por %p102, %p103
      %p105 = scmp.ne.s32.totalorder %s94, %s97
      %p106 = scmp.eq.s32.totalorder %s25, 3
      %p107 = por %p105, %p106
      %p108 = scmp.ne.s32.totalorder %s97, %s98
      %p109 = scmp.eq.s32.totalorder %s25, 0
      %p110 = por %p108, %p109
      %p111 = scmp.ne.s32.totalorder %s97, %s98
      %p112 = scmp.eq.s32.totalorder %s26, 3
      %p113 = por %p111, %p112
      %p115 = scmp.ne.s32.totalorder %s98, %s114
      %p116 = scmp.eq.s32.totalorder %s26, 0
      %p117 = por %p115, %p116
      %s118 = ssub.s32 %s28, %s35
      %p119 = scmp.eq.s32.totalorder %s118, 0
      %s121 = sadd.s32 %s120, 1
      %s122 = scalar_select %p119, %s120, %s121
      %p125 = pneg %p119
      %p126 = scmp.eq.s32.totalorder %s20, 3
      %p127 = por %p125, %p126
      %p128 = scmp.ne.s32.totalorder %s120, %s123
      %p129 = scmp.eq.s32.totalorder %s20, 0
      %p130 = por %p128, %p129
      %p131 = scmp.ne.s32.totalorder %s120, %s123
      %p132 = scmp.eq.s32.totalorder %s25, 3
      %p133 = por %p131, %p132
      %p134 = scmp.ne.s32.totalorder %s123, %s124
      %p135 = scmp.eq.s32.totalorder %s25, 0
      %p136 = por %p134, %p135
      %p137 = scmp.ne.s32.totalorder %s123, %s124
      %p138 = scmp.eq.s32.totalorder %s26, 3
      %p139 = por %p137, %p138
      %p141 = scmp.ne.s32.totalorder %s124, %s140
      %p142 = scmp.eq.s32.totalorder %s26, 0
      %p143 = por %p141, %p142
      %s145 = sadd.s32 %s144, 1
      %p148 = scmp.eq.s32.totalorder %s20, 3
      %p149 = scmp.ne.s32.totalorder %s144, %s146
      %p150 = scmp.eq.s32.totalorder %s20, 0
      %p151 = por %p149, %p150
      %p152 = scmp.ne.s32.totalorder %s144, %s146
      %p153 = scmp.eq.s32.totalorder %s25, 3
      %p154 = por %p152, %p153
      %p155 = scmp.ne.s32.totalorder %s146, %s147
      %p156 = scmp.eq.s32.totalorder %s25, 0
      %p157 = por %p155, %p156
      %p158 = scmp.ne.s32.totalorder %s146, %s147
      %p159 = scmp.eq.s32.totalorder %s26, 3
      %p160 = por %p158, %p159
      %p162 = scmp.ne.s32.totalorder %s147, %s161
      %p163 = scmp.eq.s32.totalorder %s26, 0
      %p164 = por %p162, %p163
      %s166 = sadd.s32 %s165, 1
      %p169 = scmp.eq.s32.totalorder %s20, 3
      %p170 = scmp.ne.s32.totalorder %s165, %s167
      %p171 = scmp.eq.s32.totalorder %s20, 0
      %p172 = por %p170, %p171
      %p173 = scmp.ne.s32.totalorder %s165, %s167
      %p174 = scmp.eq.s32.totalorder %s25, 3
      %p175 = por %p173, %p174
      %p176 = scmp.ne.s32.totalorder %s167, %s168
      %p177 = scmp.eq.s32.totalorder %s25, 0
      %p178 = por %p176, %p177
      %p179 = scmp.ne.s32.totalorder %s167, %s168
      %p180 = scmp.eq.s32.totalorder %s26, 3
      %p181 = por %p179, %p180
      %p183 = scmp.ne.s32.totalorder %s168, %s182
      %p184 = scmp.eq.s32.totalorder %s26, 0
      %p185 = por %p183, %p184
      %s187 = sadd.s32 %s186, 1
      %p190 = scmp.eq.s32.totalorder %s20, 3
      %p191 = scmp.ne.s32.totalorder %s186, %s188
      %p192 = scmp.eq.s32.totalorder %s20, 0
      %p193 = por %p191, %p192
      %p194 = scmp.ne.s32.totalorder %s186, %s188
      %p195 = scmp.eq.s32.totalorder %s25, 3
      %p196 = por %p194, %p195
      %p197 = scmp.ne.s32.totalorder %s188, %s189
      %p198 = scmp.eq.s32.totalorder %s25, 0
      %p199 = por %p197, %p198
      %p200 = scmp.ne.s32.totalorder %s188, %s189
      %p201 = scmp.eq.s32.totalorder %s26, 3
      %p202 = por %p200, %p201
      %p204 = scmp.ne.s32.totalorder %s189, %s203
      %p205 = scmp.eq.s32.totalorder %s26, 0
      %p206 = por %p204, %p205
      %s208 = sadd.s32 %s207, 1
      %p211 = scmp.eq.s32.totalorder %s20, 3
      %p212 = scmp.ne.s32.totalorder %s207, %s209
      %p213 = scmp.eq.s32.totalorder %s20, 0
      %p214 = por %p212, %p213
      %p215 = scmp.ne.s32.totalorder %s207, %s209
      %p216 = scmp.eq.s32.totalorder %s25, 3
      %p217 = por %p215, %p216
      %p218 = scmp.ne.s32.totalorder %s209, %s210
      %p219 = scmp.eq.s32.totalorder %s25, 0
      %p220 = por %p218, %p219
      %p221 = scmp.ne.s32.totalorder %s209, %s210
      %p222 = scmp.eq.s32.totalorder %s26, 3
      %p223 = por %p221, %p222
      %p225 = scmp.ne.s32.totalorder %s210, %s224
      %p226 = scmp.eq.s32.totalorder %s26, 0
      %p227 = por %p225, %p226
      %s229 = sadd.s32 %s228, 1
      %p232 = scmp.eq.s32.totalorder %s20, 3
      %p233 = scmp.ne.s32.totalorder %s228, %s230
      %p234 = scmp.eq.s32.totalorder %s20, 0
      %p235 = por %p233, %p234
      %p236 = scmp.ne.s32.totalorder %s228, %s230
      %p237 = scmp.eq.s32.totalorder %s25, 3
      %p238 = por %p236, %p237
      %p239 = scmp.ne.s32.totalorder %s230, %s231
      %p240 = scmp.eq.s32.totalorder %s25, 0
      %p241 = por %p239, %p240
      %p242 = scmp.ne.s32.totalorder %s230, %s231
      %p243 = scmp.eq.s32.totalorder %s26, 3
      %p244 = por %p242, %p243
      %p246 = scmp.ne.s32.totalorder %s231, %s245
      %p247 = scmp.eq.s32.totalorder %s26, 0
      %p248 = por %p246, %p247
      %s250 = sadd.s32 %s249, 1
      %p253 = scmp.eq.s32.totalorder %s20, 3
      %p254 = scmp.ne.s32.totalorder %s249, %s251
      %p255 = scmp.eq.s32.totalorder %s20, 0
      %p256 = por %p254, %p255
      %p257 = scmp.ne.s32.totalorder %s249, %s251
      %p258 = scmp.eq.s32.totalorder %s25, 3
      %p259 = por %p257, %p258
      %p260 = scmp.ne.s32.totalorder %s251, %s252
      %p261 = scmp.eq.s32.totalorder %s25, 0
      %p262 = por %p260, %p261
      %p263 = scmp.ne.s32.totalorder %s251, %s252
      %p264 = scmp.eq.s32.totalorder %s26, 3
      %p265 = por %p263, %p264
      %p267 = scmp.ne.s32.totalorder %s252, %s266
      %p268 = scmp.eq.s32.totalorder %s26, 0
      %p269 = por %p267, %p268
      %s271 = sadd.s32 %s270, 1
      %p274 = scmp.eq.s32.totalorder %s20, 3
      %p275 = scmp.ne.s32.totalorder %s270, %s272
      %p276 = scmp.eq.s32.totalorder %s20, 0
      %p277 = por %p275, %p276
      %p278 = scmp.ne.s32.totalorder %s270, %s272
      %p279 = scmp.eq.s32.totalorder %s25, 3
      %p280 = por %p278, %p279
      %p281 = scmp.ne.s32.totalorder %s272, %s273
      %p282 = scmp.eq.s32.totalorder %s25, 0
      %p283 = por %p281, %p282
      %p284 = scmp.ne.s32.totalorder %s272, %s273
      %p285 = scmp.eq.s32.totalorder %s26, 3
      %p286 = por %p284, %p285
      %p288 = scmp.ne.s32.totalorder %s273, %s287
      %p289 = scmp.eq.s32.totalorder %s26, 0
      %p290 = por %p288, %p289
      %s291 = ssub.s32 %s27, %s39
      %p292 = scmp.eq.s32.totalorder %s291, 0
      %s294 = sadd.s32 %s293, 1
      %s295 = scalar_select %p292, %s293, %s294
      %p298 = pneg %p292
      %p299 = scmp.eq.s32.totalorder %s20, 3
      %p300 = por %p298, %p299
      %p301 = scmp.ne.s32.totalorder %s293, %s296
      %p302 = scmp.eq.s32.totalorder %s20, 0
      %p303 = por %p301, %p302
      %p304 = scmp.ne.s32.totalorder %s293, %s296
      %p305 = scmp.eq.s32.totalorder %s25, 3
      %p306 = por %p304, %p305
      %p307 = scmp.ne.s32.totalorder %s296, %s297
      %p308 = scmp.eq.s32.totalorder %s25, 0
      %p309 = por %p307, %p308
      %p310 = scmp.ne.s32.totalorder %s296, %s297
      %p311 = scmp.eq.s32.totalorder %s26, 3
      %p312 = por %p310, %p311
      %p314 = scmp.ne.s32.totalorder %s297, %s313
      %p315 = scmp.eq.s32.totalorder %s26, 0
      %p316 = por %p314, %p315
      %p317 = scmp.le.s32.totalorder 1, %s20
      %p318 = scmp.lt.s32.totalorder %s20, 5
      %p319 = pnand %p317, %p318
      %p320 = pneg %p319
      // Predicated region
      $region9: #{tpu_custom_call.1} parent=5 // pred_check
        _
      $region10: #{tpu_custom_call.1} parent=5 // pred_check_branch
        %322 = sbr.rel (%p319) target = $region12
      $region11: #{tpu_custom_call.1} parent=5 // pred_region
        %s323 = ssub.s32 %s20, 1
        // Predicated region
        $region13: #{tpu_custom_call.1} parent=11 // pred_check
          %p324 = pneg %p157
        $region14: #{tpu_custom_call.1} parent=11 // pred_check_branch
          %326 = sbr.rel (%p324) target = $region16
        $region15: #{tpu_custom_call.1} parent=11 // pred_region
          _
        $region16: #{tpu_custom_call.1} parent=11 // pred_fallthru
          _
        // Predicated region
        $region17: #{tpu_custom_call.1} parent=11 // pred_check
          %p327 = pneg %p178
        $region18: #{tpu_custom_call.1} parent=11 // pred_check_branch
          %329 = sbr.rel (%p327) target = $region20
        $region19: #{tpu_custom_call.1} parent=11 // pred_region
          _
        $region20: #{tpu_custom_call.1} parent=11 // pred_fallthru
          _
        // Predicated region
        $region21: #{tpu_custom_call.1} parent=11 // pred_check
          %p330 = pneg %p199
        $region22: #{tpu_custom_call.1} parent=11 // pred_check_branch
          %332 = sbr.rel (%p330) target = $region24
        $region23: #{tpu_custom_call.1} parent=11 // pred_region
          _
        $region24: #{tpu_custom_call.1} parent=11 // pred_fallthru
          _
        // Predicated region
        $region25: #{tpu_custom_call.1} parent=11 // pred_check
          %p333 = pneg %p220
        $region26: #{tpu_custom_call.1} parent=11 // pred_check_branch
          %335 = sbr.rel (%p333) target = $region28
        $region27: #{tpu_custom_call.1} parent=11 // pred_region
          _
        $region28: #{tpu_custom_call.1} parent=11 // pred_fallthru
          _
        // Predicated region
        $region29: #{tpu_custom_call.1} parent=11 // pred_check
          %p336 = pneg %p241
        $region30: #{tpu_custom_call.1} parent=11 // pred_check_branch
          %338 = sbr.rel (%p336) target = $region32
        $region31: #{tpu_custom_call.1} parent=11 // pred_region
          _
        $region32: #{tpu_custom_call.1} parent=11 // pred_fallthru
          _
        // Predicated region
        $region33: #{tpu_custom_call.1} parent=11 // pred_check
          %p339 = pneg %p262
        $region34: #{tpu_custom_call.1} parent=11 // pred_check_branch
          %341 = sbr.rel (%p339) target = $region36
        $region35: #{tpu_custom_call.1} parent=11 // pred_region
          _
        $region36: #{tpu_custom_call.1} parent=11 // pred_fallthru
          _
        // Predicated region
        $region37: #{tpu_custom_call.1} parent=11 // pred_check
          %p342 = pneg %p283
        $region38: #{tpu_custom_call.1} parent=11 // pred_check_branch
          %344 = sbr.rel (%p342) target = $region40
        $region39: #{tpu_custom_call.1} parent=11 // pred_region
          _
        $region40: #{tpu_custom_call.1} parent=11 // pred_fallthru
          _
      $region12: #{tpu_custom_call.1} parent=5 // pred_fallthru
        _
      %p345 = scmp.lt.s32.totalorder %s20, 4
      // Predicated region
      $region41: #{tpu_custom_call.1} parent=5 // pred_check
        %p346 = pneg %p345
      $region42: #{tpu_custom_call.1} parent=5 // pred_check_branch
        %348 = sbr.rel (%p346) target = $region44
      $region43: #{tpu_custom_call.1} parent=5 // pred_region
        // Predicated region
        $region45: #{tpu_custom_call.1} parent=43 // pred_check
          %p349 = pneg %p52
        $region46: #{tpu_custom_call.1} parent=43 // pred_check_branch
          %351 = sbr.rel (%p349) target = $region48
        $region47: #{tpu_custom_call.1} parent=43 // pred_region
          %s352 = smul.u32 64, %s28
          %p353 = scmp.lt.s32.totalorder %s352, 127
          %s354 = scalar_select %p353, %s352, 127
          %s355 = smul.addr %s354, 8
          %s356 = scalar_lea.vmem %s0, %s355
          %s357 = smul.u32 64, %s28
        $region48: #{tpu_custom_call.1} parent=43 // pred_fallthru
          _
        // Predicated region
        $region49: #{tpu_custom_call.1} parent=43 // pred_check
          %p358 = pneg %p78
        $region50: #{tpu_custom_call.1} parent=43 // pred_check_branch
          %360 = sbr.rel (%p358) target = $region52
        $region51: #{tpu_custom_call.1} parent=43 // pred_region
          %s361 = smul.u32 4, %s28
          %p362 = scmp.lt.s32.totalorder %s361, 7
          %s363 = scalar_select %p362, %s361, 7
          %s364 = scalar_lea.vmem %s1, %s363
          %s365 = smul.u32 4, %s28
        $region52: #{tpu_custom_call.1} parent=43 // pred_fallthru
          _
        // Predicated region
        $region53: #{tpu_custom_call.1} parent=43 // pred_check
          %p366 = pneg %p104
        $region54: #{tpu_custom_call.1} parent=43 // pred_check_branch
          %368 = sbr.rel (%p366) target = $region56
        $region55: #{tpu_custom_call.1} parent=43 // pred_region
          %s369 = smul.u32 64, %s28
          %p370 = scmp.lt.s32.totalorder %s369, 127
          %s371 = scalar_select %p370, %s369, 127
          %s372 = smul.addr %s371, 4
          %s373 = scalar_lea.vmem %s2, %s372
          %s374 = smul.u32 64, %s28
        $region56: #{tpu_custom_call.1} parent=43 // pred_fallthru
          _
        // Predicated region
        $region57: #{tpu_custom_call.1} parent=43 // pred_check
          %p375 = pneg %p130
        $region58: #{tpu_custom_call.1} parent=43 // pred_check_branch
          %377 = sbr.rel (%p375) target = $region60
        $region59: #{tpu_custom_call.1} parent=43 // pred_region
          %s378 = smul.u32 64, %s28
          %p379 = scmp.lt.s32.totalorder %s378, 127
          %s380 = scalar_select %p379, %s378, 127
          %s381 = smul.addr %s380, 4
          %s382 = scalar_lea.vmem %s3, %s381
          %s383 = smul.u32 64, %s28
        $region60: #{tpu_custom_call.1} parent=43 // pred_fallthru
          _
      $region44: #{tpu_custom_call.1} parent=5 // pred_fallthru
        _
      %p384 = scmp.le.s32.totalorder 1, %s20
      %p385 = scmp.lt.s32.totalorder %s20, 5
      %p386 = pnand %p384, %p385
      %p387 = pneg %p386
      // Predicated region
      $region61: #{tpu_custom_call.1} parent=5 // pred_check
        _
      $region62: #{tpu_custom_call.1} parent=5 // pred_check_branch
        %389 = sbr.rel (%p386) target = $region64
      $region63: #{tpu_custom_call.1} parent=5 // pred_region
        %s390 = ssub.s32 %s20, 1
        %s391 = smul.u32 64, %s30
        %p392 = scmp.lt.s32.totalorder %s391, 127
        %s393 = scalar_select %p392, %s391, 127
        %s394 = smul.addr %s393, 8
        %s395 = scalar_lea.vmem %s0, %s394
        %p396 = pneg %p58
        %p397 = pneg %p55
        %s398 = smul.u32 4, %s30
        %p399 = scmp.lt.s32.totalorder %s398, 7
        %s400 = scalar_select %p399, %s398, 7
        %s401 = scalar_lea.vmem %s1, %s400
        %p402 = pneg %p84
        %p403 = pneg %p81
        %s404 = smul.u32 64, %s30
        %p405 = scmp.lt.s32.totalorder %s404, 127
        %s406 = scalar_select %p405, %s404, 127
        %s407 = smul.addr %s406, 4
        %s408 = scalar_lea.vmem %s2, %s407
        %p409 = pneg %p110
        %p410 = pneg %p107
        %s411 = smul.u32 64, %s30
        %p412 = scmp.lt.s32.totalorder %s411, 127
        %s413 = scalar_select %p412, %s411, 127
        %s414 = smul.addr %s413, 4
        %s415 = scalar_lea.vmem %s3, %s414
        %p416 = pneg %p136
        %p417 = pneg %p133
        %p418 = pneg %p157
        %p419 = pneg %p154
        %p420 = pneg %p178
        %p421 = pneg %p175
        %p422 = pneg %p199
        %p423 = pneg %p196
        %p424 = pneg %p220
        %p425 = pneg %p217
        %p426 = pneg %p241
        %p427 = pneg %p238
        %p428 = pneg %p262
        %p429 = pneg %p259
        %p430 = pneg %p283
        %p431 = pneg %p280
        %p432 = pneg %p309
        %p433 = pneg %p306
        %s434 = sand.u32 %s296, 1
        %s435 = scalar_lea.sflag [#allocation3], %s434
        %s436 = sand.u32 %s296, 1
        %s437 = smul.addr %s436, 128
        %s438 = scalar_lea.vmem [#allocation2], %s437
        %s439 = smul.u32 64, %s30
        %p440 = scmp.lt.s32.totalorder %s439, 127
        %s441 = scalar_select %p440, %s439, 127
        %s442 = smul.addr %s441, 8
        %s443 = scalar_lea.vmem %s0, %s442
        %s444 = smul.u32 64, %s30
        %s445 = smul.u32 4, %s30
        %p446 = scmp.lt.s32.totalorder %s445, 7
        %s447 = scalar_select %p446, %s445, 7
        %s448 = scalar_lea.vmem %s1, %s447
        %s449 = smul.u32 4, %s30
        %s450 = smul.u32 64, %s30
        %p451 = scmp.lt.s32.totalorder %s450, 127
        %s452 = scalar_select %p451, %s450, 127
        %s453 = smul.addr %s452, 4
        %s454 = scalar_lea.vmem %s2, %s453
        %s455 = smul.u32 64, %s30
        %s456 = smul.u32 64, %s30
        %p457 = scmp.lt.s32.totalorder %s456, 127
        %s458 = scalar_select %p457, %s456, 127
        %s459 = smul.addr %s458, 4
        %s460 = scalar_lea.vmem %s3, %s459
        %s461 = smul.u32 64, %s30
        %s462 = smul.u32 16, %s29
        %p464 = scmp.eq.s32.totalorder %s30, 0
        // Predicated region
        $region65: #{tpu_custom_call.1} parent=63 // pred_check
          %p465 = pneg %p464
        $region66: #{tpu_custom_call.1} parent=63 // pred_check_branch
          %467 = sbr.rel (%p465) target = $region68
        $region67: #{tpu_custom_call.1} parent=63 // pred_region
          %468 = vst [vmem:[%s438] sm:$0xff] 0.0
          %469 = vst [vmem:[%s438 + $0x8] sm:$0xff] 0.0
          %470 = vst [vmem:[%s438 + $0x10] sm:$0xff] 0.0
          %471 = vst [vmem:[%s438 + $0x18] sm:$0xff] 0.0
          %472 = vst [vmem:[%s438 + $0x20] sm:$0xff] 0.0
          %473 = vst [vmem:[%s438 + $0x28] sm:$0xff] 0.0
          %474 = vst [vmem:[%s438 + $0x30] sm:$0xff] 0.0
          %475 = vst [vmem:[%s438 + $0x38] sm:$0xff] 0.0
          %476 = vst [vmem:[%s438 + $0x40] sm:$0xff] 0.0
          %477 = vst [vmem:[%s438 + $0x48] sm:$0xff] 0.0
          %478 = vst [vmem:[%s438 + $0x50] sm:$0xff] 0.0
          %479 = vst [vmem:[%s438 + $0x58] sm:$0xff] 0.0
          %480 = vst [vmem:[%s438 + $0x60] sm:$0xff] 0.0
          %481 = vst [vmem:[%s438 + $0x68] sm:$0xff] 0.0
          %482 = vst [vmem:[%s438 + $0x70] sm:$0xff] 0.0
          %483 = vst [vmem:[%s438 + $0x78] sm:$0xff] 0.0
        $region68: #{tpu_custom_call.1} parent=63 // pred_fallthru
          _
        %v484 = vld [vmem:[%s454] sm:$0xf]
        %v485 = vld [vmem:[%s454 + $0x4] sm:$0xf]
        %v486 = vld [vmem:[%s454 + $0x8] sm:$0xf]
        %v487 = vld [vmem:[%s454 + $0xc] sm:$0xf]
        %v488 = vld [vmem:[%s454 + $0x10] sm:$0xf]
        %v489 = vld [vmem:[%s454 + $0x14] sm:$0xf]
        %v490 = vld [vmem:[%s454 + $0x18] sm:$0xf]
        %v491 = vld [vmem:[%s454 + $0x1c] sm:$0xf]
        %v492 = vld [vmem:[%s454 + $0x20] sm:$0xf]
        %v493 = vld [vmem:[%s454 + $0x24] sm:$0xf]
        %v494 = vld [vmem:[%s454 + $0x28] sm:$0xf]
        %v495 = vld [vmem:[%s454 + $0x2c] sm:$0xf]
        %v496 = vld [vmem:[%s454 + $0x30] sm:$0xf]
        %v497 = vld [vmem:[%s454 + $0x34] sm:$0xf]
        %v498 = vld [vmem:[%s454 + $0x38] sm:$0xf]
        %v499 = vld [vmem:[%s454 + $0x3c] sm:$0xf]
        %v500 = vld [vmem:[%s454 + $0x40] sm:$0xf]
        %v501 = vld [vmem:[%s454 + $0x44] sm:$0xf]
        %v502 = vld [vmem:[%s454 + $0x48] sm:$0xf]
        %v503 = vld [vmem:[%s454 + $0x4c] sm:$0xf]
        %v504 = vld [vmem:[%s454 + $0x50] sm:$0xf]
        %v505 = vld [vmem:[%s454 + $0x54] sm:$0xf]
        %v506 = vld [vmem:[%s454 + $0x58] sm:$0xf]
        %v507 = vld [vmem:[%s454 + $0x5c] sm:$0xf]
        %v508 = vld [vmem:[%s454 + $0x60] sm:$0xf]
        %v509 = vld [vmem:[%s454 + $0x64] sm:$0xf]
        %v510 = vld [vmem:[%s454 + $0x68] sm:$0xf]
        %v511 = vld [vmem:[%s454 + $0x6c] sm:$0xf]
        %v512 = vld [vmem:[%s454 + $0x70] sm:$0xf]
        %v513 = vld [vmem:[%s454 + $0x74] sm:$0xf]
        %v514 = vld [vmem:[%s454 + $0x78] sm:$0xf]
        %v515 = vld [vmem:[%s454 + $0x7c] sm:$0xf]
        %v516 = vld [vmem:[%s454 + $0x80] sm:$0xf]
        %v517 = vld [vmem:[%s454 + $0x84] sm:$0xf]
        %v518 = vld [vmem:[%s454 + $0x88] sm:$0xf]
        %v519 = vld [vmem:[%s454 + $0x8c] sm:$0xf]
        %v520 = vld [vmem:[%s454 + $0x90] sm:$0xf]
        %v521 = vld [vmem:[%s454 + $0x94] sm:$0xf]
        %v522 = vld [vmem:[%s454 + $0x98] sm:$0xf]
        %v523 = vld [vmem:[%s454 + $0x9c] sm:$0xf]
        %v524 = vld [vmem:[%s454 + $0xa0] sm:$0xf]
        %v525 = vld [vmem:[%s454 + $0xa4] sm:$0xf]
        %v526 = vld [vmem:[%s454 + $0xa8] sm:$0xf]
        %v527 = vld [vmem:[%s454 + $0xac] sm:$0xf]
        %v528 = vld [vmem:[%s454 + $0xb0] sm:$0xf]
        %v529 = vld [vmem:[%s454 + $0xb4] sm:$0xf]
        %v530 = vld [vmem:[%s454 + $0xb8] sm:$0xf]
        %v531 = vld [vmem:[%s454 + $0xbc] sm:$0xf]
        %v532 = vld [vmem:[%s454 + $0xc0] sm:$0xf]
        %v533 = vld [vmem:[%s454 + $0xc4] sm:$0xf]
        %v534 = vld [vmem:[%s454 + $0xc8] sm:$0xf]
        %v535 = vld [vmem:[%s454 + $0xcc] sm:$0xf]
        %v536 = vld [vmem:[%s454 + $0xd0] sm:$0xf]
        %v537 = vld [vmem:[%s454 + $0xd4] sm:$0xf]
        %v538 = vld [vmem:[%s454 + $0xd8] sm:$0xf]
        %v539 = vld [vmem:[%s454 + $0xdc] sm:$0xf]
        %v540 = vld [vmem:[%s454 + $0xe0] sm:$0xf]
        %v541 = vld [vmem:[%s454 + $0xe4] sm:$0xf]
        %v542 = vld [vmem:[%s454 + $0xe8] sm:$0xf]
        %v543 = vld [vmem:[%s454 + $0xec] sm:$0xf]
        %v544 = vld [vmem:[%s454 + $0xf0] sm:$0xf]
        %v545 = vld [vmem:[%s454 + $0xf4] sm:$0xf]
        %v546 = vld [vmem:[%s454 + $0xf8] sm:$0xf]
        %v547 = vld [vmem:[%s454 + $0xfc] sm:$0xf]
        %v548 = vld [vmem:[%s5] sm:$0xf]
        %v549 = vld [vmem:[%s5 + $0x4] sm:$0xf]
        %v550 = vld [vmem:[%s5 + $0x8] sm:$0xf]
        %v551 = vld [vmem:[%s5 + $0xc] sm:$0xf]
        %v552 = vld [vmem:[%s6] sm:$0x1]
        %v554 = vlaneseq
        %v555 = vshrl.u32 %v554, 7
        %v556 = vsub.s32 0, %v555
        %v557 = vrot.slane %v552, %v556
        %v623 = vunpack.c.l.b16 %v484
        %v624 = vunpack.c.l.b16 %v485
        %v625 = vunpack.c.l.b16 %v486
        %v626 = vunpack.c.l.b16 %v487
        %v627 = vunpack.c.l.b16 %v488
        %v628 = vunpack.c.l.b16 %v489
        %v629 = vunpack.c.l.b16 %v490
        %v630 = vunpack.c.l.b16 %v491
        %v631 = vunpack.c.l.b16 %v492
        %v632 = vunpack.c.l.b16 %v493
        %v633 = vunpack.c.l.b16 %v494
        %v634 = vunpack.c.l.b16 %v495
        %v635 = vunpack.c.l.b16 %v496
        %v636 = vunpack.c.l.b16 %v497
        %v637 = vunpack.c.l.b16 %v498
        %v638 = vunpack.c.l.b16 %v499
        %v639 = vunpack.c.l.b16 %v500
        %v640 = vunpack.c.l.b16 %v501
        %v641 = vunpack.c.l.b16 %v502
        %v642 = vunpack.c.l.b16 %v503
        %v643 = vunpack.c.l.b16 %v504
        %v644 = vunpack.c.l.b16 %v505
        %v645 = vunpack.c.l.b16 %v506
        %v646 = vunpack.c.l.b16 %v507
        %v647 = vunpack.c.l.b16 %v508
        %v648 = vunpack.c.l.b16 %v509
        %v649 = vunpack.c.l.b16 %v510
        %v650 = vunpack.c.l.b16 %v511
        %v651 = vunpack.c.l.b16 %v512
        %v652 = vunpack.c.l.b16 %v513
        %v653 = vunpack.c.l.b16 %v514
        %v654 = vunpack.c.l.b16 %v515
        %v655 = vunpack.c.l.b16 %v516
        %v656 = vunpack.c.l.b16 %v517
        %v657 = vunpack.c.l.b16 %v518
        %v658 = vunpack.c.l.b16 %v519
        %v659 = vunpack.c.l.b16 %v520
        %v660 = vunpack.c.l.b16 %v521
        %v661 = vunpack.c.l.b16 %v522
        %v662 = vunpack.c.l.b16 %v523
        %v663 = vunpack.c.l.b16 %v524
        %v664 = vunpack.c.l.b16 %v525
        %v665 = vunpack.c.l.b16 %v526
        %v666 = vunpack.c.l.b16 %v527
        %v667 = vunpack.c.l.b16 %v528
        %v668 = vunpack.c.l.b16 %v529
        %v669 = vunpack.c.l.b16 %v530
        %v670 = vunpack.c.l.b16 %v531
        %v671 = vunpack.c.l.b16 %v532
        %v672 = vunpack.c.l.b16 %v533
        %v673 = vunpack.c.l.b16 %v534
        %v674 = vunpack.c.l.b16 %v535
        %v675 = vunpack.c.l.b16 %v536
        %v676 = vunpack.c.l.b16 %v537
        %v677 = vunpack.c.l.b16 %v538
        %v678 = vunpack.c.l.b16 %v539
        %v679 = vunpack.c.l.b16 %v540
        %v680 = vunpack.c.l.b16 %v541
        %v681 = vunpack.c.l.b16 %v542
        %v682 = vunpack.c.l.b16 %v543
        %v683 = vunpack.c.l.b16 %v544
        %v684 = vunpack.c.l.b16 %v545
        %v685 = vunpack.c.l.b16 %v546
        %v686 = vunpack.c.l.b16 %v547
        %v687 = vpack.c.b16 %v624, %v623
        %v688 = vpack.c.b16 %v626, %v625
        %v689 = vpack.c.b16 %v628, %v627
        %v690 = vpack.c.b16 %v630, %v629
        %v691 = vpack.c.b16 %v632, %v631
        %v692 = vpack.c.b16 %v634, %v633
        %v693 = vpack.c.b16 %v636, %v635
        %v694 = vpack.c.b16 %v638, %v637
        %v695 = vpack.c.b16 %v640, %v639
        %v696 = vpack.c.b16 %v642, %v641
        %v697 = vpack.c.b16 %v644, %v643
        %v698 = vpack.c.b16 %v646, %v645
        %v699 = vpack.c.b16 %v648, %v647
        %v700 = vpack.c.b16 %v650, %v649
        %v701 = vpack.c.b16 %v652, %v651
        %v702 = vpack.c.b16 %v654, %v653
        %v703 = vpack.c.b16 %v656, %v655
        %v704 = vpack.c.b16 %v658, %v657
        %v705 = vpack.c.b16 %v660, %v659
        %v706 = vpack.c.b16 %v662, %v661
        %v707 = vpack.c.b16 %v664, %v663
        %v708 = vpack.c.b16 %v666, %v665
        %v709 = vpack.c.b16 %v668, %v667
        %v710 = vpack.c.b16 %v670, %v669
        %v711 = vpack.c.b16 %v672, %v671
        %v712 = vpack.c.b16 %v674, %v673
        %v713 = vpack.c.b16 %v676, %v675
        %v714 = vpack.c.b16 %v678, %v677
        %v715 = vpack.c.b16 %v680, %v679
        %v716 = vpack.c.b16 %v682, %v681
        %v717 = vpack.c.b16 %v684, %v683
        %v718 = vpack.c.b16 %v686, %v685
        %v723 = vunpack.c.l.b16 %v548
        %v724 = vunpack.c.l.b16 %v549
        %v725 = vunpack.c.l.b16 %v550
        %v726 = vunpack.c.l.b16 %v551
        %v727 = vpack.c.b16 %v724, %v723
        %v728 = vpack.c.b16 %v726, %v725
        %vm731 = vcmask 261120
        %v733 = vsel %vm731, %v687, 0
        %v736 = vsel %vm731, %v688, 0
        %v739 = vsel %vm731, %v689, 0
        %v742 = vsel %vm731, %v690, 0
        %v745 = vsel %vm731, %v691, 0
        %v748 = vsel %vm731, %v692, 0
        %v751 = vsel %vm731, %v693, 0
        %v754 = vsel %vm731, %v694, 0
        %v757 = vsel %vm731, %v695, 0
        %v760 = vsel %vm731, %v696, 0
        %v763 = vsel %vm731, %v697, 0
        %v766 = vsel %vm731, %v698, 0
        %v769 = vsel %vm731, %v699, 0
        %v772 = vsel %vm731, %v700, 0
        %v775 = vsel %vm731, %v701, 0
        %v778 = vsel %vm731, %v702, 0
        %v781 = vsel %vm731, %v703, 0
        %v784 = vsel %vm731, %v704, 0
        %v787 = vsel %vm731, %v705, 0
        %v790 = vsel %vm731, %v706, 0
        %v793 = vsel %vm731, %v707, 0
        %v796 = vsel %vm731, %v708, 0
        %v799 = vsel %vm731, %v709, 0
        %v802 = vsel %vm731, %v710, 0
        %v805 = vsel %vm731, %v711, 0
        %v808 = vsel %vm731, %v712, 0
        %v811 = vsel %vm731, %v713, 0
        %v814 = vsel %vm731, %v714, 0
        %v817 = vsel %vm731, %v715, 0
        %v820 = vsel %vm731, %v716, 0
        %v823 = vsel %vm731, %v717, 0
        %v826 = vsel %vm731, %v718, 0
        %828 = vmatprep.subr.bf16.mxu0 0
        %829 = vmatpush1.bf16.msra.mxu0 %v727
        %830 = vmatprep.subr.bf16.mxu0 0
        %831 = vmatpush1.bf16.msra.mxu0 %v728
        %832 = vmatprep.subr.bf16.mxu0 0
        %833 = vmatpush1.bf16.msra.mxu0 0
        %834 = vmatprep.subr.bf16.mxu0 0
        %835 = vmatpush1.bf16.msra.mxu0 0
        %836 = vmatprep.subr.bf16.mxu0 0
        %837 = vmatpush1.bf16.msra.mxu0 0
        %838 = vmatprep.subr.bf16.mxu0 0
        %839 = vmatpush1.bf16.msra.mxu0 0
        %840 = vmatprep.subr.bf16.mxu0 0
        %841 = vmatpush1.bf16.msra.mxu0 0
        %842 = vmatprep.subr.bf16.mxu0 0
        %843 = vmatpush1.bf16.msra.mxu0 0
        %844 = vmatprep.subr.bf16.mxu0 0
        %845 = vmatpush1.bf16.msra.mxu0 0
        %846 = vmatprep.subr.bf16.mxu0 0
        %847 = vmatpush1.bf16.msra.mxu0 0
        %848 = vmatprep.subr.bf16.mxu0 0
        %849 = vmatpush1.bf16.msra.mxu0 0
        %850 = vmatprep.subr.bf16.mxu0 0
        %851 = vmatpush1.bf16.msra.mxu0 0
        %852 = vmatprep.subr.bf16.mxu0 0
        %853 = vmatpush1.bf16.msra.mxu0 0
        %854 = vmatprep.subr.bf16.mxu0 0
        %855 = vmatpush1.bf16.msra.mxu0 0
        %856 = vmatprep.subr.bf16.mxu0 0
        %857 = vmatpush1.bf16.msra.mxu0 0
        %858 = vmatprep.subr.bf16.mxu0 0
        %859 = vmatpush1.bf16.msra.mxu0 0
        %860 = vmatprep.mubr.bf16.mxu0 0
        %861 = vmatmul.mubr.bf16.gmra.mrb[0].mxu0 %v733
        %v862 = vpop.f32.mrb[0].mxu0
        %v863 = vadd.f32 %v557, %v862
        %v864 = vpop.f32.mrb[0].mxu0
        %v865 = vpop.f32.mrb[0].mxu0
        %v866 = vadd.f32 %v557, %v865
        %v867 = vpop.f32.mrb[0].mxu0
        %868 = vmatprep.mubr.bf16.mxu0 0
        %869 = vmatmul.mubr.bf16.gmra.mrb[0].mxu0 %v736
        %v870 = vpop.f32.mrb[0].mxu0
        %v871 = vadd.f32 %v557, %v870
        %v872 = vpop.f32.mrb[0].mxu0
        %v873 = vpop.f32.mrb[0].mxu0
        %v874 = vadd.f32 %v557, %v873
        %v875 = vpop.f32.mrb[0].mxu0
        %876 = vmatprep.mubr.bf16.mxu0 0
        %877 = vmatmul.mubr.bf16.gmra.mrb[0].mxu0 %v739
        %v878 = vpop.f32.mrb[0].mxu0
        %v879 = vadd.f32 %v557, %v878
        %v880 = vpop.f32.mrb[0].mxu0
        %v881 = vpop.f32.mrb[0].mxu0
        %v882 = vadd.f32 %v557, %v881
        %v883 = vpop.f32.mrb[0].mxu0
        %884 = vmatprep.mubr.bf16.mxu0 0
        %885 = vmatmul.mubr.bf16.gmra.mrb[0].mxu0 %v742
        %v886 = vpop.f32.mrb[0].mxu0
        %v887 = vadd.f32 %v557, %v886
        %v888 = vpop.f32.mrb[0].mxu0
        %v889 = vpop.f32.mrb[0].mxu0
        %v890 = vadd.f32 %v557, %v889
        %v891 = vpop.f32.mrb[0].mxu0
        %892 = vmatprep.mubr.bf16.mxu0 0
        %893 = vmatmul.mubr.bf16.gmra.mrb[0].mxu0 %v745
        %v894 = vpop.f32.mrb[0].mxu0
        %v895 = vadd.f32 %v557, %v894
        %v896 = vpop.f32.mrb[0].mxu0
        %v897 = vpop.f32.mrb[0].mxu0
        %v898 = vadd.f32 %v557, %v897
        %v899 = vpop.f32.mrb[0].mxu0
        %900 = vmatprep.mubr.bf16.mxu0 0
        %901 = vmatmul.mubr.bf16.gmra.mrb[0].mxu0 %v748
        %v902 = vpop.f32.mrb[0].mxu0
        %v903 = vadd.f32 %v557, %v902
        %v904 = vpop.f32.mrb[0].mxu0
        %v905 = vpop.f32.mrb[0].mxu0
        %v906 = vadd.f32 %v557, %v905
        %v907 = vpop.f32.mrb[0].mxu0
        %908 = vmatprep.mubr.bf16.mxu0 0
        %909 = vmatmul.mubr.bf16.gmra.mrb[0].mxu0 %v751
        %v910 = vpop.f32.mrb[0].mxu0
        %v911 = vadd.f32 %v557, %v910
        %v912 = vpop.f32.mrb[0].mxu0
        %v913 = vpop.f32.mrb[0].mxu0
        %v914 = vadd.f32 %v557, %v913
        %v915 = vpop.f32.mrb[0].mxu0
        %916 = vmatprep.mubr.bf16.mxu0 0
        %917 = vmatmul.mubr.bf16.gmra.mrb[0].mxu0 %v754
        %v918 = vpop.f32.mrb[0].mxu0
        %v919 = vadd.f32 %v557, %v918
        %v920 = vpop.f32.mrb[0].mxu0
        %v921 = vpop.f32.mrb[0].mxu0
        %v922 = vadd.f32 %v557, %v921
        %v923 = vpop.f32.mrb[0].mxu0
        %924 = vmatprep.mubr.bf16.mxu0 0
        %925 = vmatmul.mubr.bf16.gmra.mrb[0].mxu0 %v757
        %v926 = vpop.f32.mrb[0].mxu0
        %v927 = vadd.f32 %v557, %v926
        %v928 = vpop.f32.mrb[0].mxu0
        %v929 = vpop.f32.mrb[0].mxu0
        %v930 = vadd.f32 %v557, %v929
        %v931 = vpop.f32.mrb[0].mxu0
        %932 = vmatprep.mubr.bf16.mxu0 0
        %933 = vmatmul.mubr.bf16.gmra.mrb[0].mxu0 %v760
        %v934 = vpop.f32.mrb[0].mxu0
        %v935 = vadd.f32 %v557, %v934
        %v936 = vpop.f32.mrb[0].mxu0
        %v937 = vpop.f32.mrb[0].mxu0
        %v938 = vadd.f32 %v557, %v937
        %v939 = vpop.f32.mrb[0].mxu0
        %940 = vmatprep.mubr.bf16.mxu0 0
        %941 = vmatmul.mubr.bf16.gmra.mrb[0].mxu0 %v763
        %v942 = vpop.f32.mrb[0].mxu0
        %v943 = vadd.f32 %v557, %v942
        %v944 = vpop.f32.mrb[0].mxu0
        %v945 = vpop.f32.mrb[0].mxu0
        %v946 = vadd.f32 %v557, %v945
        %v947 = vpop.f32.mrb[0].mxu0
        %948 = vmatprep.mubr.bf16.mxu0 0
        %949 = vmatmul.mubr.bf16.gmra.mrb[0].mxu0 %v766
        %v950 = vpop.f32.mrb[0].mxu0
        %v951 = vadd.f32 %v557, %v950
        %v952 = vpop.f32.mrb[0].mxu0
        %v953 = vpop.f32.mrb[0].mxu0
        %v954 = vadd.f32 %v557, %v953
        %v955 = vpop.f32.mrb[0].mxu0
        %956 = vmatprep.mubr.bf16.mxu0 0
        %957 = vmatmul.mubr.bf16.gmra.mrb[0].mxu0 %v769
        %v958 = vpop.f32.mrb[0].mxu0
        %v959 = vadd.f32 %v557, %v958
        %v960 = vpop.f32.mrb[0].mxu0
        %v961 = vpop.f32.mrb[0].mxu0
        %v962 = vadd.f32 %v557, %v961
        %v963 = vpop.f32.mrb[0].mxu0
        %964 = vmatprep.mubr.bf16.mxu0 0
        %965 = vmatmul.mubr.bf16.gmra.mrb[0].mxu0 %v772
        %v966 = vpop.f32.mrb[0].mxu0
        %v967 = vadd.f32 %v557, %v966
        %v968 = vpop.f32.mrb[0].mxu0
        %v969 = vpop.f32.mrb[0].mxu0
        %v970 = vadd.f32 %v557, %v969
        %v971 = vpop.f32.mrb[0].mxu0
        %972 = vmatprep.mubr.bf16.mxu0 0
        %973 = vmatmul.mubr.bf16.gmra.mrb[0].mxu0 %v775
        %v974 = vpop.f32.mrb[0].mxu0
        %v975 = vadd.f32 %v557, %v974
        %v976 = vpop.f32.mrb[0].mxu0
        %v977 = vpop.f32.mrb[0].mxu0
        %v978 = vadd.f32 %v557, %v977
        %v979 = vpop.f32.mrb[0].mxu0
        %980 = vmatprep.mubr.bf16.mxu0 0
        %981 = vmatmul.mubr.bf16.gmra.mrb[0].mxu0 %v778
        %v982 = vpop.f32.mrb[0].mxu0
        %v983 = vadd.f32 %v557, %v982
        %v984 = vpop.f32.mrb[0].mxu0
        %v985 = vpop.f32.mrb[0].mxu0
        %v986 = vadd.f32 %v557, %v985
        %v987 = vpop.f32.mrb[0].mxu0
        %988 = vmatprep.mubr.bf16.mxu0 0
        %989 = vmatmul.mubr.bf16.gmra.mrb[0].mxu0 %v781
        %v990 = vpop.f32.mrb[0].mxu0
        %v991 = vadd.f32 %v557, %v990
        %v992 = vpop.f32.mrb[0].mxu0
        %v993 = vpop.f32.mrb[0].mxu0
        %v994 = vadd.f32 %v557, %v993
        %v995 = vpop.f32.mrb[0].mxu0
        %996 = vmatprep.mubr.bf16.mxu0 0
        %997 = vmatmul.mubr.bf16.gmra.mrb[0].mxu0 %v784
        %v998 = vpop.f32.mrb[0].mxu0
        %v999 = vadd.f32 %v557, %v998
        %v1000 = vpop.f32.mrb[0].mxu0
        %v1001 = vpop.f32.mrb[0].mxu0
        %v1002 = vadd.f32 %v557, %v1001
        %v1003 = vpop.f32.mrb[0].mxu0
        %1004 = vmatprep.mubr.bf16.mxu0 0
        %1005 = vmatmul.mubr.bf16.gmra.mrb[0].mxu0 %v787
        %v1006 = vpop.f32.mrb[0].mxu0
        %v1007 = vadd.f32 %v557, %v1006
        %v1008 = vpop.f32.mrb[0].mxu0
        %v1009 = vpop.f32.mrb[0].mxu0
        %v1010 = vadd.f32 %v557, %v1009
        %v1011 = vpop.f32.mrb[0].mxu0
        %1012 = vmatprep.mubr.bf16.mxu0 0
        %1013 = vmatmul.mubr.bf16.gmra.mrb[0].mxu0 %v790
        %v1014 = vpop.f32.mrb[0].mxu0
        %v1015 = vadd.f32 %v557, %v1014
        %v1016 = vpop.f32.mrb[0].mxu0
        %v1017 = vpop.f32.mrb[0].mxu0
        %v1018 = vadd.f32 %v557, %v1017
        %v1019 = vpop.f32.mrb[0].mxu0
        %1020 = vmatprep.mubr.bf16.mxu0 0
        %1021 = vmatmul.mubr.bf16.gmra.mrb[0].mxu0 %v793
        %v1022 = vpop.f32.mrb[0].mxu0
        %v1023 = vadd.f32 %v557, %v1022
        %v1024 = vpop.f32.mrb[0].mxu0
        %v1025 = vpop.f32.mrb[0].mxu0
        %v1026 = vadd.f32 %v557, %v1025
        %v1027 = vpop.f32.mrb[0].mxu0
        %1028 = vmatprep.mubr.bf16.mxu0 0
        %1029 = vmatmul.mubr.bf16.gmra.mrb[0].mxu0 %v796
        %v1030 = vpop.f32.mrb[0].mxu0
        %v1031 = vadd.f32 %v557, %v1030
        %v1032 = vpop.f32.mrb[0].mxu0
        %v1033 = vpop.f32.mrb[0].mxu0
        %v1034 = vadd.f32 %v557, %v1033
        %v1035 = vpop.f32.mrb[0].mxu0
        %1036 = vmatprep.mubr.bf16.mxu0 0
        %1037 = vmatmul.mubr.bf16.gmra.mrb[0].mxu0 %v799
        %v1038 = vpop.f32.mrb[0].mxu0
        %v1039 = vadd.f32 %v557, %v1038
        %v1040 = vpop.f32.mrb[0].mxu0
        %v1041 = vpop.f32.mrb[0].mxu0
        %v1042 = vadd.f32 %v557, %v1041
        %v1043 = vpop.f32.mrb[0].mxu0
        %1044 = vmatprep.mubr.bf16.mxu0 0
        %1045 = vmatmul.mubr.bf16.gmra.mrb[0].mxu0 %v802
        %v1046 = vpop.f32.mrb[0].mxu0
        %v1047 = vadd.f32 %v557, %v1046
        %v1048 = vpop.f32.mrb[0].mxu0
        %v1049 = vpop.f32.mrb[0].mxu0
        %v1050 = vadd.f32 %v557, %v1049
        %v1051 = vpop.f32.mrb[0].mxu0
        %1052 = vmatprep.mubr.bf16.mxu0 0
        %1053 = vmatmul.mubr.bf16.gmra.mrb[0].mxu0 %v805
        %v1054 = vpop.f32.mrb[0].mxu0
        %v1055 = vadd.f32 %v557, %v1054
        %v1056 = vpop.f32.mrb[0].mxu0
        %v1057 = vpop.f32.mrb[0].mxu0
        %v1058 = vadd.f32 %v557, %v1057
        %v1059 = vpop.f32.mrb[0].mxu0
        %1060 = vmatprep.mubr.bf16.mxu0 0
        %1061 = vmatmul.mubr.bf16.gmra.mrb[0].mxu0 %v808
        %v1062 = vpop.f32.mrb[0].mxu0
        %v1063 = vadd.f32 %v557, %v1062
        %v1064 = vpop.f32.mrb[0].mxu0
        %v1065 = vpop.f32.mrb[0].mxu0
        %v1066 = vadd.f32 %v557, %v1065
        %v1067 = vpop.f32.mrb[0].mxu0
        %1068 = vmatprep.mubr.bf16.mxu0 0
        %1069 = vmatmul.mubr.bf16.gmra.mrb[0].mxu0 %v811
        %v1070 = vpop.f32.mrb[0].mxu0
        %v1071 = vadd.f32 %v557, %v1070
        %v1072 = vpop.f32.mrb[0].mxu0
        %v1073 = vpop.f32.mrb[0].mxu0
        %v1074 = vadd.f32 %v557, %v1073
        %v1075 = vpop.f32.mrb[0].mxu0
        %1076 = vmatprep.mubr.bf16.mxu0 0
        %1077 = vmatmul.mubr.bf16.gmra.mrb[0].mxu0 %v814
        %v1078 = vpop.f32.mrb[0].mxu0
        %v1079 = vadd.f32 %v557, %v1078
        %v1080 = vpop.f32.mrb[0].mxu0
        %v1081 = vpop.f32.mrb[0].mxu0
        %v1082 = vadd.f32 %v557, %v1081
        %v1083 = vpop.f32.mrb[0].mxu0
        %1084 = vmatprep.mubr.bf16.mxu0 0
        %1085 = vmatmul.mubr.bf16.gmra.mrb[0].mxu0 %v817
        %v1086 = vpop.f32.mrb[0].mxu0
        %v1087 = vadd.f32 %v557, %v1086
        %v1088 = vpop.f32.mrb[0].mxu0
        %v1089 = vpop.f32.mrb[0].mxu0
        %v1090 = vadd.f32 %v557, %v1089
        %v1091 = vpop.f32.mrb[0].mxu0
        %1092 = vmatprep.mubr.bf16.mxu0 0
        %1093 = vmatmul.mubr.bf16.gmra.mrb[0].mxu0 %v820
        %v1094 = vpop.f32.mrb[0].mxu0
        %v1095 = vadd.f32 %v557, %v1094
        %v1096 = vpop.f32.mrb[0].mxu0
        %v1097 = vpop.f32.mrb[0].mxu0
        %v1098 = vadd.f32 %v557, %v1097
        %v1099 = vpop.f32.mrb[0].mxu0
        %1100 = vmatprep.mubr.bf16.mxu0 0
        %1101 = vmatmul.mubr.bf16.gmra.mrb[0].mxu0 %v823
        %v1102 = vpop.f32.mrb[0].mxu0
        %v1103 = vadd.f32 %v557, %v1102
        %v1104 = vpop.f32.mrb[0].mxu0
        %v1105 = vpop.f32.mrb[0].mxu0
        %v1106 = vadd.f32 %v557, %v1105
        %v1107 = vpop.f32.mrb[0].mxu0
        %1108 = vmatprep.mubr.bf16.mxu0 0
        %1109 = vmatmul.mubr.bf16.gmra.mrb[0].mxu0 %v826
        %v1110 = vpop.f32.mrb[0].mxu0
        %v1111 = vadd.f32 %v557, %v1110
        %v1112 = vpop.f32.mrb[0].mxu0
        %v1113 = vpop.f32.mrb[0].mxu0
        %v1114 = vadd.f32 %v557, %v1113
        %v1115 = vpop.f32.mrb[0].mxu0
        %1116 = vdwg.mxu0
        %v1117 = vmul.f32 %v863, 0.5
        %v1118 = vmul.f32 %v866, 0.5
        %v1119 = vmul.f32 %v871, 0.5
        %v1120 = vmul.f32 %v874, 0.5
        %v1121 = vmul.f32 %v879, 0.5
        %v1122 = vmul.f32 %v882, 0.5
        %v1123 = vmul.f32 %v887, 0.5
        %v1124 = vmul.f32 %v890, 0.5
        %v1125 = vmul.f32 %v895, 0.5
        %v1126 = vmul.f32 %v898, 0.5
        %v1127 = vmul.f32 %v903, 0.5
        %v1128 = vmul.f32 %v906, 0.5
        %v1129 = vmul.f32 %v911, 0.5
        %v1130 = vmul.f32 %v914, 0.5
        %v1131 = vmul.f32 %v919, 0.5
        %v1132 = vmul.f32 %v922, 0.5
        %v1133 = vmul.f32 %v927, 0.5
        %v1134 = vmul.f32 %v930, 0.5
        %v1135 = vmul.f32 %v935, 0.5
        %v1136 = vmul.f32 %v938, 0.5
        %v1137 = vmul.f32 %v943, 0.5
        %v1138 = vmul.f32 %v946, 0.5
        %v1139 = vmul.f32 %v951, 0.5
        %v1140 = vmul.f32 %v954, 0.5
        %v1141 = vmul.f32 %v959, 0.5
        %v1142 = vmul.f32 %v962, 0.5
        %v1143 = vmul.f32 %v967, 0.5
        %v1144 = vmul.f32 %v970, 0.5
        %v1145 = vmul.f32 %v975, 0.5
        %v1146 = vmul.f32 %v978, 0.5
        %v1147 = vmul.f32 %v983, 0.5
        %v1148 = vmul.f32 %v986, 0.5
        %v1149 = vmul.f32 %v991, 0.5
        %v1150 = vmul.f32 %v994, 0.5
        %v1151 = vmul.f32 %v999, 0.5
        %v1152 = vmul.f32 %v1002, 0.5
        %v1153 = vmul.f32 %v1007, 0.5
        %v1154 = vmul.f32 %v1010, 0.5
        %v1155 = vmul.f32 %v1015, 0.5
        %v1156 = vmul.f32 %v1018, 0.5
        %v1157 = vmul.f32 %v1023, 0.5
        %v1158 = vmul.f32 %v1026, 0.5
        %v1159 = vmul.f32 %v1031, 0.5
        %v1160 = vmul.f32 %v1034, 0.5
        %v1161 = vmul.f32 %v1039, 0.5
        %v1162 = vmul.f32 %v1042, 0.5
        %v1163 = vmul.f32 %v1047, 0.5
        %v1164 = vmul.f32 %v1050, 0.5
        %v1165 = vmul.f32 %v1055, 0.5
        %v1166 = vmul.f32 %v1058, 0.5
        %v1167 = vmul.f32 %v1063, 0.5
        %v1168 = vmul.f32 %v1066, 0.5
        %v1169 = vmul.f32 %v1071, 0.5
        %v1170 = vmul.f32 %v1074, 0.5
        %v1171 = vmul.f32 %v1079, 0.5
        %v1172 = vmul.f32 %v1082, 0.5
        %v1173 = vmul.f32 %v1087, 0.5
        %v1174 = vmul.f32 %v1090, 0.5
        %v1175 = vmul.f32 %v1095, 0.5
        %v1176 = vmul.f32 %v1098, 0.5
        %v1177 = vmul.f32 %v1103, 0.5
        %v1178 = vmul.f32 %v1106, 0.5
        %v1179 = vmul.f32 %v1111, 0.5
        %v1180 = vmul.f32 %v1114, 0.5
        %v1181 = vmin.f32 %v1117, 14.0
        %v1182 = vmin.f32 %v1118, 14.0
        %v1183 = vmin.f32 %v1119, 14.0
        %v1184 = vmin.f32 %v1120, 14.0
        %v1185 = vmin.f32 %v1121, 14.0
        %v1186 = vmin.f32 %v1122, 14.0
        %v1187 = vmin.f32 %v1123, 14.0
        %v1188 = vmin.f32 %v1124, 14.0
        %v1189 = vmin.f32 %v1125, 14.0
        %v1190 = vmin.f32 %v1126, 14.0
        %v1191 = vmin.f32 %v1127, 14.0
        %v1192 = vmin.f32 %v1128, 14.0
        %v1193 = vmin.f32 %v1129, 14.0
        %v1194 = vmin.f32 %v1130, 14.0
        %v1195 = vmin.f32 %v1131, 14.0
        %v1196 = vmin.f32 %v1132, 14.0
        %v1197 = vmin.f32 %v1133, 14.0
        %v1198 = vmin.f32 %v1134, 14.0
        %v1199 = vmin.f32 %v1135, 14.0
        %v1200 = vmin.f32 %v1136, 14.0
        %v1201 = vmin.f32 %v1137, 14.0
        %v1202 = vmin.f32 %v1138, 14.0
        %v1203 = vmin.f32 %v1139, 14.0
        %v1204 = vmin.f32 %v1140, 14.0
        %v1205 = vmin.f32 %v1141, 14.0
        %v1206 = vmin.f32 %v1142, 14.0
        %v1207 = vmin.f32 %v1143, 14.0
        %v1208 = vmin.f32 %v1144, 14.0
        %v1209 = vmin.f32 %v1145, 14.0
        %v1210 = vmin.f32 %v1146, 14.0
        %v1211 = vmin.f32 %v1147, 14.0
        %v1212 = vmin.f32 %v1148, 14.0
        %v1213 = vmin.f32 %v1149, 14.0
        %v1214 = vmin.f32 %v1150, 14.0
        %v1215 = vmin.f32 %v1151, 14.0
        %v1216 = vmin.f32 %v1152, 14.0
        %v1217 = vmin.f32 %v1153, 14.0
        %v1218 = vmin.f32 %v1154, 14.0
        %v1219 = vmin.f32 %v1155, 14.0
        %v1220 = vmin.f32 %v1156, 14.0
        %v1221 = vmin.f32 %v1157, 14.0
        %v1222 = vmin.f32 %v1158, 14.0
        %v1223 = vmin.f32 %v1159, 14.0
        %v1224 = vmin.f32 %v1160, 14.0
        %v1225 = vmin.f32 %v1161, 14.0
        %v1226 = vmin.f32 %v1162, 14.0
        %v1227 = vmin.f32 %v1163, 14.0
        %v1228 = vmin.f32 %v1164, 14.0
        %v1229 = vmin.f32 %v1165, 14.0
        %v1230 = vmin.f32 %v1166, 14.0
        %v1231 = vmin.f32 %v1167, 14.0
        %v1232 = vmin.f32 %v1168, 14.0
        %v1233 = vmin.f32 %v1169, 14.0
        %v1234 = vmin.f32 %v1170, 14.0
        %v1235 = vmin.f32 %v1171, 14.0
        %v1236 = vmin.f32 %v1172, 14.0
        %v1237 = vmin.f32 %v1173, 14.0
        %v1238 = vmin.f32 %v1174, 14.0
        %v1239 = vmin.f32 %v1175, 14.0
        %v1240 = vmin.f32 %v1176, 14.0
        %v1241 = vmin.f32 %v1177, 14.0
        %v1242 = vmin.f32 %v1178, 14.0
        %v1243 = vmin.f32 %v1179, 14.0
        %v1244 = vmin.f32 %v1180, 14.0
        %v1245 = vmul.f32 %v1181, 1.442695
        %v1246 = vpow.pop %v1245
        %v1247 = vmul.f32 %v1182, 1.442695
        %v1248 = vpow.pop %v1247
        %v1249 = vmul.f32 %v1183, 1.442695
        %v1250 = vpow.pop %v1249
        %v1251 = vmul.f32 %v1184, 1.442695
        %v1252 = vpow.pop %v1251
        %v1253 = vmul.f32 %v1185, 1.442695
        %v1254 = vpow.pop %v1253
        %v1255 = vmul.f32 %v1186, 1.442695
        %v1256 = vpow.pop %v1255
        %v1257 = vmul.f32 %v1187, 1.442695
        %v1258 = vpow.pop %v1257
        %v1259 = vmul.f32 %v1188, 1.442695
        %v1260 = vpow.pop %v1259
        %v1261 = vmul.f32 %v1189, 1.442695
        %v1262 = vpow.pop %v1261
        %v1263 = vmul.f32 %v1190, 1.442695
        %v1264 = vpow.pop %v1263
        %v1265 = vmul.f32 %v1191, 1.442695
        %v1266 = vpow.pop %v1265
        %v1267 = vmul.f32 %v1192, 1.442695
        %v1268 = vpow.pop %v1267
        %v1269 = vmul.f32 %v1193, 1.442695
        %v1270 = vpow.pop %v1269
        %v1271 = vmul.f32 %v1194, 1.442695
        %v1272 = vpow.pop %v1271
        %v1273 = vmul.f32 %v1195, 1.442695
        %v1274 = vpow.pop %v1273
        %v1275 = vmul.f32 %v1196, 1.442695
        %v1276 = vpow.pop %v1275
        %v1277 = vmul.f32 %v1197, 1.442695
        %v1278 = vpow.pop %v1277
        %v1279 = vmul.f32 %v1198, 1.442695
        %v1280 = vpow.pop %v1279
        %v1281 = vmul.f32 %v1199, 1.442695
        %v1282 = vpow.pop %v1281
        %v1283 = vmul.f32 %v1200, 1.442695
        %v1284 = vpow.pop %v1283
        %v1285 = vmul.f32 %v1201, 1.442695
        %v1286 = vpow.pop %v1285
        %v1287 = vmul.f32 %v1202, 1.442695
        %v1288 = vpow.pop %v1287
        %v1289 = vmul.f32 %v1203, 1.442695
        %v1290 = vpow.pop %v1289
        %v1291 = vmul.f32 %v1204, 1.442695
        %v1292 = vpow.pop %v1291
        %v1293 = vmul.f32 %v1205, 1.442695
        %v1294 = vpow.pop %v1293
        %v1295 = vmul.f32 %v1206, 1.442695
        %v1296 = vpow.pop %v1295
        %v1297 = vmul.f32 %v1207, 1.442695
        %v1298 = vpow.pop %v1297
        %v1299 = vmul.f32 %v1208, 1.442695
        %v1300 = vpow.pop %v1299
        %v1301 = vmul.f32 %v1209, 1.442695
        %v1302 = vpow.pop %v1301
        %v1303 = vmul.f32 %v1210, 1.442695
        %v1304 = vpow.pop %v1303
        %v1305 = vmul.f32 %v1211, 1.442695
        %v1306 = vpow.pop %v1305
        %v1307 = vmul.f32 %v1212, 1.442695
        %v1308 = vpow.pop %v1307
        %v1309 = vmul.f32 %v1213, 1.442695
        %v1310 = vpow.pop %v1309
        %v1311 = vmul.f32 %v1214, 1.442695
        %v1312 = vpow.pop %v1311
        %v1313 = vmul.f32 %v1215, 1.442695
        %v1314 = vpow.pop %v1313
        %v1315 = vmul.f32 %v1216, 1.442695
        %v1316 = vpow.pop %v1315
        %v1317 = vmul.f32 %v1217, 1.442695
        %v1318 = vpow.pop %v1317
        %v1319 = vmul.f32 %v1218, 1.442695
        %v1320 = vpow.pop %v1319
        %v1321 = vmul.f32 %v1219, 1.442695
        %v1322 = vpow.pop %v1321
        %v1323 = vmul.f32 %v1220, 1.442695
        %v1324 = vpow.pop %v1323
        %v1325 = vmul.f32 %v1221, 1.442695
        %v1326 = vpow.pop %v1325
        %v1327 = vmul.f32 %v1222, 1.442695
        %v1328 = vpow.pop %v1327
        %v1329 = vmul.f32 %v1223, 1.442695
        %v1330 = vpow.pop %v1329
        %v1331 = vmul.f32 %v1224, 1.442695
        %v1332 = vpow.pop %v1331
        %v1333 = vmul.f32 %v1225, 1.442695
        %v1334 = vpow.pop %v1333
        %v1335 = vmul.f32 %v1226, 1.442695
        %v1336 = vpow.pop %v1335
        %v1337 = vmul.f32 %v1227, 1.442695
        %v1338 = vpow.pop %v1337
        %v1339 = vmul.f32 %v1228, 1.442695
        %v1340 = vpow.pop %v1339
        %v1341 = vmul.f32 %v1229, 1.442695
        %v1342 = vpow.pop %v1341
        %v1343 = vmul.f32 %v1230, 1.442695
        %v1344 = vpow.pop %v1343
        %v1345 = vmul.f32 %v1231, 1.442695
        %v1346 = vpow.pop %v1345
        %v1347 = vmul.f32 %v1232, 1.442695
        %v1348 = vpow.pop %v1347
        %v1349 = vmul.f32 %v1233, 1.442695
        %v1350 = vpow.pop %v1349
        %v1351 = vmul.f32 %v1234, 1.442695
        %v1352 = vpow.pop %v1351
        %v1353 = vmul.f32 %v1235, 1.442695
        %v1354 = vpow.pop %v1353
        %v1355 = vmul.f32 %v1236, 1.442695
        %v1356 = vpow.pop %v1355
        %v1357 = vmul.f32 %v1237, 1.442695
        %v1358 = vpow.pop %v1357
        %v1359 = vmul.f32 %v1238, 1.442695
        %v1360 = vpow.pop %v1359
        %v1361 = vmul.f32 %v1239, 1.442695
        %v1362 = vpow.pop %v1361
        %v1363 = vmul.f32 %v1240, 1.442695
        %v1364 = vpow.pop %v1363
        %v1365 = vmul.f32 %v1241, 1.442695
        %v1366 = vpow.pop %v1365
        %v1367 = vmul.f32 %v1242, 1.442695
        %v1368 = vpow.pop %v1367
        %v1369 = vmul.f32 %v1243, 1.442695
        %v1370 = vpow.pop %v1369
        %v1371 = vmul.f32 %v1244, 1.442695
        %v1372 = vpow.pop %v1371
        %v1373 = vadd.f32 %v1246, 1.0
        %v1374 = vlog2.pop %v1373
        %v1375 = vmul.f32 %v1374, 0.6931472
        %v1376 = vmul.f32 -0.5, %v1246
        %v1377 = vadd.f32 %v1376, 1.0
        %v1378 = vmul.f32 %v1377, %v1246
        %v1379 = vand.u32 2147483647, %v1246
        %vm1380 = vcmp.lt.f32.partialorder %v1379, 0.0004427343
        %v1381 = vsel %vm1380, %v1378, %v1375
        %v1382 = vadd.f32 %v1248, 1.0
        %v1383 = vlog2.pop %v1382
        %v1384 = vmul.f32 %v1383, 0.6931472
        %v1385 = vmul.f32 -0.5, %v1248
        %v1386 = vadd.f32 %v1385, 1.0
        %v1387 = vmul.f32 %v1386, %v1248
        %v1388 = vand.u32 2147483647, %v1248
        %vm1389 = vcmp.lt.f32.partialorder %v1388, 0.0004427343
        %v1390 = vsel %vm1389, %v1387, %v1384
        %v1391 = vadd.f32 %v1250, 1.0
        %v1392 = vlog2.pop %v1391
        %v1393 = vmul.f32 %v1392, 0.6931472
        %v1394 = vmul.f32 -0.5, %v1250
        %v1395 = vadd.f32 %v1394, 1.0
        %v1396 = vmul.f32 %v1395, %v1250
        %v1397 = vand.u32 2147483647, %v1250
        %vm1398 = vcmp.lt.f32.partialorder %v1397, 0.0004427343
        %v1399 = vsel %vm1398, %v1396, %v1393
        %v1400 = vadd.f32 %v1252, 1.0
        %v1401 = vlog2.pop %v1400
        %v1402 = vmul.f32 %v1401, 0.6931472
        %v1403 = vmul.f32 -0.5, %v1252
        %v1404 = vadd.f32 %v1403, 1.0
        %v1405 = vmul.f32 %v1404, %v1252
        %v1406 = vand.u32 2147483647, %v1252
        %vm1407 = vcmp.lt.f32.partialorder %v1406, 0.0004427343
        %v1408 = vsel %vm1407, %v1405, %v1402
        %v1409 = vadd.f32 %v1254, 1.0
        %v1410 = vlog2.pop %v1409
        %v1411 = vmul.f32 %v1410, 0.6931472
        %v1412 = vmul.f32 -0.5, %v1254
        %v1413 = vadd.f32 %v1412, 1.0
        %v1414 = vmul.f32 %v1413, %v1254
        %v1415 = vand.u32 2147483647, %v1254
        %vm1416 = vcmp.lt.f32.partialorder %v1415, 0.0004427343
        %v1417 = vsel %vm1416, %v1414, %v1411
        %v1418 = vadd.f32 %v1256, 1.0
        %v1419 = vlog2.pop %v1418
        %v1420 = vmul.f32 %v1419, 0.6931472
        %v1421 = vmul.f32 -0.5, %v1256
        %v1422 = vadd.f32 %v1421, 1.0
        %v1423 = vmul.f32 %v1422, %v1256
        %v1424 = vand.u32 2147483647, %v1256
        %vm1425 = vcmp.lt.f32.partialorder %v1424, 0.0004427343
        %v1426 = vsel %vm1425, %v1423, %v1420
        %v1427 = vadd.f32 %v1258, 1.0
        %v1428 = vlog2.pop %v1427
        %v1429 = vmul.f32 %v1428, 0.6931472
        %v1430 = vmul.f32 -0.5, %v1258
        %v1431 = vadd.f32 %v1430, 1.0
        %v1432 = vmul.f32 %v1431, %v1258
        %v1433 = vand.u32 2147483647, %v1258
        %vm1434 = vcmp.lt.f32.partialorder %v1433, 0.0004427343
        %v1435 = vsel %vm1434, %v1432, %v1429
        %v1436 = vadd.f32 %v1260, 1.0
        %v1437 = vlog2.pop %v1436
        %v1438 = vmul.f32 %v1437, 0.6931472
        %v1439 = vmul.f32 -0.5, %v1260
        %v1440 = vadd.f32 %v1439, 1.0
        %v1441 = vmul.f32 %v1440, %v1260
        %v1442 = vand.u32 2147483647, %v1260
        %vm1443 = vcmp.lt.f32.partialorder %v1442, 0.0004427343
        %v1444 = vsel %vm1443, %v1441, %v1438
        %v1445 = vadd.f32 %v1262, 1.0
        %v1446 = vlog2.pop %v1445
        %v1447 = vmul.f32 %v1446, 0.6931472
        %v1448 = vmul.f32 -0.5, %v1262
        %v1449 = vadd.f32 %v1448, 1.0
        %v1450 = vmul.f32 %v1449, %v1262
        %v1451 = vand.u32 2147483647, %v1262
        %vm1452 = vcmp.lt.f32.partialorder %v1451, 0.0004427343
        %v1453 = vsel %vm1452, %v1450, %v1447
        %v1454 = vadd.f32 %v1264, 1.0
        %v1455 = vlog2.pop %v1454
        %v1456 = vmul.f32 %v1455, 0.6931472
        %v1457 = vmul.f32 -0.5, %v1264
        %v1458 = vadd.f32 %v1457, 1.0
        %v1459 = vmul.f32 %v1458, %v1264
        %v1460 = vand.u32 2147483647, %v1264
        %vm1461 = vcmp.lt.f32.partialorder %v1460, 0.0004427343
        %v1462 = vsel %vm1461, %v1459, %v1456
        %v1463 = vadd.f32 %v1266, 1.0
        %v1464 = vlog2.pop %v1463
        %v1465 = vmul.f32 %v1464, 0.6931472
        %v1466 = vmul.f32 -0.5, %v1266
        %v1467 = vadd.f32 %v1466, 1.0
        %v1468 = vmul.f32 %v1467, %v1266
        %v1469 = vand.u32 2147483647, %v1266
        %vm1470 = vcmp.lt.f32.partialorder %v1469, 0.0004427343
        %v1471 = vsel %vm1470, %v1468, %v1465
        %v1472 = vadd.f32 %v1268, 1.0
        %v1473 = vlog2.pop %v1472
        %v1474 = vmul.f32 %v1473, 0.6931472
        %v1475 = vmul.f32 -0.5, %v1268
        %v1476 = vadd.f32 %v1475, 1.0
        %v1477 = vmul.f32 %v1476, %v1268
        %v1478 = vand.u32 2147483647, %v1268
        %vm1479 = vcmp.lt.f32.partialorder %v1478, 0.0004427343
        %v1480 = vsel %vm1479, %v1477, %v1474
        %v1481 = vadd.f32 %v1270, 1.0
        %v1482 = vlog2.pop %v1481
        %v1483 = vmul.f32 %v1482, 0.6931472
        %v1484 = vmul.f32 -0.5, %v1270
        %v1485 = vadd.f32 %v1484, 1.0
        %v1486 = vmul.f32 %v1485, %v1270
        %v1487 = vand.u32 2147483647, %v1270
        %vm1488 = vcmp.lt.f32.partialorder %v1487, 0.0004427343
        %v1489 = vsel %vm1488, %v1486, %v1483
        %v1490 = vadd.f32 %v1272, 1.0
        %v1491 = vlog2.pop %v1490
        %v1492 = vmul.f32 %v1491, 0.6931472
        %v1493 = vmul.f32 -0.5, %v1272
        %v1494 = vadd.f32 %v1493, 1.0
        %v1495 = vmul.f32 %v1494, %v1272
        %v1496 = vand.u32 2147483647, %v1272
        %vm1497 = vcmp.lt.f32.partialorder %v1496, 0.0004427343
        %v1498 = vsel %vm1497, %v1495, %v1492
        %v1499 = vadd.f32 %v1274, 1.0
        %v1500 = vlog2.pop %v1499
        %v1501 = vmul.f32 %v1500, 0.6931472
        %v1502 = vmul.f32 -0.5, %v1274
        %v1503 = vadd.f32 %v1502, 1.0
        %v1504 = vmul.f32 %v1503, %v1274
        %v1505 = vand.u32 2147483647, %v1274
        %vm1506 = vcmp.lt.f32.partialorder %v1505, 0.0004427343
        %v1507 = vsel %vm1506, %v1504, %v1501
        %v1508 = vadd.f32 %v1276, 1.0
        %v1509 = vlog2.pop %v1508
        %v1510 = vmul.f32 %v1509, 0.6931472
        %v1511 = vmul.f32 -0.5, %v1276
        %v1512 = vadd.f32 %v1511, 1.0
        %v1513 = vmul.f32 %v1512, %v1276
        %v1514 = vand.u32 2147483647, %v1276
        %vm1515 = vcmp.lt.f32.partialorder %v1514, 0.0004427343
        %v1516 = vsel %vm1515, %v1513, %v1510
        %v1517 = vadd.f32 %v1278, 1.0
        %v1518 = vlog2.pop %v1517
        %v1519 = vmul.f32 %v1518, 0.6931472
        %v1520 = vmul.f32 -0.5, %v1278
        %v1521 = vadd.f32 %v1520, 1.0
        %v1522 = vmul.f32 %v1521, %v1278
        %v1523 = vand.u32 2147483647, %v1278
        %vm1524 = vcmp.lt.f32.partialorder %v1523, 0.0004427343
        %v1525 = vsel %vm1524, %v1522, %v1519
        %v1526 = vadd.f32 %v1280, 1.0
        %v1527 = vlog2.pop %v1526
        %v1528 = vmul.f32 %v1527, 0.6931472
        %v1529 = vmul.f32 -0.5, %v1280
        %v1530 = vadd.f32 %v1529, 1.0
        %v1531 = vmul.f32 %v1530, %v1280
        %v1532 = vand.u32 2147483647, %v1280
        %vm1533 = vcmp.lt.f32.partialorder %v1532, 0.0004427343
        %v1534 = vsel %vm1533, %v1531, %v1528
        %v1535 = vadd.f32 %v1282, 1.0
        %v1536 = vlog2.pop %v1535
        %v1537 = vmul.f32 %v1536, 0.6931472
        %v1538 = vmul.f32 -0.5, %v1282
        %v1539 = vadd.f32 %v1538, 1.0
        %v1540 = vmul.f32 %v1539, %v1282
        %v1541 = vand.u32 2147483647, %v1282
        %vm1542 = vcmp.lt.f32.partialorder %v1541, 0.0004427343
        %v1543 = vsel %vm1542, %v1540, %v1537
        %v1544 = vadd.f32 %v1284, 1.0
        %v1545 = vlog2.pop %v1544
        %v1546 = vmul.f32 %v1545, 0.6931472
        %v1547 = vmul.f32 -0.5, %v1284
        %v1548 = vadd.f32 %v1547, 1.0
        %v1549 = vmul.f32 %v1548, %v1284
        %v1550 = vand.u32 2147483647, %v1284
        %vm1551 = vcmp.lt.f32.partialorder %v1550, 0.0004427343
        %v1552 = vsel %vm1551, %v1549, %v1546
        %v1553 = vadd.f32 %v1286, 1.0
        %v1554 = vlog2.pop %v1553
        %v1555 = vmul.f32 %v1554, 0.6931472
        %v1556 = vmul.f32 -0.5, %v1286
        %v1557 = vadd.f32 %v1556, 1.0
        %v1558 = vmul.f32 %v1557, %v1286
        %v1559 = vand.u32 2147483647, %v1286
        %vm1560 = vcmp.lt.f32.partialorder %v1559, 0.0004427343
        %v1561 = vsel %vm1560, %v1558, %v1555
        %v1562 = vadd.f32 %v1288, 1.0
        %v1563 = vlog2.pop %v1562
        %v1564 = vmul.f32 %v1563, 0.6931472
        %v1565 = vmul.f32 -0.5, %v1288
        %v1566 = vadd.f32 %v1565, 1.0
        %v1567 = vmul.f32 %v1566, %v1288
        %v1568 = vand.u32 2147483647, %v1288
        %vm1569 = vcmp.lt.f32.partialorder %v1568, 0.0004427343
        %v1570 = vsel %vm1569, %v1567, %v1564
        %v1571 = vadd.f32 %v1290, 1.0
        %v1572 = vlog2.pop %v1571
        %v1573 = vmul.f32 %v1572, 0.6931472
        %v1574 = vmul.f32 -0.5, %v1290
        %v1575 = vadd.f32 %v1574, 1.0
        %v1576 = vmul.f32 %v1575, %v1290
        %v1577 = vand.u32 2147483647, %v1290
        %vm1578 = vcmp.lt.f32.partialorder %v1577, 0.0004427343
        %v1579 = vsel %vm1578, %v1576, %v1573
        %v1580 = vadd.f32 %v1292, 1.0
        %v1581 = vlog2.pop %v1580
        %v1582 = vmul.f32 %v1581, 0.6931472
        %v1583 = vmul.f32 -0.5, %v1292
        %v1584 = vadd.f32 %v1583, 1.0
        %v1585 = vmul.f32 %v1584, %v1292
        %v1586 = vand.u32 2147483647, %v1292
        %vm1587 = vcmp.lt.f32.partialorder %v1586, 0.0004427343
        %v1588 = vsel %vm1587, %v1585, %v1582
        %v1589 = vadd.f32 %v1294, 1.0
        %v1590 = vlog2.pop %v1589
        %v1591 = vmul.f32 %v1590, 0.6931472
        %v1592 = vmul.f32 -0.5, %v1294
        %v1593 = vadd.f32 %v1592, 1.0
        %v1594 = vmul.f32 %v1593, %v1294
        %v1595 = vand.u32 2147483647, %v1294
        %vm1596 = vcmp.lt.f32.partialorder %v1595, 0.0004427343
        %v1597 = vsel %vm1596, %v1594, %v1591
        %v1598 = vadd.f32 %v1296, 1.0
        %v1599 = vlog2.pop %v1598
        %v1600 = vmul.f32 %v1599, 0.6931472
        %v1601 = vmul.f32 -0.5, %v1296
        %v1602 = vadd.f32 %v1601, 1.0
        %v1603 = vmul.f32 %v1602, %v1296
        %v1604 = vand.u32 2147483647, %v1296
        %vm1605 = vcmp.lt.f32.partialorder %v1604, 0.0004427343
        %v1606 = vsel %vm1605, %v1603, %v1600
        %v1607 = vadd.f32 %v1298, 1.0
        %v1608 = vlog2.pop %v1607
        %v1609 = vmul.f32 %v1608, 0.6931472
        %v1610 = vmul.f32 -0.5, %v1298
        %v1611 = vadd.f32 %v1610, 1.0
        %v1612 = vmul.f32 %v1611, %v1298
        %v1613 = vand.u32 2147483647, %v1298
        %vm1614 = vcmp.lt.f32.partialorder %v1613, 0.0004427343
        %v1615 = vsel %vm1614, %v1612, %v1609
        %v1616 = vadd.f32 %v1300, 1.0
        %v1617 = vlog2.pop %v1616
        %v1618 = vmul.f32 %v1617, 0.6931472
        %v1619 = vmul.f32 -0.5, %v1300
        %v1620 = vadd.f32 %v1619, 1.0
        %v1621 = vmul.f32 %v1620, %v1300
        %v1622 = vand.u32 2147483647, %v1300
        %vm1623 = vcmp.lt.f32.partialorder %v1622, 0.0004427343
        %v1624 = vsel %vm1623, %v1621, %v1618
        %v1625 = vadd.f32 %v1302, 1.0
        %v1626 = vlog2.pop %v1625
        %v1627 = vmul.f32 %v1626, 0.6931472
        %v1628 = vmul.f32 -0.5, %v1302
        %v1629 = vadd.f32 %v1628, 1.0
        %v1630 = vmul.f32 %v1629, %v1302
        %v1631 = vand.u32 2147483647, %v1302
        %vm1632 = vcmp.lt.f32.partialorder %v1631, 0.0004427343
        %v1633 = vsel %vm1632, %v1630, %v1627
        %v1634 = vadd.f32 %v1304, 1.0
        %v1635 = vlog2.pop %v1634
        %v1636 = vmul.f32 %v1635, 0.6931472
        %v1637 = vmul.f32 -0.5, %v1304
        %v1638 = vadd.f32 %v1637, 1.0
        %v1639 = vmul.f32 %v1638, %v1304
        %v1640 = vand.u32 2147483647, %v1304
        %vm1641 = vcmp.lt.f32.partialorder %v1640, 0.0004427343
        %v1642 = vsel %vm1641, %v1639, %v1636
        %v1643 = vadd.f32 %v1306, 1.0
        %v1644 = vlog2.pop %v1643
        %v1645 = vmul.f32 %v1644, 0.6931472
        %v1646 = vmul.f32 -0.5, %v1306
        %v1647 = vadd.f32 %v1646, 1.0
        %v1648 = vmul.f32 %v1647, %v1306
        %v1649 = vand.u32 2147483647, %v1306
        %vm1650 = vcmp.lt.f32.partialorder %v1649, 0.0004427343
        %v1651 = vsel %vm1650, %v1648, %v1645
        %v1652 = vadd.f32 %v1308, 1.0
        %v1653 = vlog2.pop %v1652
        %v1654 = vmul.f32 %v1653, 0.6931472
        %v1655 = vmul.f32 -0.5, %v1308
        %v1656 = vadd.f32 %v1655, 1.0
        %v1657 = vmul.f32 %v1656, %v1308
        %v1658 = vand.u32 2147483647, %v1308
        %vm1659 = vcmp.lt.f32.partialorder %v1658, 0.0004427343
        %v1660 = vsel %vm1659, %v1657, %v1654
        %v1661 = vadd.f32 %v1310, 1.0
        %v1662 = vlog2.pop %v1661
        %v1663 = vmul.f32 %v1662, 0.6931472
        %v1664 = vmul.f32 -0.5, %v1310
        %v1665 = vadd.f32 %v1664, 1.0
        %v1666 = vmul.f32 %v1665, %v1310
        %v1667 = vand.u32 2147483647, %v1310
        %vm1668 = vcmp.lt.f32.partialorder %v1667, 0.0004427343
        %v1669 = vsel %vm1668, %v1666, %v1663
        %v1670 = vadd.f32 %v1312, 1.0
        %v1671 = vlog2.pop %v1670
        %v1672 = vmul.f32 %v1671, 0.6931472
        %v1673 = vmul.f32 -0.5, %v1312
        %v1674 = vadd.f32 %v1673, 1.0
        %v1675 = vmul.f32 %v1674, %v1312
        %v1676 = vand.u32 2147483647, %v1312
        %vm1677 = vcmp.lt.f32.partialorder %v1676, 0.0004427343
        %v1678 = vsel %vm1677, %v1675, %v1672
        %v1679 = vadd.f32 %v1314, 1.0
        %v1680 = vlog2.pop %v1679
        %v1681 = vmul.f32 %v1680, 0.6931472
        %v1682 = vmul.f32 -0.5, %v1314
        %v1683 = vadd.f32 %v1682, 1.0
        %v1684 = vmul.f32 %v1683, %v1314
        %v1685 = vand.u32 2147483647, %v1314
        %vm1686 = vcmp.lt.f32.partialorder %v1685, 0.0004427343
        %v1687 = vsel %vm1686, %v1684, %v1681
        %v1688 = vadd.f32 %v1316, 1.0
        %v1689 = vlog2.pop %v1688
        %v1690 = vmul.f32 %v1689, 0.6931472
        %v1691 = vmul.f32 -0.5, %v1316
        %v1692 = vadd.f32 %v1691, 1.0
        %v1693 = vmul.f32 %v1692, %v1316
        %v1694 = vand.u32 2147483647, %v1316
        %vm1695 = vcmp.lt.f32.partialorder %v1694, 0.0004427343
        %v1696 = vsel %vm1695, %v1693, %v1690
        %v1697 = vadd.f32 %v1318, 1.0
        %v1698 = vlog2.pop %v1697
        %v1699 = vmul.f32 %v1698, 0.6931472
        %v1700 = vmul.f32 -0.5, %v1318
        %v1701 = vadd.f32 %v1700, 1.0
        %v1702 = vmul.f32 %v1701, %v1318
        %v1703 = vand.u32 2147483647, %v1318
        %vm1704 = vcmp.lt.f32.partialorder %v1703, 0.0004427343
        %v1705 = vsel %vm1704, %v1702, %v1699
        %v1706 = vadd.f32 %v1320, 1.0
        %v1707 = vlog2.pop %v1706
        %v1708 = vmul.f32 %v1707, 0.6931472
        %v1709 = vmul.f32 -0.5, %v1320
        %v1710 = vadd.f32 %v1709, 1.0
        %v1711 = vmul.f32 %v1710, %v1320
        %v1712 = vand.u32 2147483647, %v1320
        %vm1713 = vcmp.lt.f32.partialorder %v1712, 0.0004427343
        %v1714 = vsel %vm1713, %v1711, %v1708
        %v1715 = vadd.f32 %v1322, 1.0
        %v1716 = vlog2.pop %v1715
        %v1717 = vmul.f32 %v1716, 0.6931472
        %v1718 = vmul.f32 -0.5, %v1322
        %v1719 = vadd.f32 %v1718, 1.0
        %v1720 = vmul.f32 %v1719, %v1322
        %v1721 = vand.u32 2147483647, %v1322
        %vm1722 = vcmp.lt.f32.partialorder %v1721, 0.0004427343
        %v1723 = vsel %vm1722, %v1720, %v1717
        %v1724 = vadd.f32 %v1324, 1.0
        %v1725 = vlog2.pop %v1724
        %v1726 = vmul.f32 %v1725, 0.6931472
        %v1727 = vmul.f32 -0.5, %v1324
        %v1728 = vadd.f32 %v1727, 1.0
        %v1729 = vmul.f32 %v1728, %v1324
        %v1730 = vand.u32 2147483647, %v1324
        %vm1731 = vcmp.lt.f32.partialorder %v1730, 0.0004427343
        %v1732 = vsel %vm1731, %v1729, %v1726
        %v1733 = vadd.f32 %v1326, 1.0
        %v1734 = vlog2.pop %v1733
        %v1735 = vmul.f32 %v1734, 0.6931472
        %v1736 = vmul.f32 -0.5, %v1326
        %v1737 = vadd.f32 %v1736, 1.0
        %v1738 = vmul.f32 %v1737, %v1326
        %v1739 = vand.u32 2147483647, %v1326
        %vm1740 = vcmp.lt.f32.partialorder %v1739, 0.0004427343
        %v1741 = vsel %vm1740, %v1738, %v1735
        %v1742 = vadd.f32 %v1328, 1.0
        %v1743 = vlog2.pop %v1742
        %v1744 = vmul.f32 %v1743, 0.6931472
        %v1745 = vmul.f32 -0.5, %v1328
        %v1746 = vadd.f32 %v1745, 1.0
        %v1747 = vmul.f32 %v1746, %v1328
        %v1748 = vand.u32 2147483647, %v1328
        %vm1749 = vcmp.lt.f32.partialorder %v1748, 0.0004427343
        %v1750 = vsel %vm1749, %v1747, %v1744
        %v1751 = vadd.f32 %v1330, 1.0
        %v1752 = vlog2.pop %v1751
        %v1753 = vmul.f32 %v1752, 0.6931472
        %v1754 = vmul.f32 -0.5, %v1330
        %v1755 = vadd.f32 %v1754, 1.0
        %v1756 = vmul.f32 %v1755, %v1330
        %v1757 = vand.u32 2147483647, %v1330
        %vm1758 = vcmp.lt.f32.partialorder %v1757, 0.0004427343
        %v1759 = vsel %vm1758, %v1756, %v1753
        %v1760 = vadd.f32 %v1332, 1.0
        %v1761 = vlog2.pop %v1760
        %v1762 = vmul.f32 %v1761, 0.6931472
        %v1763 = vmul.f32 -0.5, %v1332
        %v1764 = vadd.f32 %v1763, 1.0
        %v1765 = vmul.f32 %v1764, %v1332
        %v1766 = vand.u32 2147483647, %v1332
        %vm1767 = vcmp.lt.f32.partialorder %v1766, 0.0004427343
        %v1768 = vsel %vm1767, %v1765, %v1762
        %v1769 = vadd.f32 %v1334, 1.0
        %v1770 = vlog2.pop %v1769
        %v1771 = vmul.f32 %v1770, 0.6931472
        %v1772 = vmul.f32 -0.5, %v1334
        %v1773 = vadd.f32 %v1772, 1.0
        %v1774 = vmul.f32 %v1773, %v1334
        %v1775 = vand.u32 2147483647, %v1334
        %vm1776 = vcmp.lt.f32.partialorder %v1775, 0.0004427343
        %v1777 = vsel %vm1776, %v1774, %v1771
        %v1778 = vadd.f32 %v1336, 1.0
        %v1779 = vlog2.pop %v1778
        %v1780 = vmul.f32 %v1779, 0.6931472
        %v1781 = vmul.f32 -0.5, %v1336
        %v1782 = vadd.f32 %v1781, 1.0
        %v1783 = vmul.f32 %v1782, %v1336
        %v1784 = vand.u32 2147483647, %v1336
        %vm1785 = vcmp.lt.f32.partialorder %v1784, 0.0004427343
        %v1786 = vsel %vm1785, %v1783, %v1780
        %v1787 = vadd.f32 %v1338, 1.0
        %v1788 = vlog2.pop %v1787
        %v1789 = vmul.f32 %v1788, 0.6931472
        %v1790 = vmul.f32 -0.5, %v1338
        %v1791 = vadd.f32 %v1790, 1.0
        %v1792 = vmul.f32 %v1791, %v1338
        %v1793 = vand.u32 2147483647, %v1338
        %vm1794 = vcmp.lt.f32.partialorder %v1793, 0.0004427343
        %v1795 = vsel %vm1794, %v1792, %v1789
        %v1796 = vadd.f32 %v1340, 1.0
        %v1797 = vlog2.pop %v1796
        %v1798 = vmul.f32 %v1797, 0.6931472
        %v1799 = vmul.f32 -0.5, %v1340
        %v1800 = vadd.f32 %v1799, 1.0
        %v1801 = vmul.f32 %v1800, %v1340
        %v1802 = vand.u32 2147483647, %v1340
        %vm1803 = vcmp.lt.f32.partialorder %v1802, 0.0004427343
        %v1804 = vsel %vm1803, %v1801, %v1798
        %v1805 = vadd.f32 %v1342, 1.0
        %v1806 = vlog2.pop %v1805
        %v1807 = vmul.f32 %v1806, 0.6931472
        %v1808 = vmul.f32 -0.5, %v1342
        %v1809 = vadd.f32 %v1808, 1.0
        %v1810 = vmul.f32 %v1809, %v1342
        %v1811 = vand.u32 2147483647, %v1342
        %vm1812 = vcmp.lt.f32.partialorder %v1811, 0.0004427343
        %v1813 = vsel %vm1812, %v1810, %v1807
        %v1814 = vadd.f32 %v1344, 1.0
        %v1815 = vlog2.pop %v1814
        %v1816 = vmul.f32 %v1815, 0.6931472
        %v1817 = vmul.f32 -0.5, %v1344
        %v1818 = vadd.f32 %v1817, 1.0
        %v1819 = vmul.f32 %v1818, %v1344
        %v1820 = vand.u32 2147483647, %v1344
        %vm1821 = vcmp.lt.f32.partialorder %v1820, 0.0004427343
        %v1822 = vsel %vm1821, %v1819, %v1816
        %v1823 = vadd.f32 %v1346, 1.0
        %v1824 = vlog2.pop %v1823
        %v1825 = vmul.f32 %v1824, 0.6931472
        %v1826 = vmul.f32 -0.5, %v1346
        %v1827 = vadd.f32 %v1826, 1.0
        %v1828 = vmul.f32 %v1827, %v1346
        %v1829 = vand.u32 2147483647, %v1346
        %vm1830 = vcmp.lt.f32.partialorder %v1829, 0.0004427343
        %v1831 = vsel %vm1830, %v1828, %v1825
        %v1832 = vadd.f32 %v1348, 1.0
        %v1833 = vlog2.pop %v1832
        %v1834 = vmul.f32 %v1833, 0.6931472
        %v1835 = vmul.f32 -0.5, %v1348
        %v1836 = vadd.f32 %v1835, 1.0
        %v1837 = vmul.f32 %v1836, %v1348
        %v1838 = vand.u32 2147483647, %v1348
        %vm1839 = vcmp.lt.f32.partialorder %v1838, 0.0004427343
        %v1840 = vsel %vm1839, %v1837, %v1834
        %v1841 = vadd.f32 %v1350, 1.0
        %v1842 = vlog2.pop %v1841
        %v1843 = vmul.f32 %v1842, 0.6931472
        %v1844 = vmul.f32 -0.5, %v1350
        %v1845 = vadd.f32 %v1844, 1.0
        %v1846 = vmul.f32 %v1845, %v1350
        %v1847 = vand.u32 2147483647, %v1350
        %vm1848 = vcmp.lt.f32.partialorder %v1847, 0.0004427343
        %v1849 = vsel %vm1848, %v1846, %v1843
        %v1850 = vadd.f32 %v1352, 1.0
        %v1851 = vlog2.pop %v1850
        %v1852 = vmul.f32 %v1851, 0.6931472
        %v1853 = vmul.f32 -0.5, %v1352
        %v1854 = vadd.f32 %v1853, 1.0
        %v1855 = vmul.f32 %v1854, %v1352
        %v1856 = vand.u32 2147483647, %v1352
        %vm1857 = vcmp.lt.f32.partialorder %v1856, 0.0004427343
        %v1858 = vsel %vm1857, %v1855, %v1852
        %v1859 = vadd.f32 %v1354, 1.0
        %v1860 = vlog2.pop %v1859
        %v1861 = vmul.f32 %v1860, 0.6931472
        %v1862 = vmul.f32 -0.5, %v1354
        %v1863 = vadd.f32 %v1862, 1.0
        %v1864 = vmul.f32 %v1863, %v1354
        %v1865 = vand.u32 2147483647, %v1354
        %vm1866 = vcmp.lt.f32.partialorder %v1865, 0.0004427343
        %v1867 = vsel %vm1866, %v1864, %v1861
        %v1868 = vadd.f32 %v1356, 1.0
        %v1869 = vlog2.pop %v1868
        %v1870 = vmul.f32 %v1869, 0.6931472
        %v1871 = vmul.f32 -0.5, %v1356
        %v1872 = vadd.f32 %v1871, 1.0
        %v1873 = vmul.f32 %v1872, %v1356
        %v1874 = vand.u32 2147483647, %v1356
        %vm1875 = vcmp.lt.f32.partialorder %v1874, 0.0004427343
        %v1876 = vsel %vm1875, %v1873, %v1870
        %v1877 = vadd.f32 %v1358, 1.0
        %v1878 = vlog2.pop %v1877
        %v1879 = vmul.f32 %v1878, 0.6931472
        %v1880 = vmul.f32 -0.5, %v1358
        %v1881 = vadd.f32 %v1880, 1.0
        %v1882 = vmul.f32 %v1881, %v1358
        %v1883 = vand.u32 2147483647, %v1358
        %vm1884 = vcmp.lt.f32.partialorder %v1883, 0.0004427343
        %v1885 = vsel %vm1884, %v1882, %v1879
        %v1886 = vadd.f32 %v1360, 1.0
        %v1887 = vlog2.pop %v1886
        %v1888 = vmul.f32 %v1887, 0.6931472
        %v1889 = vmul.f32 -0.5, %v1360
        %v1890 = vadd.f32 %v1889, 1.0
        %v1891 = vmul.f32 %v1890, %v1360
        %v1892 = vand.u32 2147483647, %v1360
        %vm1893 = vcmp.lt.f32.partialorder %v1892, 0.0004427343
        %v1894 = vsel %vm1893, %v1891, %v1888
        %v1895 = vadd.f32 %v1362, 1.0
        %v1896 = vlog2.pop %v1895
        %v1897 = vmul.f32 %v1896, 0.6931472
        %v1898 = vmul.f32 -0.5, %v1362
        %v1899 = vadd.f32 %v1898, 1.0
        %v1900 = vmul.f32 %v1899, %v1362
        %v1901 = vand.u32 2147483647, %v1362
        %vm1902 = vcmp.lt.f32.partialorder %v1901, 0.0004427343
        %v1903 = vsel %vm1902, %v1900, %v1897
        %v1904 = vadd.f32 %v1364, 1.0
        %v1905 = vlog2.pop %v1904
        %v1906 = vmul.f32 %v1905, 0.6931472
        %v1907 = vmul.f32 -0.5, %v1364
        %v1908 = vadd.f32 %v1907, 1.0
        %v1909 = vmul.f32 %v1908, %v1364
        %v1910 = vand.u32 2147483647, %v1364
        %vm1911 = vcmp.lt.f32.partialorder %v1910, 0.0004427343
        %v1912 = vsel %vm1911, %v1909, %v1906
        %v1913 = vadd.f32 %v1366, 1.0
        %v1914 = vlog2.pop %v1913
        %v1915 = vmul.f32 %v1914, 0.6931472
        %v1916 = vmul.f32 -0.5, %v1366
        %v1917 = vadd.f32 %v1916, 1.0
        %v1918 = vmul.f32 %v1917, %v1366
        %v1919 = vand.u32 2147483647, %v1366
        %vm1920 = vcmp.lt.f32.partialorder %v1919, 0.0004427343
        %v1921 = vsel %vm1920, %v1918, %v1915
        %v1922 = vadd.f32 %v1368, 1.0
        %v1923 = vlog2.pop %v1922
        %v1924 = vmul.f32 %v1923, 0.6931472
        %v1925 = vmul.f32 -0.5, %v1368
        %v1926 = vadd.f32 %v1925, 1.0
        %v1927 = vmul.f32 %v1926, %v1368
        %v1928 = vand.u32 2147483647, %v1368
        %vm1929 = vcmp.lt.f32.partialorder %v1928, 0.0004427343
        %v1930 = vsel %vm1929, %v1927, %v1924
        %v1931 = vadd.f32 %v1370, 1.0
        %v1932 = vlog2.pop %v1931
        %v1933 = vmul.f32 %v1932, 0.6931472
        %v1934 = vmul.f32 -0.5, %v1370
        %v1935 = vadd.f32 %v1934, 1.0
        %v1936 = vmul.f32 %v1935, %v1370
        %v1937 = vand.u32 2147483647, %v1370
        %vm1938 = vcmp.lt.f32.partialorder %v1937, 0.0004427343
        %v1939 = vsel %vm1938, %v1936, %v1933
        %v1940 = vadd.f32 %v1372, 1.0
        %v1941 = vlog2.pop %v1940
        %v1942 = vmul.f32 %v1941, 0.6931472
        %v1943 = vmul.f32 -0.5, %v1372
        %v1944 = vadd.f32 %v1943, 1.0
        %v1945 = vmul.f32 %v1944, %v1372
        %v1946 = vand.u32 2147483647, %v1372
        %vm1947 = vcmp.lt.f32.partialorder %v1946, 0.0004427343
        %v1948 = vsel %vm1947, %v1945, %v1942
        %v1949 = vmul.f32 %v1381, 2.0
        %v1950 = vmul.f32 %v1390, 2.0
        %v1951 = vmul.f32 %v1399, 2.0
        %v1952 = vmul.f32 %v1408, 2.0
        %v1953 = vmul.f32 %v1417, 2.0
        %v1954 = vmul.f32 %v1426, 2.0
        %v1955 = vmul.f32 %v1435, 2.0
        %v1956 = vmul.f32 %v1444, 2.0
        %v1957 = vmul.f32 %v1453, 2.0
        %v1958 = vmul.f32 %v1462, 2.0
        %v1959 = vmul.f32 %v1471, 2.0
        %v1960 = vmul.f32 %v1480, 2.0
        %v1961 = vmul.f32 %v1489, 2.0
        %v1962 = vmul.f32 %v1498, 2.0
        %v1963 = vmul.f32 %v1507, 2.0
        %v1964 = vmul.f32 %v1516, 2.0
        %v1965 = vmul.f32 %v1525, 2.0
        %v1966 = vmul.f32 %v1534, 2.0
        %v1967 = vmul.f32 %v1543, 2.0
        %v1968 = vmul.f32 %v1552, 2.0
        %v1969 = vmul.f32 %v1561, 2.0
        %v1970 = vmul.f32 %v1570, 2.0
        %v1971 = vmul.f32 %v1579, 2.0
        %v1972 = vmul.f32 %v1588, 2.0
        %v1973 = vmul.f32 %v1597, 2.0
        %v1974 = vmul.f32 %v1606, 2.0
        %v1975 = vmul.f32 %v1615, 2.0
        %v1976 = vmul.f32 %v1624, 2.0
        %v1977 = vmul.f32 %v1633, 2.0
        %v1978 = vmul.f32 %v1642, 2.0
        %v1979 = vmul.f32 %v1651, 2.0
        %v1980 = vmul.f32 %v1660, 2.0
        %v1981 = vmul.f32 %v1669, 2.0
        %v1982 = vmul.f32 %v1678, 2.0
        %v1983 = vmul.f32 %v1687, 2.0
        %v1984 = vmul.f32 %v1696, 2.0
        %v1985 = vmul.f32 %v1705, 2.0
        %v1986 = vmul.f32 %v1714, 2.0
        %v1987 = vmul.f32 %v1723, 2.0
        %v1988 = vmul.f32 %v1732, 2.0
        %v1989 = vmul.f32 %v1741, 2.0
        %v1990 = vmul.f32 %v1750, 2.0
        %v1991 = vmul.f32 %v1759, 2.0
        %v1992 = vmul.f32 %v1768, 2.0
        %v1993 = vmul.f32 %v1777, 2.0
        %v1994 = vmul.f32 %v1786, 2.0
        %v1995 = vmul.f32 %v1795, 2.0
        %v1996 = vmul.f32 %v1804, 2.0
        %v1997 = vmul.f32 %v1813, 2.0
        %v1998 = vmul.f32 %v1822, 2.0
        %v1999 = vmul.f32 %v1831, 2.0
        %v2000 = vmul.f32 %v1840, 2.0
        %v2001 = vmul.f32 %v1849, 2.0
        %v2002 = vmul.f32 %v1858, 2.0
        %v2003 = vmul.f32 %v1867, 2.0
        %v2004 = vmul.f32 %v1876, 2.0
        %v2005 = vmul.f32 %v1885, 2.0
        %v2006 = vmul.f32 %v1894, 2.0
        %v2007 = vmul.f32 %v1903, 2.0
        %v2008 = vmul.f32 %v1912, 2.0
        %v2009 = vmul.f32 %v1921, 2.0
        %v2010 = vmul.f32 %v1930, 2.0
        %v2011 = vmul.f32 %v1939, 2.0
        %v2012 = vmul.f32 %v1948, 2.0
        %vm2013 = vcmp.gt.f32.partialorder %v1117, 14.0
        %vm2014 = vcmp.gt.f32.partialorder %v1118, 14.0
        %vm2015 = vcmp.gt.f32.partialorder %v1119, 14.0
        %vm2016 = vcmp.gt.f32.partialorder %v1120, 14.0
        %vm2017 = vcmp.gt.f32.partialorder %v1121, 14.0
        %vm2018 = vcmp.gt.f32.partialorder %v1122, 14.0
        %vm2019 = vcmp.gt.f32.partialorder %v1123, 14.0
        %vm2020 = vcmp.gt.f32.partialorder %v1124, 14.0
        %vm2021 = vcmp.gt.f32.partialorder %v1125, 14.0
        %vm2022 = vcmp.gt.f32.partialorder %v1126, 14.0
        %vm2023 = vcmp.gt.f32.partialorder %v1127, 14.0
        %vm2024 = vcmp.gt.f32.partialorder %v1128, 14.0
        %vm2025 = vcmp.gt.f32.partialorder %v1129, 14.0
        %vm2026 = vcmp.gt.f32.partialorder %v1130, 14.0
        %vm2027 = vcmp.gt.f32.partialorder %v1131, 14.0
        %vm2028 = vcmp.gt.f32.partialorder %v1132, 14.0
        %vm2029 = vcmp.gt.f32.partialorder %v1133, 14.0
        %vm2030 = vcmp.gt.f32.partialorder %v1134, 14.0
        %vm2031 = vcmp.gt.f32.partialorder %v1135, 14.0
        %vm2032 = vcmp.gt.f32.partialorder %v1136, 14.0
        %vm2033 = vcmp.gt.f32.partialorder %v1137, 14.0
        %vm2034 = vcmp.gt.f32.partialorder %v1138, 14.0
        %vm2035 = vcmp.gt.f32.partialorder %v1139, 14.0
        %vm2036 = vcmp.gt.f32.partialorder %v1140, 14.0
        %vm2037 = vcmp.gt.f32.partialorder %v1141, 14.0
        %vm2038 = vcmp.gt.f32.partialorder %v1142, 14.0
        %vm2039 = vcmp.gt.f32.partialorder %v1143, 14.0
        %vm2040 = vcmp.gt.f32.partialorder %v1144, 14.0
        %vm2041 = vcmp.gt.f32.partialorder %v1145, 14.0
        %vm2042 = vcmp.gt.f32.partialorder %v1146, 14.0
        %vm2043 = vcmp.gt.f32.partialorder %v1147, 14.0
        %vm2044 = vcmp.gt.f32.partialorder %v1148, 14.0
        %vm2045 = vcmp.gt.f32.partialorder %v1149, 14.0
        %vm2046 = vcmp.gt.f32.partialorder %v1150, 14.0
        %vm2047 = vcmp.gt.f32.partialorder %v1151, 14.0
        %vm2048 = vcmp.gt.f32.partialorder %v1152, 14.0
        %vm2049 = vcmp.gt.f32.partialorder %v1153, 14.0
        %vm2050 = vcmp.gt.f32.partialorder %v1154, 14.0
        %vm2051 = vcmp.gt.f32.partialorder %v1155, 14.0
        %vm2052 = vcmp.gt.f32.partialorder %v1156, 14.0
        %vm2053 = vcmp.gt.f32.partialorder %v1157, 14.0
        %vm2054 = vcmp.gt.f32.partialorder %v1158, 14.0
        %vm2055 = vcmp.gt.f32.partialorder %v1159, 14.0
        %vm2056 = vcmp.gt.f32.partialorder %v1160, 14.0
        %vm2057 = vcmp.gt.f32.partialorder %v1161, 14.0
        %vm2058 = vcmp.gt.f32.partialorder %v1162, 14.0
        %vm2059 = vcmp.gt.f32.partialorder %v1163, 14.0
        %vm2060 = vcmp.gt.f32.partialorder %v1164, 14.0
        %vm2061 = vcmp.gt.f32.partialorder %v1165, 14.0
        %vm2062 = vcmp.gt.f32.partialorder %v1166, 14.0
        %vm2063 = vcmp.gt.f32.partialorder %v1167, 14.0
        %vm2064 = vcmp.gt.f32.partialorder %v1168, 14.0
        %vm2065 = vcmp.gt.f32.partialorder %v1169, 14.0
        %vm2066 = vcmp.gt.f32.partialorder %v1170, 14.0
        %vm2067 = vcmp.gt.f32.partialorder %v1171, 14.0
        %vm2068 = vcmp.gt.f32.partialorder %v1172, 14.0
        %vm2069 = vcmp.gt.f32.partialorder %v1173, 14.0
        %vm2070 = vcmp.gt.f32.partialorder %v1174, 14.0
        %vm2071 = vcmp.gt.f32.partialorder %v1175, 14.0
        %vm2072 = vcmp.gt.f32.partialorder %v1176, 14.0
        %vm2073 = vcmp.gt.f32.partialorder %v1177, 14.0
        %vm2074 = vcmp.gt.f32.partialorder %v1178, 14.0
        %vm2075 = vcmp.gt.f32.partialorder %v1179, 14.0
        %vm2076 = vcmp.gt.f32.partialorder %v1180, 14.0
        %v2077 = vsel %vm2013, %v863, %v1949
        %v2078 = vsel %vm2014, %v866, %v1950
        %v2079 = vsel %vm2015, %v871, %v1951
        %v2080 = vsel %vm2016, %v874, %v1952
        %v2081 = vsel %vm2017, %v879, %v1953
        %v2082 = vsel %vm2018, %v882, %v1954
        %v2083 = vsel %vm2019, %v887, %v1955
        %v2084 = vsel %vm2020, %v890, %v1956
        %v2085 = vsel %vm2021, %v895, %v1957
        %v2086 = vsel %vm2022, %v898, %v1958
        %v2087 = vsel %vm2023, %v903, %v1959
        %v2088 = vsel %vm2024, %v906, %v1960
        %v2089 = vsel %vm2025, %v911, %v1961
        %v2090 = vsel %vm2026, %v914, %v1962
        %v2091 = vsel %vm2027, %v919, %v1963
        %v2092 = vsel %vm2028, %v922, %v1964
        %v2093 = vsel %vm2029, %v927, %v1965
        %v2094 = vsel %vm2030, %v930, %v1966
        %v2095 = vsel %vm2031, %v935, %v1967
        %v2096 = vsel %vm2032, %v938, %v1968
        %v2097 = vsel %vm2033, %v943, %v1969
        %v2098 = vsel %vm2034, %v946, %v1970
        %v2099 = vsel %vm2035, %v951, %v1971
        %v2100 = vsel %vm2036, %v954, %v1972
        %v2101 = vsel %vm2037, %v959, %v1973
        %v2102 = vsel %vm2038, %v962, %v1974
        %v2103 = vsel %vm2039, %v967, %v1975
        %v2104 = vsel %vm2040, %v970, %v1976
        %v2105 = vsel %vm2041, %v975, %v1977
        %v2106 = vsel %vm2042, %v978, %v1978
        %v2107 = vsel %vm2043, %v983, %v1979
        %v2108 = vsel %vm2044, %v986, %v1980
        %v2109 = vsel %vm2045, %v991, %v1981
        %v2110 = vsel %vm2046, %v994, %v1982
        %v2111 = vsel %vm2047, %v999, %v1983
        %v2112 = vsel %vm2048, %v1002, %v1984
        %v2113 = vsel %vm2049, %v1007, %v1985
        %v2114 = vsel %vm2050, %v1010, %v1986
        %v2115 = vsel %vm2051, %v1015, %v1987
        %v2116 = vsel %vm2052, %v1018, %v1988
        %v2117 = vsel %vm2053, %v1023, %v1989
        %v2118 = vsel %vm2054, %v1026, %v1990
        %v2119 = vsel %vm2055, %v1031, %v1991
        %v2120 = vsel %vm2056, %v1034, %v1992
        %v2121 = vsel %vm2057, %v1039, %v1993
        %v2122 = vsel %vm2058, %v1042, %v1994
        %v2123 = vsel %vm2059, %v1047, %v1995
        %v2124 = vsel %vm2060, %v1050, %v1996
        %v2125 = vsel %vm2061, %v1055, %v1997
        %v2126 = vsel %vm2062, %v1058, %v1998
        %v2127 = vsel %vm2063, %v1063, %v1999
        %v2128 = vsel %vm2064, %v1066, %v2000
        %v2129 = vsel %vm2065, %v1071, %v2001
        %v2130 = vsel %vm2066, %v1074, %v2002
        %v2131 = vsel %vm2067, %v1079, %v2003
        %v2132 = vsel %vm2068, %v1082, %v2004
        %v2133 = vsel %vm2069, %v1087, %v2005
        %v2134 = vsel %vm2070, %v1090, %v2006
        %v2135 = vsel %vm2071, %v1095, %v2007
        %v2136 = vsel %vm2072, %v1098, %v2008
        %v2137 = vsel %vm2073, %v1103, %v2009
        %v2138 = vsel %vm2074, %v1106, %v2010
        %v2139 = vsel %vm2075, %v1111, %v2011
        %v2140 = vsel %vm2076, %v1114, %v2012
        %v2141 = vpack.c.bf16 %v2078, %v2077
        %v2142 = vpack.c.bf16 %v2080, %v2079
        %v2143 = vpack.c.bf16 %v2082, %v2081
        %v2144 = vpack.c.bf16 %v2084, %v2083
        %v2145 = vpack.c.bf16 %v2086, %v2085
        %v2146 = vpack.c.bf16 %v2088, %v2087
        %v2147 = vpack.c.bf16 %v2090, %v2089
        %v2148 = vpack.c.bf16 %v2092, %v2091
        %v2149 = vpack.c.bf16 %v2094, %v2093
        %v2150 = vpack.c.bf16 %v2096, %v2095
        %v2151 = vpack.c.bf16 %v2098, %v2097
        %v2152 = vpack.c.bf16 %v2100, %v2099
        %v2153 = vpack.c.bf16 %v2102, %v2101
        %v2154 = vpack.c.bf16 %v2104, %v2103
        %v2155 = vpack.c.bf16 %v2106, %v2105
        %v2156 = vpack.c.bf16 %v2108, %v2107
        %v2157 = vpack.c.bf16 %v2110, %v2109
        %v2158 = vpack.c.bf16 %v2112, %v2111
        %v2159 = vpack.c.bf16 %v2114, %v2113
        %v2160 = vpack.c.bf16 %v2116, %v2115
        %v2161 = vpack.c.bf16 %v2118, %v2117
        %v2162 = vpack.c.bf16 %v2120, %v2119
        %v2163 = vpack.c.bf16 %v2122, %v2121
        %v2164 = vpack.c.bf16 %v2124, %v2123
        %v2165 = vpack.c.bf16 %v2126, %v2125
        %v2166 = vpack.c.bf16 %v2128, %v2127
        %v2167 = vpack.c.bf16 %v2130, %v2129
        %v2168 = vpack.c.bf16 %v2132, %v2131
        %v2169 = vpack.c.bf16 %v2134, %v2133
        %v2170 = vpack.c.bf16 %v2136, %v2135
        %v2171 = vpack.c.bf16 %v2138, %v2137
        %v2172 = vpack.c.bf16 %v2140, %v2139
        %v2173 = vld [vmem:[%s7] sm:$0xf]
        %v2174 = vld [vmem:[%s7 + $0x4] sm:$0xf]
        %v2175 = vld [vmem:[%s7 + $0x8] sm:$0xf]
        %v2176 = vld [vmem:[%s7 + $0xc] sm:$0xf]
        %v2177 = vld [vmem:[%s7 + $0x10] sm:$0xf]
        %v2178 = vld [vmem:[%s7 + $0x14] sm:$0xf]
        %v2179 = vld [vmem:[%s7 + $0x18] sm:$0xf]
        %v2180 = vld [vmem:[%s7 + $0x1c] sm:$0xf]
        %v2181 = vld [vmem:[%s7 + $0x20] sm:$0xf]
        %v2182 = vld [vmem:[%s7 + $0x24] sm:$0xf]
        %v2183 = vld [vmem:[%s7 + $0x28] sm:$0xf]
        %v2184 = vld [vmem:[%s7 + $0x2c] sm:$0xf]
        %v2185 = vld [vmem:[%s7 + $0x30] sm:$0xf]
        %v2186 = vld [vmem:[%s7 + $0x34] sm:$0xf]
        %v2187 = vld [vmem:[%s7 + $0x38] sm:$0xf]
        %v2188 = vld [vmem:[%s7 + $0x3c] sm:$0xf]
        %v2189 = vld [vmem:[%s8] sm:$0x1]
        %v2191 = vlaneseq
        %v2192 = vshrl.u32 %v2191, 7
        %v2193 = vsub.s32 0, %v2192
        %v2194 = vrot.slane %v2189, %v2193
        %v2212 = vunpack.c.l.b16 %v2173
        %v2213 = vunpack.c.l.b16 %v2174
        %v2214 = vunpack.c.l.b16 %v2175
        %v2215 = vunpack.c.l.b16 %v2176
        %v2216 = vunpack.c.l.b16 %v2177
        %v2217 = vunpack.c.l.b16 %v2178
        %v2218 = vunpack.c.l.b16 %v2179
        %v2219 = vunpack.c.l.b16 %v2180
        %v2220 = vunpack.c.l.b16 %v2181
        %v2221 = vunpack.c.l.b16 %v2182
        %v2222 = vunpack.c.l.b16 %v2183
        %v2223 = vunpack.c.l.b16 %v2184
        %v2224 = vunpack.c.l.b16 %v2185
        %v2225 = vunpack.c.l.b16 %v2186
        %v2226 = vunpack.c.l.b16 %v2187
        %v2227 = vunpack.c.l.b16 %v2188
        %v2228 = vpack.c.b16 %v2213, %v2212
        %v2229 = vpack.c.b16 %v2215, %v2214
        %v2230 = vpack.c.b16 %v2217, %v2216
        %v2231 = vpack.c.b16 %v2219, %v2218
        %v2232 = vpack.c.b16 %v2221, %v2220
        %v2233 = vpack.c.b16 %v2223, %v2222
        %v2234 = vpack.c.b16 %v2225, %v2224
        %v2235 = vpack.c.b16 %v2227, %v2226
        %2244 = vmatprep.subr.bf16.mxu0 0
        %2245 = vmatpush1.bf16.msra.mxu0 %v2228
        %2246 = vmatprep.subr.bf16.mxu0 0
        %2247 = vmatpush1.bf16.msra.mxu0 %v2229
        %2248 = vmatprep.subr.bf16.mxu0 0
        %2249 = vmatpush1.bf16.msra.mxu0 %v2230
        %2250 = vmatprep.subr.bf16.mxu0 0
        %2251 = vmatpush1.bf16.msra.mxu0 %v2231
        %2252 = vmatprep.subr.bf16.mxu0 0
        %2253 = vmatpush1.bf16.msra.mxu0 %v2232
        %2254 = vmatprep.subr.bf16.mxu0 0
        %2255 = vmatpush1.bf16.msra.mxu0 %v2233
        %2256 = vmatprep.subr.bf16.mxu0 0
        %2257 = vmatpush1.bf16.msra.mxu0 %v2234
        %2258 = vmatprep.subr.bf16.mxu0 0
        %2259 = vmatpush1.bf16.msra.mxu0 %v2235
        %2260 = vmatprep.subr.bf16.mxu0 0
        %2261 = vmatpush1.bf16.msra.mxu0 0
        %2262 = vmatprep.subr.bf16.mxu0 0
        %2263 = vmatpush1.bf16.msra.mxu0 0
        %2264 = vmatprep.subr.bf16.mxu0 0
        %2265 = vmatpush1.bf16.msra.mxu0 0
        %2266 = vmatprep.subr.bf16.mxu0 0
        %2267 = vmatpush1.bf16.msra.mxu0 0
        %2268 = vmatprep.subr.bf16.mxu0 0
        %2269 = vmatpush1.bf16.msra.mxu0 0
        %2270 = vmatprep.subr.bf16.mxu0 0
        %2271 = vmatpush1.bf16.msra.mxu0 0
        %2272 = vmatprep.subr.bf16.mxu0 0
        %2273 = vmatpush1.bf16.msra.mxu0 0
        %2274 = vmatprep.subr.bf16.mxu0 0
        %2275 = vmatpush1.bf16.msra.mxu0 0
        %2276 = vmatprep.mubr.bf16.mxu0 0
        %2277 = vmatmul.mubr.bf16.gmra.mrb[0].mxu0 %v2141
        %v2278 = vpop.f32.mrb[0].mxu0
        %v2279 = vadd.f32 %v2194, %v2278
        %v2280 = vpop.f32.mrb[0].mxu0
        %v2281 = vpop.f32.mrb[0].mxu0
        %v2282 = vadd.f32 %v2194, %v2281
        %v2283 = vpop.f32.mrb[0].mxu0
        %2284 = vmatprep.mubr.bf16.mxu0 0
        %2285 = vmatmul.mubr.bf16.gmra.mrb[0].mxu0 %v2142
        %v2286 = vpop.f32.mrb[0].mxu0
        %v2287 = vadd.f32 %v2194, %v2286
        %v2288 = vpop.f32.mrb[0].mxu0
        %v2289 = vpop.f32.mrb[0].mxu0
        %v2290 = vadd.f32 %v2194, %v2289
        %v2291 = vpop.f32.mrb[0].mxu0
        %2292 = vmatprep.mubr.bf16.mxu0 0
        %2293 = vmatmul.mubr.bf16.gmra.mrb[0].mxu0 %v2143
        %v2294 = vpop.f32.mrb[0].mxu0
        %v2295 = vadd.f32 %v2194, %v2294
        %v2296 = vpop.f32.mrb[0].mxu0
        %v2297 = vpop.f32.mrb[0].mxu0
        %v2298 = vadd.f32 %v2194, %v2297
        %v2299 = vpop.f32.mrb[0].mxu0
        %2300 = vmatprep.mubr.bf16.mxu0 0
        %2301 = vmatmul.mubr.bf16.gmra.mrb[0].mxu0 %v2144
        %v2302 = vpop.f32.mrb[0].mxu0
        %v2303 = vadd.f32 %v2194, %v2302
        %v2304 = vpop.f32.mrb[0].mxu0
        %v2305 = vpop.f32.mrb[0].mxu0
        %v2306 = vadd.f32 %v2194, %v2305
        %v2307 = vpop.f32.mrb[0].mxu0
        %2308 = vmatprep.mubr.bf16.mxu0 0
        %2309 = vmatmul.mubr.bf16.gmra.mrb[0].mxu0 %v2145
        %v2310 = vpop.f32.mrb[0].mxu0
        %v2311 = vadd.f32 %v2194, %v2310
        %v2312 = vpop.f32.mrb[0].mxu0
        %v2313 = vpop.f32.mrb[0].mxu0
        %v2314 = vadd.f32 %v2194, %v2313
        %v2315 = vpop.f32.mrb[0].mxu0
        %2316 = vmatprep.mubr.bf16.mxu0 0
        %2317 = vmatmul.mubr.bf16.gmra.mrb[0].mxu0 %v2146
        %v2318 = vpop.f32.mrb[0].mxu0
        %v2319 = vadd.f32 %v2194, %v2318
        %v2320 = vpop.f32.mrb[0].mxu0
        %v2321 = vpop.f32.mrb[0].mxu0
        %v2322 = vadd.f32 %v2194, %v2321
        %v2323 = vpop.f32.mrb[0].mxu0
        %2324 = vmatprep.mubr.bf16.mxu0 0
        %2325 = vmatmul.mubr.bf16.gmra.mrb[0].mxu0 %v2147
        %v2326 = vpop.f32.mrb[0].mxu0
        %v2327 = vadd.f32 %v2194, %v2326
        %v2328 = vpop.f32.mrb[0].mxu0
        %v2329 = vpop.f32.mrb[0].mxu0
        %v2330 = vadd.f32 %v2194, %v2329
        %v2331 = vpop.f32.mrb[0].mxu0
        %2332 = vmatprep.mubr.bf16.mxu0 0
        %2333 = vmatmul.mubr.bf16.gmra.mrb[0].mxu0 %v2148
        %v2334 = vpop.f32.mrb[0].mxu0
        %v2335 = vadd.f32 %v2194, %v2334
        %v2336 = vpop.f32.mrb[0].mxu0
        %v2337 = vpop.f32.mrb[0].mxu0
        %v2338 = vadd.f32 %v2194, %v2337
        %v2339 = vpop.f32.mrb[0].mxu0
        %2340 = vmatprep.mubr.bf16.mxu0 0
        %2341 = vmatmul.mubr.bf16.gmra.mrb[0].mxu0 %v2149
        %v2342 = vpop.f32.mrb[0].mxu0
        %v2343 = vadd.f32 %v2194, %v2342
        %v2344 = vpop.f32.mrb[0].mxu0
        %v2345 = vpop.f32.mrb[0].mxu0
        %v2346 = vadd.f32 %v2194, %v2345
        %v2347 = vpop.f32.mrb[0].mxu0
        %2348 = vmatprep.mubr.bf16.mxu0 0
        %2349 = vmatmul.mubr.bf16.gmra.mrb[0].mxu0 %v2150
        %v2350 = vpop.f32.mrb[0].mxu0
        %v2351 = vadd.f32 %v2194, %v2350
        %v2352 = vpop.f32.mrb[0].mxu0
        %v2353 = vpop.f32.mrb[0].mxu0
        %v2354 = vadd.f32 %v2194, %v2353
        %v2355 = vpop.f32.mrb[0].mxu0
        %2356 = vmatprep.mubr.bf16.mxu0 0
        %2357 = vmatmul.mubr.bf16.gmra.mrb[0].mxu0 %v2151
        %v2358 = vpop.f32.mrb[0].mxu0
        %v2359 = vadd.f32 %v2194, %v2358
        %v2360 = vpop.f32.mrb[0].mxu0
        %v2361 = vpop.f32.mrb[0].mxu0
        %v2362 = vadd.f32 %v2194, %v2361
        %v2363 = vpop.f32.mrb[0].mxu0
        %2364 = vmatprep.mubr.bf16.mxu0 0
        %2365 = vmatmul.mubr.bf16.gmra.mrb[0].mxu0 %v2152
        %v2366 = vpop.f32.mrb[0].mxu0
        %v2367 = vadd.f32 %v2194, %v2366
        %v2368 = vpop.f32.mrb[0].mxu0
        %v2369 = vpop.f32.mrb[0].mxu0
        %v2370 = vadd.f32 %v2194, %v2369
        %v2371 = vpop.f32.mrb[0].mxu0
        %2372 = vmatprep.mubr.bf16.mxu0 0
        %2373 = vmatmul.mubr.bf16.gmra.mrb[0].mxu0 %v2153
        %v2374 = vpop.f32.mrb[0].mxu0
        %v2375 = vadd.f32 %v2194, %v2374
        %v2376 = vpop.f32.mrb[0].mxu0
        %v2377 = vpop.f32.mrb[0].mxu0
        %v2378 = vadd.f32 %v2194, %v2377
        %v2379 = vpop.f32.mrb[0].mxu0
        %2380 = vmatprep.mubr.bf16.mxu0 0
        %2381 = vmatmul.mubr.bf16.gmra.mrb[0].mxu0 %v2154
        %v2382 = vpop.f32.mrb[0].mxu0
        %v2383 = vadd.f32 %v2194, %v2382
        %v2384 = vpop.f32.mrb[0].mxu0
        %v2385 = vpop.f32.mrb[0].mxu0
        %v2386 = vadd.f32 %v2194, %v2385
        %v2387 = vpop.f32.mrb[0].mxu0
        %2388 = vmatprep.mubr.bf16.mxu0 0
        %2389 = vmatmul.mubr.bf16.gmra.mrb[0].mxu0 %v2155
        %v2390 = vpop.f32.mrb[0].mxu0
        %v2391 = vadd.f32 %v2194, %v2390
        %v2392 = vpop.f32.mrb[0].mxu0
        %v2393 = vpop.f32.mrb[0].mxu0
        %v2394 = vadd.f32 %v2194, %v2393
        %v2395 = vpop.f32.mrb[0].mxu0
        %2396 = vmatprep.mubr.bf16.mxu0 0
        %2397 = vmatmul.mubr.bf16.gmra.mrb[0].mxu0 %v2156
        %v2398 = vpop.f32.mrb[0].mxu0
        %v2399 = vadd.f32 %v2194, %v2398
        %v2400 = vpop.f32.mrb[0].mxu0
        %v2401 = vpop.f32.mrb[0].mxu0
        %v2402 = vadd.f32 %v2194, %v2401
        %v2403 = vpop.f32.mrb[0].mxu0
        %2404 = vmatprep.mubr.bf16.mxu0 0
        %2405 = vmatmul.mubr.bf16.gmra.mrb[0].mxu0 %v2157
        %v2406 = vpop.f32.mrb[0].mxu0
        %v2407 = vadd.f32 %v2194, %v2406
        %v2408 = vpop.f32.mrb[0].mxu0
        %v2409 = vpop.f32.mrb[0].mxu0
        %v2410 = vadd.f32 %v2194, %v2409
        %v2411 = vpop.f32.mrb[0].mxu0
        %2412 = vmatprep.mubr.bf16.mxu0 0
        %2413 = vmatmul.mubr.bf16.gmra.mrb[0].mxu0 %v2158
        %v2414 = vpop.f32.mrb[0].mxu0
        %v2415 = vadd.f32 %v2194, %v2414
        %v2416 = vpop.f32.mrb[0].mxu0
        %v2417 = vpop.f32.mrb[0].mxu0
        %v2418 = vadd.f32 %v2194, %v2417
        %v2419 = vpop.f32.mrb[0].mxu0
        %2420 = vmatprep.mubr.bf16.mxu0 0
        %2421 = vmatmul.mubr.bf16.gmra.mrb[0].mxu0 %v2159
        %v2422 = vpop.f32.mrb[0].mxu0
        %v2423 = vadd.f32 %v2194, %v2422
        %v2424 = vpop.f32.mrb[0].mxu0
        %v2425 = vpop.f32.mrb[0].mxu0
        %v2426 = vadd.f32 %v2194, %v2425
        %v2427 = vpop.f32.mrb[0].mxu0
        %2428 = vmatprep.mubr.bf16.mxu0 0
        %2429 = vmatmul.mubr.bf16.gmra.mrb[0].mxu0 %v2160
        %v2430 = vpop.f32.mrb[0].mxu0
        %v2431 = vadd.f32 %v2194, %v2430
        %v2432 = vpop.f32.mrb[0].mxu0
        %v2433 = vpop.f32.mrb[0].mxu0
        %v2434 = vadd.f32 %v2194, %v2433
        %v2435 = vpop.f32.mrb[0].mxu0
        %2436 = vmatprep.mubr.bf16.mxu0 0
        %2437 = vmatmul.mubr.bf16.gmra.mrb[0].mxu0 %v2161
        %v2438 = vpop.f32.mrb[0].mxu0
        %v2439 = vadd.f32 %v2194, %v2438
        %v2440 = vpop.f32.mrb[0].mxu0
        %v2441 = vpop.f32.mrb[0].mxu0
        %v2442 = vadd.f32 %v2194, %v2441
        %v2443 = vpop.f32.mrb[0].mxu0
        %2444 = vmatprep.mubr.bf16.mxu0 0
        %2445 = vmatmul.mubr.bf16.gmra.mrb[0].mxu0 %v2162
        %v2446 = vpop.f32.mrb[0].mxu0
        %v2447 = vadd.f32 %v2194, %v2446
        %v2448 = vpop.f32.mrb[0].mxu0
        %v2449 = vpop.f32.mrb[0].mxu0
        %v2450 = vadd.f32 %v2194, %v2449
        %v2451 = vpop.f32.mrb[0].mxu0
        %2452 = vmatprep.mubr.bf16.mxu0 0
        %2453 = vmatmul.mubr.bf16.gmra.mrb[0].mxu0 %v2163
        %v2454 = vpop.f32.mrb[0].mxu0
        %v2455 = vadd.f32 %v2194, %v2454
        %v2456 = vpop.f32.mrb[0].mxu0
        %v2457 = vpop.f32.mrb[0].mxu0
        %v2458 = vadd.f32 %v2194, %v2457
        %v2459 = vpop.f32.mrb[0].mxu0
        %2460 = vmatprep.mubr.bf16.mxu0 0
        %2461 = vmatmul.mubr.bf16.gmra.mrb[0].mxu0 %v2164
        %v2462 = vpop.f32.mrb[0].mxu0
        %v2463 = vadd.f32 %v2194, %v2462
        %v2464 = vpop.f32.mrb[0].mxu0
        %v2465 = vpop.f32.mrb[0].mxu0
        %v2466 = vadd.f32 %v2194, %v2465
        %v2467 = vpop.f32.mrb[0].mxu0
        %2468 = vmatprep.mubr.bf16.mxu0 0
        %2469 = vmatmul.mubr.bf16.gmra.mrb[0].mxu0 %v2165
        %v2470 = vpop.f32.mrb[0].mxu0
        %v2471 = vadd.f32 %v2194, %v2470
        %v2472 = vpop.f32.mrb[0].mxu0
        %v2473 = vpop.f32.mrb[0].mxu0
        %v2474 = vadd.f32 %v2194, %v2473
        %v2475 = vpop.f32.mrb[0].mxu0
        %2476 = vmatprep.mubr.bf16.mxu0 0
        %2477 = vmatmul.mubr.bf16.gmra.mrb[0].mxu0 %v2166
        %v2478 = vpop.f32.mrb[0].mxu0
        %v2479 = vadd.f32 %v2194, %v2478
        %v2480 = vpop.f32.mrb[0].mxu0
        %v2481 = vpop.f32.mrb[0].mxu0
        %v2482 = vadd.f32 %v2194, %v2481
        %v2483 = vpop.f32.mrb[0].mxu0
        %2484 = vmatprep.mubr.bf16.mxu0 0
        %2485 = vmatmul.mubr.bf16.gmra.mrb[0].mxu0 %v2167
        %v2486 = vpop.f32.mrb[0].mxu0
        %v2487 = vadd.f32 %v2194, %v2486
        %v2488 = vpop.f32.mrb[0].mxu0
        %v2489 = vpop.f32.mrb[0].mxu0
        %v2490 = vadd.f32 %v2194, %v2489
        %v2491 = vpop.f32.mrb[0].mxu0
        %2492 = vmatprep.mubr.bf16.mxu0 0
        %2493 = vmatmul.mubr.bf16.gmra.mrb[0].mxu0 %v2168
        %v2494 = vpop.f32.mrb[0].mxu0
        %v2495 = vadd.f32 %v2194, %v2494
        %v2496 = vpop.f32.mrb[0].mxu0
        %v2497 = vpop.f32.mrb[0].mxu0
        %v2498 = vadd.f32 %v2194, %v2497
        %v2499 = vpop.f32.mrb[0].mxu0
        %2500 = vmatprep.mubr.bf16.mxu0 0
        %2501 = vmatmul.mubr.bf16.gmra.mrb[0].mxu0 %v2169
        %v2502 = vpop.f32.mrb[0].mxu0
        %v2503 = vadd.f32 %v2194, %v2502
        %v2504 = vpop.f32.mrb[0].mxu0
        %v2505 = vpop.f32.mrb[0].mxu0
        %v2506 = vadd.f32 %v2194, %v2505
        %v2507 = vpop.f32.mrb[0].mxu0
        %2508 = vmatprep.mubr.bf16.mxu0 0
        %2509 = vmatmul.mubr.bf16.gmra.mrb[0].mxu0 %v2170
        %v2510 = vpop.f32.mrb[0].mxu0
        %v2511 = vadd.f32 %v2194, %v2510
        %v2512 = vpop.f32.mrb[0].mxu0
        %v2513 = vpop.f32.mrb[0].mxu0
        %v2514 = vadd.f32 %v2194, %v2513
        %v2515 = vpop.f32.mrb[0].mxu0
        %2516 = vmatprep.mubr.bf16.mxu0 0
        %2517 = vmatmul.mubr.bf16.gmra.mrb[0].mxu0 %v2171
        %v2518 = vpop.f32.mrb[0].mxu0
        %v2519 = vadd.f32 %v2194, %v2518
        %v2520 = vpop.f32.mrb[0].mxu0
        %v2521 = vpop.f32.mrb[0].mxu0
        %v2522 = vadd.f32 %v2194, %v2521
        %v2523 = vpop.f32.mrb[0].mxu0
        %2524 = vmatprep.mubr.bf16.mxu0 0
        %2525 = vmatmul.mubr.bf16.gmra.mrb[0].mxu0 %v2172
        %v2526 = vpop.f32.mrb[0].mxu0
        %v2527 = vadd.f32 %v2194, %v2526
        %v2528 = vpop.f32.mrb[0].mxu0
        %v2529 = vpop.f32.mrb[0].mxu0
        %v2530 = vadd.f32 %v2194, %v2529
        %v2531 = vpop.f32.mrb[0].mxu0
        %2532 = vdwg.mxu0
        %v2533 = vld [vmem:[%s460] sm:$0xf]
        %v2534 = vld [vmem:[%s460 + $0x4] sm:$0xf]
        %v2535 = vld [vmem:[%s460 + $0x8] sm:$0xf]
        %v2536 = vld [vmem:[%s460 + $0xc] sm:$0xf]
        %v2537 = vld [vmem:[%s460 + $0x10] sm:$0xf]
        %v2538 = vld [vmem:[%s460 + $0x14] sm:$0xf]
        %v2539 = vld [vmem:[%s460 + $0x18] sm:$0xf]
        %v2540 = vld [vmem:[%s460 + $0x1c] sm:$0xf]
        %v2541 = vld [vmem:[%s460 + $0x20] sm:$0xf]
        %v2542 = vld [vmem:[%s460 + $0x24] sm:$0xf]
        %v2543 = vld [vmem:[%s460 + $0x28] sm:$0xf]
        %v2544 = vld [vmem:[%s460 + $0x2c] sm:$0xf]
        %v2545 = vld [vmem:[%s460 + $0x30] sm:$0xf]
        %v2546 = vld [vmem:[%s460 + $0x34] sm:$0xf]
        %v2547 = vld [vmem:[%s460 + $0x38] sm:$0xf]
        %v2548 = vld [vmem:[%s460 + $0x3c] sm:$0xf]
        %v2549 = vld [vmem:[%s460 + $0x40] sm:$0xf]
        %v2550 = vld [vmem:[%s460 + $0x44] sm:$0xf]
        %v2551 = vld [vmem:[%s460 + $0x48] sm:$0xf]
        %v2552 = vld [vmem:[%s460 + $0x4c] sm:$0xf]
        %v2553 = vld [vmem:[%s460 + $0x50] sm:$0xf]
        %v2554 = vld [vmem:[%s460 + $0x54] sm:$0xf]
        %v2555 = vld [vmem:[%s460 + $0x58] sm:$0xf]
        %v2556 = vld [vmem:[%s460 + $0x5c] sm:$0xf]
        %v2557 = vld [vmem:[%s460 + $0x60] sm:$0xf]
        %v2558 = vld [vmem:[%s460 + $0x64] sm:$0xf]
        %v2559 = vld [vmem:[%s460 + $0x68] sm:$0xf]
        %v2560 = vld [vmem:[%s460 + $0x6c] sm:$0xf]
        %v2561 = vld [vmem:[%s460 + $0x70] sm:$0xf]
        %v2562 = vld [vmem:[%s460 + $0x74] sm:$0xf]
        %v2563 = vld [vmem:[%s460 + $0x78] sm:$0xf]
        %v2564 = vld [vmem:[%s460 + $0x7c] sm:$0xf]
        %v2565 = vld [vmem:[%s460 + $0x80] sm:$0xf]
        %v2566 = vld [vmem:[%s460 + $0x84] sm:$0xf]
        %v2567 = vld [vmem:[%s460 + $0x88] sm:$0xf]
        %v2568 = vld [vmem:[%s460 + $0x8c] sm:$0xf]
        %v2569 = vld [vmem:[%s460 + $0x90] sm:$0xf]
        %v2570 = vld [vmem:[%s460 + $0x94] sm:$0xf]
        %v2571 = vld [vmem:[%s460 + $0x98] sm:$0xf]
        %v2572 = vld [vmem:[%s460 + $0x9c] sm:$0xf]
        %v2573 = vld [vmem:[%s460 + $0xa0] sm:$0xf]
        %v2574 = vld [vmem:[%s460 + $0xa4] sm:$0xf]
        %v2575 = vld [vmem:[%s460 + $0xa8] sm:$0xf]
        %v2576 = vld [vmem:[%s460 + $0xac] sm:$0xf]
        %v2577 = vld [vmem:[%s460 + $0xb0] sm:$0xf]
        %v2578 = vld [vmem:[%s460 + $0xb4] sm:$0xf]
        %v2579 = vld [vmem:[%s460 + $0xb8] sm:$0xf]
        %v2580 = vld [vmem:[%s460 + $0xbc] sm:$0xf]
        %v2581 = vld [vmem:[%s460 + $0xc0] sm:$0xf]
        %v2582 = vld [vmem:[%s460 + $0xc4] sm:$0xf]
        %v2583 = vld [vmem:[%s460 + $0xc8] sm:$0xf]
        %v2584 = vld [vmem:[%s460 + $0xcc] sm:$0xf]
        %v2585 = vld [vmem:[%s460 + $0xd0] sm:$0xf]
        %v2586 = vld [vmem:[%s460 + $0xd4] sm:$0xf]
        %v2587 = vld [vmem:[%s460 + $0xd8] sm:$0xf]
        %v2588 = vld [vmem:[%s460 + $0xdc] sm:$0xf]
        %v2589 = vld [vmem:[%s460 + $0xe0] sm:$0xf]
        %v2590 = vld [vmem:[%s460 + $0xe4] sm:$0xf]
        %v2591 = vld [vmem:[%s460 + $0xe8] sm:$0xf]
        %v2592 = vld [vmem:[%s460 + $0xec] sm:$0xf]
        %v2593 = vld [vmem:[%s460 + $0xf0] sm:$0xf]
        %v2594 = vld [vmem:[%s460 + $0xf4] sm:$0xf]
        %v2595 = vld [vmem:[%s460 + $0xf8] sm:$0xf]
        %v2596 = vld [vmem:[%s460 + $0xfc] sm:$0xf]
        %v2597 = vld [vmem:[%s9] sm:$0xf]
        %v2598 = vld [vmem:[%s9 + $0x4] sm:$0xf]
        %v2599 = vld [vmem:[%s9 + $0x8] sm:$0xf]
        %v2600 = vld [vmem:[%s9 + $0xc] sm:$0xf]
        %v2601 = vld [vmem:[%s9 + $0x10] sm:$0xf]
        %v2602 = vld [vmem:[%s9 + $0x14] sm:$0xf]
        %v2603 = vld [vmem:[%s9 + $0x18] sm:$0xf]
        %v2604 = vld [vmem:[%s9 + $0x1c] sm:$0xf]
        %v2605 = vld [vmem:[%s9 + $0x20] sm:$0xf]
        %v2606 = vld [vmem:[%s9 + $0x24] sm:$0xf]
        %v2607 = vld [vmem:[%s9 + $0x28] sm:$0xf]
        %v2608 = vld [vmem:[%s9 + $0x2c] sm:$0xf]
        %v2609 = vld [vmem:[%s9 + $0x30] sm:$0xf]
        %v2610 = vld [vmem:[%s9 + $0x34] sm:$0xf]
        %v2611 = vld [vmem:[%s9 + $0x38] sm:$0xf]
        %v2612 = vld [vmem:[%s9 + $0x3c] sm:$0xf]
        %v2613 = vld [vmem:[%s10] sm:$0x1]
        %v2615 = vlaneseq
        %v2616 = vshrl.u32 %v2615, 7
        %v2617 = vsub.s32 0, %v2616
        %v2618 = vrot.slane %v2613, %v2617
        %v2684 = vunpack.c.l.b16 %v2533
        %v2685 = vunpack.c.l.b16 %v2534
        %v2686 = vunpack.c.l.b16 %v2535
        %v2687 = vunpack.c.l.b16 %v2536
        %v2688 = vunpack.c.l.b16 %v2537
        %v2689 = vunpack.c.l.b16 %v2538
        %v2690 = vunpack.c.l.b16 %v2539
        %v2691 = vunpack.c.l.b16 %v2540
        %v2692 = vunpack.c.l.b16 %v2541
        %v2693 = vunpack.c.l.b16 %v2542
        %v2694 = vunpack.c.l.b16 %v2543
        %v2695 = vunpack.c.l.b16 %v2544
        %v2696 = vunpack.c.l.b16 %v2545
        %v2697 = vunpack.c.l.b16 %v2546
        %v2698 = vunpack.c.l.b16 %v2547
        %v2699 = vunpack.c.l.b16 %v2548
        %v2700 = vunpack.c.l.b16 %v2549
        %v2701 = vunpack.c.l.b16 %v2550
        %v2702 = vunpack.c.l.b16 %v2551
        %v2703 = vunpack.c.l.b16 %v2552
        %v2704 = vunpack.c.l.b16 %v2553
        %v2705 = vunpack.c.l.b16 %v2554
        %v2706 = vunpack.c.l.b16 %v2555
        %v2707 = vunpack.c.l.b16 %v2556
        %v2708 = vunpack.c.l.b16 %v2557
        %v2709 = vunpack.c.l.b16 %v2558
        %v2710 = vunpack.c.l.b16 %v2559
        %v2711 = vunpack.c.l.b16 %v2560
        %v2712 = vunpack.c.l.b16 %v2561
        %v2713 = vunpack.c.l.b16 %v2562
        %v2714 = vunpack.c.l.b16 %v2563
        %v2715 = vunpack.c.l.b16 %v2564
        %v2716 = vunpack.c.l.b16 %v2565
        %v2717 = vunpack.c.l.b16 %v2566
        %v2718 = vunpack.c.l.b16 %v2567
        %v2719 = vunpack.c.l.b16 %v2568
        %v2720 = vunpack.c.l.b16 %v2569
        %v2721 = vunpack.c.l.b16 %v2570
        %v2722 = vunpack.c.l.b16 %v2571
        %v2723 = vunpack.c.l.b16 %v2572
        %v2724 = vunpack.c.l.b16 %v2573
        %v2725 = vunpack.c.l.b16 %v2574
        %v2726 = vunpack.c.l.b16 %v2575
        %v2727 = vunpack.c.l.b16 %v2576
        %v2728 = vunpack.c.l.b16 %v2577
        %v2729 = vunpack.c.l.b16 %v2578
        %v2730 = vunpack.c.l.b16 %v2579
        %v2731 = vunpack.c.l.b16 %v2580
        %v2732 = vunpack.c.l.b16 %v2581
        %v2733 = vunpack.c.l.b16 %v2582
        %v2734 = vunpack.c.l.b16 %v2583
        %v2735 = vunpack.c.l.b16 %v2584
        %v2736 = vunpack.c.l.b16 %v2585
        %v2737 = vunpack.c.l.b16 %v2586
        %v2738 = vunpack.c.l.b16 %v2587
        %v2739 = vunpack.c.l.b16 %v2588
        %v2740 = vunpack.c.l.b16 %v2589
        %v2741 = vunpack.c.l.b16 %v2590
        %v2742 = vunpack.c.l.b16 %v2591
        %v2743 = vunpack.c.l.b16 %v2592
        %v2744 = vunpack.c.l.b16 %v2593
        %v2745 = vunpack.c.l.b16 %v2594
        %v2746 = vunpack.c.l.b16 %v2595
        %v2747 = vunpack.c.l.b16 %v2596
        %v2748 = vpack.c.b16 %v2685, %v2684
        %v2749 = vpack.c.b16 %v2687, %v2686
        %v2750 = vpack.c.b16 %v2689, %v2688
        %v2751 = vpack.c.b16 %v2691, %v2690
        %v2752 = vpack.c.b16 %v2693, %v2692
        %v2753 = vpack.c.b16 %v2695, %v2694
        %v2754 = vpack.c.b16 %v2697, %v2696
        %v2755 = vpack.c.b16 %v2699, %v2698
        %v2756 = vpack.c.b16 %v2701, %v2700
        %v2757 = vpack.c.b16 %v2703, %v2702
        %v2758 = vpack.c.b16 %v2705, %v2704
        %v2759 = vpack.c.b16 %v2707, %v2706
        %v2760 = vpack.c.b16 %v2709, %v2708
        %v2761 = vpack.c.b16 %v2711, %v2710
        %v2762 = vpack.c.b16 %v2713, %v2712
        %v2763 = vpack.c.b16 %v2715, %v2714
        %v2764 = vpack.c.b16 %v2717, %v2716
        %v2765 = vpack.c.b16 %v2719, %v2718
        %v2766 = vpack.c.b16 %v2721, %v2720
        %v2767 = vpack.c.b16 %v2723, %v2722
        %v2768 = vpack.c.b16 %v2725, %v2724
        %v2769 = vpack.c.b16 %v2727, %v2726
        %v2770 = vpack.c.b16 %v2729, %v2728
        %v2771 = vpack.c.b16 %v2731, %v2730
        %v2772 = vpack.c.b16 %v2733, %v2732
        %v2773 = vpack.c.b16 %v2735, %v2734
        %v2774 = vpack.c.b16 %v2737, %v2736
        %v2775 = vpack.c.b16 %v2739, %v2738
        %v2776 = vpack.c.b16 %v2741, %v2740
        %v2777 = vpack.c.b16 %v2743, %v2742
        %v2778 = vpack.c.b16 %v2745, %v2744
        %v2779 = vpack.c.b16 %v2747, %v2746
        %v2828 = vunpack.c.l.b16 %v2597
        %v2829 = vunpack.c.l.b16 %v2598
        %v2830 = vunpack.c.l.b16 %v2599
        %v2831 = vunpack.c.l.b16 %v2600
        %v2832 = vunpack.c.l.b16 %v2601
        %v2833 = vunpack.c.l.b16 %v2602
        %v2834 = vunpack.c.l.b16 %v2603
        %v2835 = vunpack.c.l.b16 %v2604
        %v2836 = vunpack.c.l.b16 %v2605
        %v2837 = vunpack.c.l.b16 %v2606
        %v2838 = vunpack.c.l.b16 %v2607
        %v2839 = vunpack.c.l.b16 %v2608
        %v2840 = vunpack.c.l.b16 %v2609
        %v2841 = vunpack.c.l.b16 %v2610
        %v2842 = vunpack.c.l.b16 %v2611
        %v2843 = vunpack.c.l.b16 %v2612
        %v2844 = vpack.c.b16 %v2829, %v2828
        %v2845 = vpack.c.b16 %v2831, %v2830
        %v2846 = vpack.c.b16 %v2833, %v2832
        %v2847 = vpack.c.b16 %v2835, %v2834
        %v2848 = vpack.c.b16 %v2837, %v2836
        %v2849 = vpack.c.b16 %v2839, %v2838
        %v2850 = vpack.c.b16 %v2841, %v2840
        %v2851 = vpack.c.b16 %v2843, %v2842
        %2860 = vmatprep.subr.bf16.mxu0 0
        %2861 = vmatpush1.bf16.msra.mxu0 %v2844
        %2862 = vmatprep.subr.bf16.mxu0 0
        %2863 = vmatpush1.bf16.msra.mxu0 %v2845
        %2864 = vmatprep.subr.bf16.mxu0 0
        %2865 = vmatpush1.bf16.msra.mxu0 %v2846
        %2866 = vmatprep.subr.bf16.mxu0 0
        %2867 = vmatpush1.bf16.msra.mxu0 %v2847
        %2868 = vmatprep.subr.bf16.mxu0 0
        %2869 = vmatpush1.bf16.msra.mxu0 %v2848
        %2870 = vmatprep.subr.bf16.mxu0 0
        %2871 = vmatpush1.bf16.msra.mxu0 %v2849
        %2872 = vmatprep.subr.bf16.mxu0 0
        %2873 = vmatpush1.bf16.msra.mxu0 %v2850
        %2874 = vmatprep.subr.bf16.mxu0 0
        %2875 = vmatpush1.bf16.msra.mxu0 %v2851
        %2876 = vmatprep.subr.bf16.mxu0 0
        %2877 = vmatpush1.bf16.msra.mxu0 0
        %2878 = vmatprep.subr.bf16.mxu0 0
        %2879 = vmatpush1.bf16.msra.mxu0 0
        %2880 = vmatprep.subr.bf16.mxu0 0
        %2881 = vmatpush1.bf16.msra.mxu0 0
        %2882 = vmatprep.subr.bf16.mxu0 0
        %2883 = vmatpush1.bf16.msra.mxu0 0
        %2884 = vmatprep.subr.bf16.mxu0 0
        %2885 = vmatpush1.bf16.msra.mxu0 0
        %2886 = vmatprep.subr.bf16.mxu0 0
        %2887 = vmatpush1.bf16.msra.mxu0 0
        %2888 = vmatprep.subr.bf16.mxu0 0
        %2889 = vmatpush1.bf16.msra.mxu0 0
        %2890 = vmatprep.subr.bf16.mxu0 0
        %2891 = vmatpush1.bf16.msra.mxu0 0
        %2892 = vmatprep.mubr.bf16.mxu0 0
        %2893 = vmatmul.mubr.bf16.gmra.mrb[0].mxu0 %v2748
        %v2894 = vpop.f32.mrb[0].mxu0
        %v2895 = vadd.f32 %v2618, %v2894
        %v2896 = vpop.f32.mrb[0].mxu0
        %v2897 = vpop.f32.mrb[0].mxu0
        %v2898 = vadd.f32 %v2618, %v2897
        %v2899 = vpop.f32.mrb[0].mxu0
        %2900 = vmatprep.mubr.bf16.mxu0 0
        %2901 = vmatmul.mubr.bf16.gmra.mrb[0].mxu0 %v2749
        %v2902 = vpop.f32.mrb[0].mxu0
        %v2903 = vadd.f32 %v2618, %v2902
        %v2904 = vpop.f32.mrb[0].mxu0
        %v2905 = vpop.f32.mrb[0].mxu0
        %v2906 = vadd.f32 %v2618, %v2905
        %v2907 = vpop.f32.mrb[0].mxu0
        %2908 = vmatprep.mubr.bf16.mxu0 0
        %2909 = vmatmul.mubr.bf16.gmra.mrb[0].mxu0 %v2750
        %v2910 = vpop.f32.mrb[0].mxu0
        %v2911 = vadd.f32 %v2618, %v2910
        %v2912 = vpop.f32.mrb[0].mxu0
        %v2913 = vpop.f32.mrb[0].mxu0
        %v2914 = vadd.f32 %v2618, %v2913
        %v2915 = vpop.f32.mrb[0].mxu0
        %2916 = vmatprep.mubr.bf16.mxu0 0
        %2917 = vmatmul.mubr.bf16.gmra.mrb[0].mxu0 %v2751
        %v2918 = vpop.f32.mrb[0].mxu0
        %v2919 = vadd.f32 %v2618, %v2918
        %v2920 = vpop.f32.mrb[0].mxu0
        %v2921 = vpop.f32.mrb[0].mxu0
        %v2922 = vadd.f32 %v2618, %v2921
        %v2923 = vpop.f32.mrb[0].mxu0
        %2924 = vmatprep.mubr.bf16.mxu0 0
        %2925 = vmatmul.mubr.bf16.gmra.mrb[0].mxu0 %v2752
        %v2926 = vpop.f32.mrb[0].mxu0
        %v2927 = vadd.f32 %v2618, %v2926
        %v2928 = vpop.f32.mrb[0].mxu0
        %v2929 = vpop.f32.mrb[0].mxu0
        %v2930 = vadd.f32 %v2618, %v2929
        %v2931 = vpop.f32.mrb[0].mxu0
        %2932 = vmatprep.mubr.bf16.mxu0 0
        %2933 = vmatmul.mubr.bf16.gmra.mrb[0].mxu0 %v2753
        %v2934 = vpop.f32.mrb[0].mxu0
        %v2935 = vadd.f32 %v2618, %v2934
        %v2936 = vpop.f32.mrb[0].mxu0
        %v2937 = vpop.f32.mrb[0].mxu0
        %v2938 = vadd.f32 %v2618, %v2937
        %v2939 = vpop.f32.mrb[0].mxu0
        %2940 = vmatprep.mubr.bf16.mxu0 0
        %2941 = vmatmul.mubr.bf16.gmra.mrb[0].mxu0 %v2754
        %v2942 = vpop.f32.mrb[0].mxu0
        %v2943 = vadd.f32 %v2618, %v2942
        %v2944 = vpop.f32.mrb[0].mxu0
        %v2945 = vpop.f32.mrb[0].mxu0
        %v2946 = vadd.f32 %v2618, %v2945
        %v2947 = vpop.f32.mrb[0].mxu0
        %2948 = vmatprep.mubr.bf16.mxu0 0
        %2949 = vmatmul.mubr.bf16.gmra.mrb[0].mxu0 %v2755
        %v2950 = vpop.f32.mrb[0].mxu0
        %v2951 = vadd.f32 %v2618, %v2950
        %v2952 = vpop.f32.mrb[0].mxu0
        %v2953 = vpop.f32.mrb[0].mxu0
        %v2954 = vadd.f32 %v2618, %v2953
        %v2955 = vpop.f32.mrb[0].mxu0
        %2956 = vmatprep.mubr.bf16.mxu0 0
        %2957 = vmatmul.mubr.bf16.gmra.mrb[0].mxu0 %v2756
        %v2958 = vpop.f32.mrb[0].mxu0
        %v2959 = vadd.f32 %v2618, %v2958
        %v2960 = vpop.f32.mrb[0].mxu0
        %v2961 = vpop.f32.mrb[0].mxu0
        %v2962 = vadd.f32 %v2618, %v2961
        %v2963 = vpop.f32.mrb[0].mxu0
        %2964 = vmatprep.mubr.bf16.mxu0 0
        %2965 = vmatmul.mubr.bf16.gmra.mrb[0].mxu0 %v2757
        %v2966 = vpop.f32.mrb[0].mxu0
        %v2967 = vadd.f32 %v2618, %v2966
        %v2968 = vpop.f32.mrb[0].mxu0
        %v2969 = vpop.f32.mrb[0].mxu0
        %v2970 = vadd.f32 %v2618, %v2969
        %v2971 = vpop.f32.mrb[0].mxu0
        %2972 = vmatprep.mubr.bf16.mxu0 0
        %2973 = vmatmul.mubr.bf16.gmra.mrb[0].mxu0 %v2758
        %v2974 = vpop.f32.mrb[0].mxu0
        %v2975 = vadd.f32 %v2618, %v2974
        %v2976 = vpop.f32.mrb[0].mxu0
        %v2977 = vpop.f32.mrb[0].mxu0
        %v2978 = vadd.f32 %v2618, %v2977
        %v2979 = vpop.f32.mrb[0].mxu0
        %2980 = vmatprep.mubr.bf16.mxu0 0
        %2981 = vmatmul.mubr.bf16.gmra.mrb[0].mxu0 %v2759
        %v2982 = vpop.f32.mrb[0].mxu0
        %v2983 = vadd.f32 %v2618, %v2982
        %v2984 = vpop.f32.mrb[0].mxu0
        %v2985 = vpop.f32.mrb[0].mxu0
        %v2986 = vadd.f32 %v2618, %v2985
        %v2987 = vpop.f32.mrb[0].mxu0
        %2988 = vmatprep.mubr.bf16.mxu0 0
        %2989 = vmatmul.mubr.bf16.gmra.mrb[0].mxu0 %v2760
        %v2990 = vpop.f32.mrb[0].mxu0
        %v2991 = vadd.f32 %v2618, %v2990
        %v2992 = vpop.f32.mrb[0].mxu0
        %v2993 = vpop.f32.mrb[0].mxu0
        %v2994 = vadd.f32 %v2618, %v2993
        %v2995 = vpop.f32.mrb[0].mxu0
        %2996 = vmatprep.mubr.bf16.mxu0 0
        %2997 = vmatmul.mubr.bf16.gmra.mrb[0].mxu0 %v2761
        %v2998 = vpop.f32.mrb[0].mxu0
        %v2999 = vadd.f32 %v2618, %v2998
        %v3000 = vpop.f32.mrb[0].mxu0
        %v3001 = vpop.f32.mrb[0].mxu0
        %v3002 = vadd.f32 %v2618, %v3001
        %v3003 = vpop.f32.mrb[0].mxu0
        %3004 = vmatprep.mubr.bf16.mxu0 0
        %3005 = vmatmul.mubr.bf16.gmra.mrb[0].mxu0 %v2762
        %v3006 = vpop.f32.mrb[0].mxu0
        %v3007 = vadd.f32 %v2618, %v3006
        %v3008 = vpop.f32.mrb[0].mxu0
        %v3009 = vpop.f32.mrb[0].mxu0
        %v3010 = vadd.f32 %v2618, %v3009
        %v3011 = vpop.f32.mrb[0].mxu0
        %3012 = vmatprep.mubr.bf16.mxu0 0
        %3013 = vmatmul.mubr.bf16.gmra.mrb[0].mxu0 %v2763
        %v3014 = vpop.f32.mrb[0].mxu0
        %v3015 = vadd.f32 %v2618, %v3014
        %v3016 = vpop.f32.mrb[0].mxu0
        %v3017 = vpop.f32.mrb[0].mxu0
        %v3018 = vadd.f32 %v2618, %v3017
        %v3019 = vpop.f32.mrb[0].mxu0
        %3020 = vmatprep.mubr.bf16.mxu0 0
        %3021 = vmatmul.mubr.bf16.gmra.mrb[0].mxu0 %v2764
        %v3022 = vpop.f32.mrb[0].mxu0
        %v3023 = vadd.f32 %v2618, %v3022
        %v3024 = vpop.f32.mrb[0].mxu0
        %v3025 = vpop.f32.mrb[0].mxu0
        %v3026 = vadd.f32 %v2618, %v3025
        %v3027 = vpop.f32.mrb[0].mxu0
        %3028 = vmatprep.mubr.bf16.mxu0 0
        %3029 = vmatmul.mubr.bf16.gmra.mrb[0].mxu0 %v2765
        %v3030 = vpop.f32.mrb[0].mxu0
        %v3031 = vadd.f32 %v2618, %v3030
        %v3032 = vpop.f32.mrb[0].mxu0
        %v3033 = vpop.f32.mrb[0].mxu0
        %v3034 = vadd.f32 %v2618, %v3033
        %v3035 = vpop.f32.mrb[0].mxu0
        %3036 = vmatprep.mubr.bf16.mxu0 0
        %3037 = vmatmul.mubr.bf16.gmra.mrb[0].mxu0 %v2766
        %v3038 = vpop.f32.mrb[0].mxu0
        %v3039 = vadd.f32 %v2618, %v3038
        %v3040 = vpop.f32.mrb[0].mxu0
        %v3041 = vpop.f32.mrb[0].mxu0
        %v3042 = vadd.f32 %v2618, %v3041
        %v3043 = vpop.f32.mrb[0].mxu0
        %3044 = vmatprep.mubr.bf16.mxu0 0
        %3045 = vmatmul.mubr.bf16.gmra.mrb[0].mxu0 %v2767
        %v3046 = vpop.f32.mrb[0].mxu0
        %v3047 = vadd.f32 %v2618, %v3046
        %v3048 = vpop.f32.mrb[0].mxu0
        %v3049 = vpop.f32.mrb[0].mxu0
        %v3050 = vadd.f32 %v2618, %v3049
        %v3051 = vpop.f32.mrb[0].mxu0
        %3052 = vmatprep.mubr.bf16.mxu0 0
        %3053 = vmatmul.mubr.bf16.gmra.mrb[0].mxu0 %v2768
        %v3054 = vpop.f32.mrb[0].mxu0
        %v3055 = vadd.f32 %v2618, %v3054
        %v3056 = vpop.f32.mrb[0].mxu0
        %v3057 = vpop.f32.mrb[0].mxu0
        %v3058 = vadd.f32 %v2618, %v3057
        %v3059 = vpop.f32.mrb[0].mxu0
        %3060 = vmatprep.mubr.bf16.mxu0 0
        %3061 = vmatmul.mubr.bf16.gmra.mrb[0].mxu0 %v2769
        %v3062 = vpop.f32.mrb[0].mxu0
        %v3063 = vadd.f32 %v2618, %v3062
        %v3064 = vpop.f32.mrb[0].mxu0
        %v3065 = vpop.f32.mrb[0].mxu0
        %v3066 = vadd.f32 %v2618, %v3065
        %v3067 = vpop.f32.mrb[0].mxu0
        %3068 = vmatprep.mubr.bf16.mxu0 0
        %3069 = vmatmul.mubr.bf16.gmra.mrb[0].mxu0 %v2770
        %v3070 = vpop.f32.mrb[0].mxu0
        %v3071 = vadd.f32 %v2618, %v3070
        %v3072 = vpop.f32.mrb[0].mxu0
        %v3073 = vpop.f32.mrb[0].mxu0
        %v3074 = vadd.f32 %v2618, %v3073
        %v3075 = vpop.f32.mrb[0].mxu0
        %3076 = vmatprep.mubr.bf16.mxu0 0
        %3077 = vmatmul.mubr.bf16.gmra.mrb[0].mxu0 %v2771
        %v3078 = vpop.f32.mrb[0].mxu0
        %v3079 = vadd.f32 %v2618, %v3078
        %v3080 = vpop.f32.mrb[0].mxu0
        %v3081 = vpop.f32.mrb[0].mxu0
        %v3082 = vadd.f32 %v2618, %v3081
        %v3083 = vpop.f32.mrb[0].mxu0
        %3084 = vmatprep.mubr.bf16.mxu0 0
        %3085 = vmatmul.mubr.bf16.gmra.mrb[0].mxu0 %v2772
        %v3086 = vpop.f32.mrb[0].mxu0
        %v3087 = vadd.f32 %v2618, %v3086
        %v3088 = vpop.f32.mrb[0].mxu0
        %v3089 = vpop.f32.mrb[0].mxu0
        %v3090 = vadd.f32 %v2618, %v3089
        %v3091 = vpop.f32.mrb[0].mxu0
        %3092 = vmatprep.mubr.bf16.mxu0 0
        %3093 = vmatmul.mubr.bf16.gmra.mrb[0].mxu0 %v2773
        %v3094 = vpop.f32.mrb[0].mxu0
        %v3095 = vadd.f32 %v2618, %v3094
        %v3096 = vpop.f32.mrb[0].mxu0
        %v3097 = vpop.f32.mrb[0].mxu0
        %v3098 = vadd.f32 %v2618, %v3097
        %v3099 = vpop.f32.mrb[0].mxu0
        %3100 = vmatprep.mubr.bf16.mxu0 0
        %3101 = vmatmul.mubr.bf16.gmra.mrb[0].mxu0 %v2774
        %v3102 = vpop.f32.mrb[0].mxu0
        %v3103 = vadd.f32 %v2618, %v3102
        %v3104 = vpop.f32.mrb[0].mxu0
        %v3105 = vpop.f32.mrb[0].mxu0
        %v3106 = vadd.f32 %v2618, %v3105
        %v3107 = vpop.f32.mrb[0].mxu0
        %3108 = vmatprep.mubr.bf16.mxu0 0
        %3109 = vmatmul.mubr.bf16.gmra.mrb[0].mxu0 %v2775
        %v3110 = vpop.f32.mrb[0].mxu0
        %v3111 = vadd.f32 %v2618, %v3110
        %v3112 = vpop.f32.mrb[0].mxu0
        %v3113 = vpop.f32.mrb[0].mxu0
        %v3114 = vadd.f32 %v2618, %v3113
        %v3115 = vpop.f32.mrb[0].mxu0
        %3116 = vmatprep.mubr.bf16.mxu0 0
        %3117 = vmatmul.mubr.bf16.gmra.mrb[0].mxu0 %v2776
        %v3118 = vpop.f32.mrb[0].mxu0
        %v3119 = vadd.f32 %v2618, %v3118
        %v3120 = vpop.f32.mrb[0].mxu0
        %v3121 = vpop.f32.mrb[0].mxu0
        %v3122 = vadd.f32 %v2618, %v3121
        %v3123 = vpop.f32.mrb[0].mxu0
        %3124 = vmatprep.mubr.bf16.mxu0 0
        %3125 = vmatmul.mubr.bf16.gmra.mrb[0].mxu0 %v2777
        %v3126 = vpop.f32.mrb[0].mxu0
        %v3127 = vadd.f32 %v2618, %v3126
        %v3128 = vpop.f32.mrb[0].mxu0
        %v3129 = vpop.f32.mrb[0].mxu0
        %v3130 = vadd.f32 %v2618, %v3129
        %v3131 = vpop.f32.mrb[0].mxu0
        %3132 = vmatprep.mubr.bf16.mxu0 0
        %3133 = vmatmul.mubr.bf16.gmra.mrb[0].mxu0 %v2778
        %v3134 = vpop.f32.mrb[0].mxu0
        %v3135 = vadd.f32 %v2618, %v3134
        %v3136 = vpop.f32.mrb[0].mxu0
        %v3137 = vpop.f32.mrb[0].mxu0
        %v3138 = vadd.f32 %v2618, %v3137
        %v3139 = vpop.f32.mrb[0].mxu0
        %3140 = vmatprep.mubr.bf16.mxu0 0
        %3141 = vmatmul.mubr.bf16.gmra.mrb[0].mxu0 %v2779
        %v3142 = vpop.f32.mrb[0].mxu0
        %v3143 = vadd.f32 %v2618, %v3142
        %v3144 = vpop.f32.mrb[0].mxu0
        %v3145 = vpop.f32.mrb[0].mxu0
        %v3146 = vadd.f32 %v2618, %v3145
        %v3147 = vpop.f32.mrb[0].mxu0
        %3148 = vdwg.mxu0
        %v3149 = vlaneseq
        %v3150 = vand.u32 %v3149, 127
        %v3151 = vadd.s32 %v3150, 128
        %v3152 = vld [vmem:[%s443] sm:$0xff]
        %v3153 = vld [vmem:[%s443 + $0x8] sm:$0xff]
        %v3154 = vld [vmem:[%s443 + $0x10] sm:$0xff]
        %v3155 = vld [vmem:[%s443 + $0x18] sm:$0xff]
        %v3156 = vld [vmem:[%s443 + $0x20] sm:$0xff]
        %v3157 = vld [vmem:[%s443 + $0x28] sm:$0xff]
        %v3158 = vld [vmem:[%s443 + $0x30] sm:$0xff]
        %v3159 = vld [vmem:[%s443 + $0x38] sm:$0xff]
        %v3160 = vld [vmem:[%s443 + $0x40] sm:$0xff]
        %v3161 = vld [vmem:[%s443 + $0x48] sm:$0xff]
        %v3162 = vld [vmem:[%s443 + $0x50] sm:$0xff]
        %v3163 = vld [vmem:[%s443 + $0x58] sm:$0xff]
        %v3164 = vld [vmem:[%s443 + $0x60] sm:$0xff]
        %v3165 = vld [vmem:[%s443 + $0x68] sm:$0xff]
        %v3166 = vld [vmem:[%s443 + $0x70] sm:$0xff]
        %v3167 = vld [vmem:[%s443 + $0x78] sm:$0xff]
        %v3168 = vld [vmem:[%s443 + $0x80] sm:$0xff]
        %v3169 = vld [vmem:[%s443 + $0x88] sm:$0xff]
        %v3170 = vld [vmem:[%s443 + $0x90] sm:$0xff]
        %v3171 = vld [vmem:[%s443 + $0x98] sm:$0xff]
        %v3172 = vld [vmem:[%s443 + $0xa0] sm:$0xff]
        %v3173 = vld [vmem:[%s443 + $0xa8] sm:$0xff]
        %v3174 = vld [vmem:[%s443 + $0xb0] sm:$0xff]
        %v3175 = vld [vmem:[%s443 + $0xb8] sm:$0xff]
        %v3176 = vld [vmem:[%s443 + $0xc0] sm:$0xff]
        %v3177 = vld [vmem:[%s443 + $0xc8] sm:$0xff]
        %v3178 = vld [vmem:[%s443 + $0xd0] sm:$0xff]
        %v3179 = vld [vmem:[%s443 + $0xd8] sm:$0xff]
        %v3180 = vld [vmem:[%s443 + $0xe0] sm:$0xff]
        %v3181 = vld [vmem:[%s443 + $0xe8] sm:$0xff]
        %v3182 = vld [vmem:[%s443 + $0xf0] sm:$0xff]
        %v3183 = vld [vmem:[%s443 + $0xf8] sm:$0xff]
        %v3184 = vld [vmem:[%s443 + $0x100] sm:$0xff]
        %v3185 = vld [vmem:[%s443 + $0x108] sm:$0xff]
        %v3186 = vld [vmem:[%s443 + $0x110] sm:$0xff]
        %v3187 = vld [vmem:[%s443 + $0x118] sm:$0xff]
        %v3188 = vld [vmem:[%s443 + $0x120] sm:$0xff]
        %v3189 = vld [vmem:[%s443 + $0x128] sm:$0xff]
        %v3190 = vld [vmem:[%s443 + $0x130] sm:$0xff]
        %v3191 = vld [vmem:[%s443 + $0x138] sm:$0xff]
        %v3192 = vld [vmem:[%s443 + $0x140] sm:$0xff]
        %v3193 = vld [vmem:[%s443 + $0x148] sm:$0xff]
        %v3194 = vld [vmem:[%s443 + $0x150] sm:$0xff]
        %v3195 = vld [vmem:[%s443 + $0x158] sm:$0xff]
        %v3196 = vld [vmem:[%s443 + $0x160] sm:$0xff]
        %v3197 = vld [vmem:[%s443 + $0x168] sm:$0xff]
        %v3198 = vld [vmem:[%s443 + $0x170] sm:$0xff]
        %v3199 = vld [vmem:[%s443 + $0x178] sm:$0xff]
        %v3200 = vld [vmem:[%s443 + $0x180] sm:$0xff]
        %v3201 = vld [vmem:[%s443 + $0x188] sm:$0xff]
        %v3202 = vld [vmem:[%s443 + $0x190] sm:$0xff]
        %v3203 = vld [vmem:[%s443 + $0x198] sm:$0xff]
        %v3204 = vld [vmem:[%s443 + $0x1a0] sm:$0xff]
        %v3205 = vld [vmem:[%s443 + $0x1a8] sm:$0xff]
        %v3206 = vld [vmem:[%s443 + $0x1b0] sm:$0xff]
        %v3207 = vld [vmem:[%s443 + $0x1b8] sm:$0xff]
        %v3208 = vld [vmem:[%s443 + $0x1c0] sm:$0xff]
        %v3209 = vld [vmem:[%s443 + $0x1c8] sm:$0xff]
        %v3210 = vld [vmem:[%s443 + $0x1d0] sm:$0xff]
        %v3211 = vld [vmem:[%s443 + $0x1d8] sm:$0xff]
        %v3212 = vld [vmem:[%s443 + $0x1e0] sm:$0xff]
        %v3213 = vld [vmem:[%s443 + $0x1e8] sm:$0xff]
        %v3214 = vld [vmem:[%s443 + $0x1f0] sm:$0xff]
        %v3215 = vld [vmem:[%s443 + $0x1f8] sm:$0xff]
        %3216 = vset.pattern.permute.xlu0 0
        %3217 = vperm.xlu0 %3216, %v3152
        %v3218 = vpop.permute.xlu0 %3217
        %3219 = vset.pattern.permute.xlu0 0
        %3220 = vperm.xlu0 %3219, %v3153
        %v3221 = vpop.permute.xlu0 %3220
        %3222 = vset.pattern.permute.xlu0 0
        %3223 = vperm.xlu0 %3222, %v3154
        %v3224 = vpop.permute.xlu0 %3223
        %3225 = vset.pattern.permute.xlu0 0
        %3226 = vperm.xlu0 %3225, %v3155
        %v3227 = vpop.permute.xlu0 %3226
        %3228 = vset.pattern.permute.xlu0 0
        %3229 = vperm.xlu0 %3228, %v3156
        %v3230 = vpop.permute.xlu0 %3229
        %3231 = vset.pattern.permute.xlu0 0
        %3232 = vperm.xlu0 %3231, %v3157
        %v3233 = vpop.permute.xlu0 %3232
        %3234 = vset.pattern.permute.xlu0 0
        %3235 = vperm.xlu0 %3234, %v3158
        %v3236 = vpop.permute.xlu0 %3235
        %3237 = vset.pattern.permute.xlu0 0
        %3238 = vperm.xlu0 %3237, %v3159
        %v3239 = vpop.permute.xlu0 %3238
        %3240 = vset.pattern.permute.xlu0 0
        %3241 = vperm.xlu0 %3240, %v3160
        %v3242 = vpop.permute.xlu0 %3241
        %3243 = vset.pattern.permute.xlu0 0
        %3244 = vperm.xlu0 %3243, %v3161
        %v3245 = vpop.permute.xlu0 %3244
        %3246 = vset.pattern.permute.xlu0 0
        %3247 = vperm.xlu0 %3246, %v3162
        %v3248 = vpop.permute.xlu0 %3247
        %3249 = vset.pattern.permute.xlu0 0
        %3250 = vperm.xlu0 %3249, %v3163
        %v3251 = vpop.permute.xlu0 %3250
        %3252 = vset.pattern.permute.xlu0 0
        %3253 = vperm.xlu0 %3252, %v3164
        %v3254 = vpop.permute.xlu0 %3253
        %3255 = vset.pattern.permute.xlu0 0
        %3256 = vperm.xlu0 %3255, %v3165
        %v3257 = vpop.permute.xlu0 %3256
        %3258 = vset.pattern.permute.xlu0 0
        %3259 = vperm.xlu0 %3258, %v3166
        %v3260 = vpop.permute.xlu0 %3259
        %3261 = vset.pattern.permute.xlu0 0
        %3262 = vperm.xlu0 %3261, %v3167
        %v3263 = vpop.permute.xlu0 %3262
        %3264 = vset.pattern.permute.xlu0 0
        %3265 = vperm.xlu0 %3264, %v3168
        %v3266 = vpop.permute.xlu0 %3265
        %3267 = vset.pattern.permute.xlu0 0
        %3268 = vperm.xlu0 %3267, %v3169
        %v3269 = vpop.permute.xlu0 %3268
        %3270 = vset.pattern.permute.xlu0 0
        %3271 = vperm.xlu0 %3270, %v3170
        %v3272 = vpop.permute.xlu0 %3271
        %3273 = vset.pattern.permute.xlu0 0
        %3274 = vperm.xlu0 %3273, %v3171
        %v3275 = vpop.permute.xlu0 %3274
        %3276 = vset.pattern.permute.xlu0 0
        %3277 = vperm.xlu0 %3276, %v3172
        %v3278 = vpop.permute.xlu0 %3277
        %3279 = vset.pattern.permute.xlu0 0
        %3280 = vperm.xlu0 %3279, %v3173
        %v3281 = vpop.permute.xlu0 %3280
        %3282 = vset.pattern.permute.xlu0 0
        %3283 = vperm.xlu0 %3282, %v3174
        %v3284 = vpop.permute.xlu0 %3283
        %3285 = vset.pattern.permute.xlu0 0
        %3286 = vperm.xlu0 %3285, %v3175
        %v3287 = vpop.permute.xlu0 %3286
        %3288 = vset.pattern.permute.xlu0 0
        %3289 = vperm.xlu0 %3288, %v3176
        %v3290 = vpop.permute.xlu0 %3289
        %3291 = vset.pattern.permute.xlu0 0
        %3292 = vperm.xlu0 %3291, %v3177
        %v3293 = vpop.permute.xlu0 %3292
        %3294 = vset.pattern.permute.xlu0 0
        %3295 = vperm.xlu0 %3294, %v3178
        %v3296 = vpop.permute.xlu0 %3295
        %3297 = vset.pattern.permute.xlu0 0
        %3298 = vperm.xlu0 %3297, %v3179
        %v3299 = vpop.permute.xlu0 %3298
        %3300 = vset.pattern.permute.xlu0 0
        %3301 = vperm.xlu0 %3300, %v3180
        %v3302 = vpop.permute.xlu0 %3301
        %3303 = vset.pattern.permute.xlu0 0
        %3304 = vperm.xlu0 %3303, %v3181
        %v3305 = vpop.permute.xlu0 %3304
        %3306 = vset.pattern.permute.xlu0 0
        %3307 = vperm.xlu0 %3306, %v3182
        %v3308 = vpop.permute.xlu0 %3307
        %3309 = vset.pattern.permute.xlu0 0
        %3310 = vperm.xlu0 %3309, %v3183
        %v3311 = vpop.permute.xlu0 %3310
        %3312 = vset.pattern.permute.xlu0 0
        %3313 = vperm.xlu0 %3312, %v3184
        %v3314 = vpop.permute.xlu0 %3313
        %3315 = vset.pattern.permute.xlu0 0
        %3316 = vperm.xlu0 %3315, %v3185
        %v3317 = vpop.permute.xlu0 %3316
        %3318 = vset.pattern.permute.xlu0 0
        %3319 = vperm.xlu0 %3318, %v3186
        %v3320 = vpop.permute.xlu0 %3319
        %3321 = vset.pattern.permute.xlu0 0
        %3322 = vperm.xlu0 %3321, %v3187
        %v3323 = vpop.permute.xlu0 %3322
        %3324 = vset.pattern.permute.xlu0 0
        %3325 = vperm.xlu0 %3324, %v3188
        %v3326 = vpop.permute.xlu0 %3325
        %3327 = vset.pattern.permute.xlu0 0
        %3328 = vperm.xlu0 %3327, %v3189
        %v3329 = vpop.permute.xlu0 %3328
        %3330 = vset.pattern.permute.xlu0 0
        %3331 = vperm.xlu0 %3330, %v3190
        %v3332 = vpop.permute.xlu0 %3331
        %3333 = vset.pattern.permute.xlu0 0
        %3334 = vperm.xlu0 %3333, %v3191
        %v3335 = vpop.permute.xlu0 %3334
        %3336 = vset.pattern.permute.xlu0 0
        %3337 = vperm.xlu0 %3336, %v3192
        %v3338 = vpop.permute.xlu0 %3337
        %3339 = vset.pattern.permute.xlu0 0
        %3340 = vperm.xlu0 %3339, %v3193
        %v3341 = vpop.permute.xlu0 %3340
        %3342 = vset.pattern.permute.xlu0 0
        %3343 = vperm.xlu0 %3342, %v3194
        %v3344 = vpop.permute.xlu0 %3343
        %3345 = vset.pattern.permute.xlu0 0
        %3346 = vperm.xlu0 %3345, %v3195
        %v3347 = vpop.permute.xlu0 %3346
        %3348 = vset.pattern.permute.xlu0 0
        %3349 = vperm.xlu0 %3348, %v3196
        %v3350 = vpop.permute.xlu0 %3349
        %3351 = vset.pattern.permute.xlu0 0
        %3352 = vperm.xlu0 %3351, %v3197
        %v3353 = vpop.permute.xlu0 %3352
        %3354 = vset.pattern.permute.xlu0 0
        %3355 = vperm.xlu0 %3354, %v3198
        %v3356 = vpop.permute.xlu0 %3355
        %3357 = vset.pattern.permute.xlu0 0
        %3358 = vperm.xlu0 %3357, %v3199
        %v3359 = vpop.permute.xlu0 %3358
        %3360 = vset.pattern.permute.xlu0 0
        %3361 = vperm.xlu0 %3360, %v3200
        %v3362 = vpop.permute.xlu0 %3361
        %3363 = vset.pattern.permute.xlu0 0
        %3364 = vperm.xlu0 %3363, %v3201
        %v3365 = vpop.permute.xlu0 %3364
        %3366 = vset.pattern.permute.xlu0 0
        %3367 = vperm.xlu0 %3366, %v3202
        %v3368 = vpop.permute.xlu0 %3367
        %3369 = vset.pattern.permute.xlu0 0
        %3370 = vperm.xlu0 %3369, %v3203
        %v3371 = vpop.permute.xlu0 %3370
        %3372 = vset.pattern.permute.xlu0 0
        %3373 = vperm.xlu0 %3372, %v3204
        %v3374 = vpop.permute.xlu0 %3373
        %3375 = vset.pattern.permute.xlu0 0
        %3376 = vperm.xlu0 %3375, %v3205
        %v3377 = vpop.permute.xlu0 %3376
        %3378 = vset.pattern.permute.xlu0 0
        %3379 = vperm.xlu0 %3378, %v3206
        %v3380 = vpop.permute.xlu0 %3379
        %3381 = vset.pattern.permute.xlu0 0
        %3382 = vperm.xlu0 %3381, %v3207
        %v3383 = vpop.permute.xlu0 %3382
        %3384 = vset.pattern.permute.xlu0 0
        %3385 = vperm.xlu0 %3384, %v3208
        %v3386 = vpop.permute.xlu0 %3385
        %3387 = vset.pattern.permute.xlu0 0
        %3388 = vperm.xlu0 %3387, %v3209
        %v3389 = vpop.permute.xlu0 %3388
        %3390 = vset.pattern.permute.xlu0 0
        %3391 = vperm.xlu0 %3390, %v3210
        %v3392 = vpop.permute.xlu0 %3391
        %3393 = vset.pattern.permute.xlu0 0
        %3394 = vperm.xlu0 %3393, %v3211
        %v3395 = vpop.permute.xlu0 %3394
        %3396 = vset.pattern.permute.xlu0 0
        %3397 = vperm.xlu0 %3396, %v3212
        %v3398 = vpop.permute.xlu0 %3397
        %3399 = vset.pattern.permute.xlu0 0
        %3400 = vperm.xlu0 %3399, %v3213
        %v3401 = vpop.permute.xlu0 %3400
        %3402 = vset.pattern.permute.xlu0 0
        %3403 = vperm.xlu0 %3402, %v3214
        %v3404 = vpop.permute.xlu0 %3403
        %3405 = vset.pattern.permute.xlu0 0
        %3406 = vperm.xlu0 %3405, %v3215
        %v3407 = vpop.permute.xlu0 %3406
        %vm3408 = vcmp.eq.s32.totalorder %v3150, %v3218
        %vm3409 = vcmp.eq.s32.totalorder %v3151, %v3218
        %vm3410 = vcmp.eq.s32.totalorder %v3150, %v3221
        %vm3411 = vcmp.eq.s32.totalorder %v3151, %v3221
        %vm3412 = vcmp.eq.s32.totalorder %v3150, %v3224
        %vm3413 = vcmp.eq.s32.totalorder %v3151, %v3224
        %vm3414 = vcmp.eq.s32.totalorder %v3150, %v3227
        %vm3415 = vcmp.eq.s32.totalorder %v3151, %v3227
        %vm3416 = vcmp.eq.s32.totalorder %v3150, %v3230
        %vm3417 = vcmp.eq.s32.totalorder %v3151, %v3230
        %vm3418 = vcmp.eq.s32.totalorder %v3150, %v3233
        %vm3419 = vcmp.eq.s32.totalorder %v3151, %v3233
        %vm3420 = vcmp.eq.s32.totalorder %v3150, %v3236
        %vm3421 = vcmp.eq.s32.totalorder %v3151, %v3236
        %vm3422 = vcmp.eq.s32.totalorder %v3150, %v3239
        %vm3423 = vcmp.eq.s32.totalorder %v3151, %v3239
        %vm3424 = vcmp.eq.s32.totalorder %v3150, %v3242
        %vm3425 = vcmp.eq.s32.totalorder %v3151, %v3242
        %vm3426 = vcmp.eq.s32.totalorder %v3150, %v3245
        %vm3427 = vcmp.eq.s32.totalorder %v3151, %v3245
        %vm3428 = vcmp.eq.s32.totalorder %v3150, %v3248
        %vm3429 = vcmp.eq.s32.totalorder %v3151, %v3248
        %vm3430 = vcmp.eq.s32.totalorder %v3150, %v3251
        %vm3431 = vcmp.eq.s32.totalorder %v3151, %v3251
        %vm3432 = vcmp.eq.s32.totalorder %v3150, %v3254
        %vm3433 = vcmp.eq.s32.totalorder %v3151, %v3254
        %vm3434 = vcmp.eq.s32.totalorder %v3150, %v3257
        %vm3435 = vcmp.eq.s32.totalorder %v3151, %v3257
        %vm3436 = vcmp.eq.s32.totalorder %v3150, %v3260
        %vm3437 = vcmp.eq.s32.totalorder %v3151, %v3260
        %vm3438 = vcmp.eq.s32.totalorder %v3150, %v3263
        %vm3439 = vcmp.eq.s32.totalorder %v3151, %v3263
        %vm3440 = vcmp.eq.s32.totalorder %v3150, %v3266
        %vm3441 = vcmp.eq.s32.totalorder %v3151, %v3266
        %vm3442 = vcmp.eq.s32.totalorder %v3150, %v3269
        %vm3443 = vcmp.eq.s32.totalorder %v3151, %v3269
        %vm3444 = vcmp.eq.s32.totalorder %v3150, %v3272
        %vm3445 = vcmp.eq.s32.totalorder %v3151, %v3272
        %vm3446 = vcmp.eq.s32.totalorder %v3150, %v3275
        %vm3447 = vcmp.eq.s32.totalorder %v3151, %v3275
        %vm3448 = vcmp.eq.s32.totalorder %v3150, %v3278
        %vm3449 = vcmp.eq.s32.totalorder %v3151, %v3278
        %vm3450 = vcmp.eq.s32.totalorder %v3150, %v3281
        %vm3451 = vcmp.eq.s32.totalorder %v3151, %v3281
        %vm3452 = vcmp.eq.s32.totalorder %v3150, %v3284
        %vm3453 = vcmp.eq.s32.totalorder %v3151, %v3284
        %vm3454 = vcmp.eq.s32.totalorder %v3150, %v3287
        %vm3455 = vcmp.eq.s32.totalorder %v3151, %v3287
        %vm3456 = vcmp.eq.s32.totalorder %v3150, %v3290
        %vm3457 = vcmp.eq.s32.totalorder %v3151, %v3290
        %vm3458 = vcmp.eq.s32.totalorder %v3150, %v3293
        %vm3459 = vcmp.eq.s32.totalorder %v3151, %v3293
        %vm3460 = vcmp.eq.s32.totalorder %v3150, %v3296
        %vm3461 = vcmp.eq.s32.totalorder %v3151, %v3296
        %vm3462 = vcmp.eq.s32.totalorder %v3150, %v3299
        %vm3463 = vcmp.eq.s32.totalorder %v3151, %v3299
        %vm3464 = vcmp.eq.s32.totalorder %v3150, %v3302
        %vm3465 = vcmp.eq.s32.totalorder %v3151, %v3302
        %vm3466 = vcmp.eq.s32.totalorder %v3150, %v3305
        %vm3467 = vcmp.eq.s32.totalorder %v3151, %v3305
        %vm3468 = vcmp.eq.s32.totalorder %v3150, %v3308
        %vm3469 = vcmp.eq.s32.totalorder %v3151, %v3308
        %vm3470 = vcmp.eq.s32.totalorder %v3150, %v3311
        %vm3471 = vcmp.eq.s32.totalorder %v3151, %v3311
        %vm3472 = vcmp.eq.s32.totalorder %v3150, %v3314
        %vm3473 = vcmp.eq.s32.totalorder %v3151, %v3314
        %vm3474 = vcmp.eq.s32.totalorder %v3150, %v3317
        %vm3475 = vcmp.eq.s32.totalorder %v3151, %v3317
        %vm3476 = vcmp.eq.s32.totalorder %v3150, %v3320
        %vm3477 = vcmp.eq.s32.totalorder %v3151, %v3320
        %vm3478 = vcmp.eq.s32.totalorder %v3150, %v3323
        %vm3479 = vcmp.eq.s32.totalorder %v3151, %v3323
        %vm3480 = vcmp.eq.s32.totalorder %v3150, %v3326
        %vm3481 = vcmp.eq.s32.totalorder %v3151, %v3326
        %vm3482 = vcmp.eq.s32.totalorder %v3150, %v3329
        %vm3483 = vcmp.eq.s32.totalorder %v3151, %v3329
        %vm3484 = vcmp.eq.s32.totalorder %v3150, %v3332
        %vm3485 = vcmp.eq.s32.totalorder %v3151, %v3332
        %vm3486 = vcmp.eq.s32.totalorder %v3150, %v3335
        %vm3487 = vcmp.eq.s32.totalorder %v3151, %v3335
        %vm3488 = vcmp.eq.s32.totalorder %v3150, %v3338
        %vm3489 = vcmp.eq.s32.totalorder %v3151, %v3338
        %vm3490 = vcmp.eq.s32.totalorder %v3150, %v3341
        %vm3491 = vcmp.eq.s32.totalorder %v3151, %v3341
        %vm3492 = vcmp.eq.s32.totalorder %v3150, %v3344
        %vm3493 = vcmp.eq.s32.totalorder %v3151, %v3344
        %vm3494 = vcmp.eq.s32.totalorder %v3150, %v3347
        %vm3495 = vcmp.eq.s32.totalorder %v3151, %v3347
        %vm3496 = vcmp.eq.s32.totalorder %v3150, %v3350
        %vm3497 = vcmp.eq.s32.totalorder %v3151, %v3350
        %vm3498 = vcmp.eq.s32.totalorder %v3150, %v3353
        %vm3499 = vcmp.eq.s32.totalorder %v3151, %v3353
        %vm3500 = vcmp.eq.s32.totalorder %v3150, %v3356
        %vm3501 = vcmp.eq.s32.totalorder %v3151, %v3356
        %vm3502 = vcmp.eq.s32.totalorder %v3150, %v3359
        %vm3503 = vcmp.eq.s32.totalorder %v3151, %v3359
        %vm3504 = vcmp.eq.s32.totalorder %v3150, %v3362
        %vm3505 = vcmp.eq.s32.totalorder %v3151, %v3362
        %vm3506 = vcmp.eq.s32.totalorder %v3150, %v3365
        %vm3507 = vcmp.eq.s32.totalorder %v3151, %v3365
        %vm3508 = vcmp.eq.s32.totalorder %v3150, %v3368
        %vm3509 = vcmp.eq.s32.totalorder %v3151, %v3368
        %vm3510 = vcmp.eq.s32.totalorder %v3150, %v3371
        %vm3511 = vcmp.eq.s32.totalorder %v3151, %v3371
        %vm3512 = vcmp.eq.s32.totalorder %v3150, %v3374
        %vm3513 = vcmp.eq.s32.totalorder %v3151, %v3374
        %vm3514 = vcmp.eq.s32.totalorder %v3150, %v3377
        %vm3515 = vcmp.eq.s32.totalorder %v3151, %v3377
        %vm3516 = vcmp.eq.s32.totalorder %v3150, %v3380
        %vm3517 = vcmp.eq.s32.totalorder %v3151, %v3380
        %vm3518 = vcmp.eq.s32.totalorder %v3150, %v3383
        %vm3519 = vcmp.eq.s32.totalorder %v3151, %v3383
        %vm3520 = vcmp.eq.s32.totalorder %v3150, %v3386
        %vm3521 = vcmp.eq.s32.totalorder %v3151, %v3386
        %vm3522 = vcmp.eq.s32.totalorder %v3150, %v3389
        %vm3523 = vcmp.eq.s32.totalorder %v3151, %v3389
        %vm3524 = vcmp.eq.s32.totalorder %v3150, %v3392
        %vm3525 = vcmp.eq.s32.totalorder %v3151, %v3392
        %vm3526 = vcmp.eq.s32.totalorder %v3150, %v3395
        %vm3527 = vcmp.eq.s32.totalorder %v3151, %v3395
        %vm3528 = vcmp.eq.s32.totalorder %v3150, %v3398
        %vm3529 = vcmp.eq.s32.totalorder %v3151, %v3398
        %vm3530 = vcmp.eq.s32.totalorder %v3150, %v3401
        %vm3531 = vcmp.eq.s32.totalorder %v3151, %v3401
        %vm3532 = vcmp.eq.s32.totalorder %v3150, %v3404
        %vm3533 = vcmp.eq.s32.totalorder %v3151, %v3404
        %vm3534 = vcmp.eq.s32.totalorder %v3150, %v3407
        %vm3535 = vcmp.eq.s32.totalorder %v3151, %v3407
        %v3536 = vsel %vm3408, 1, 0
        %v3537 = vsel %vm3409, 1, 0
        %v3538 = vsel %vm3410, 1, 0
        %v3539 = vsel %vm3411, 1, 0
        %v3540 = vsel %vm3412, 1, 0
        %v3541 = vsel %vm3413, 1, 0
        %v3542 = vsel %vm3414, 1, 0
        %v3543 = vsel %vm3415, 1, 0
        %v3544 = vsel %vm3416, 1, 0
        %v3545 = vsel %vm3417, 1, 0
        %v3546 = vsel %vm3418, 1, 0
        %v3547 = vsel %vm3419, 1, 0
        %v3548 = vsel %vm3420, 1, 0
        %v3549 = vsel %vm3421, 1, 0
        %v3550 = vsel %vm3422, 1, 0
        %v3551 = vsel %vm3423, 1, 0
        %v3552 = vsel %vm3424, 1, 0
        %v3553 = vsel %vm3425, 1, 0
        %v3554 = vsel %vm3426, 1, 0
        %v3555 = vsel %vm3427, 1, 0
        %v3556 = vsel %vm3428, 1, 0
        %v3557 = vsel %vm3429, 1, 0
        %v3558 = vsel %vm3430, 1, 0
        %v3559 = vsel %vm3431, 1, 0
        %v3560 = vsel %vm3432, 1, 0
        %v3561 = vsel %vm3433, 1, 0
        %v3562 = vsel %vm3434, 1, 0
        %v3563 = vsel %vm3435, 1, 0
        %v3564 = vsel %vm3436, 1, 0
        %v3565 = vsel %vm3437, 1, 0
        %v3566 = vsel %vm3438, 1, 0
        %v3567 = vsel %vm3439, 1, 0
        %v3568 = vsel %vm3440, 1, 0
        %v3569 = vsel %vm3441, 1, 0
        %v3570 = vsel %vm3442, 1, 0
        %v3571 = vsel %vm3443, 1, 0
        %v3572 = vsel %vm3444, 1, 0
        %v3573 = vsel %vm3445, 1, 0
        %v3574 = vsel %vm3446, 1, 0
        %v3575 = vsel %vm3447, 1, 0
        %v3576 = vsel %vm3448, 1, 0
        %v3577 = vsel %vm3449, 1, 0
        %v3578 = vsel %vm3450, 1, 0
        %v3579 = vsel %vm3451, 1, 0
        %v3580 = vsel %vm3452, 1, 0
        %v3581 = vsel %vm3453, 1, 0
        %v3582 = vsel %vm3454, 1, 0
        %v3583 = vsel %vm3455, 1, 0
        %v3584 = vsel %vm3456, 1, 0
        %v3585 = vsel %vm3457, 1, 0
        %v3586 = vsel %vm3458, 1, 0
        %v3587 = vsel %vm3459, 1, 0
        %v3588 = vsel %vm3460, 1, 0
        %v3589 = vsel %vm3461, 1, 0
        %v3590 = vsel %vm3462, 1, 0
        %v3591 = vsel %vm3463, 1, 0
        %v3592 = vsel %vm3464, 1, 0
        %v3593 = vsel %vm3465, 1, 0
        %v3594 = vsel %vm3466, 1, 0
        %v3595 = vsel %vm3467, 1, 0
        %v3596 = vsel %vm3468, 1, 0
        %v3597 = vsel %vm3469, 1, 0
        %v3598 = vsel %vm3470, 1, 0
        %v3599 = vsel %vm3471, 1, 0
        %v3600 = vsel %vm3472, 1, 0
        %v3601 = vsel %vm3473, 1, 0
        %v3602 = vsel %vm3474, 1, 0
        %v3603 = vsel %vm3475, 1, 0
        %v3604 = vsel %vm3476, 1, 0
        %v3605 = vsel %vm3477, 1, 0
        %v3606 = vsel %vm3478, 1, 0
        %v3607 = vsel %vm3479, 1, 0
        %v3608 = vsel %vm3480, 1, 0
        %v3609 = vsel %vm3481, 1, 0
        %v3610 = vsel %vm3482, 1, 0
        %v3611 = vsel %vm3483, 1, 0
        %v3612 = vsel %vm3484, 1, 0
        %v3613 = vsel %vm3485, 1, 0
        %v3614 = vsel %vm3486, 1, 0
        %v3615 = vsel %vm3487, 1, 0
        %v3616 = vsel %vm3488, 1, 0
        %v3617 = vsel %vm3489, 1, 0
        %v3618 = vsel %vm3490, 1, 0
        %v3619 = vsel %vm3491, 1, 0
        %v3620 = vsel %vm3492, 1, 0
        %v3621 = vsel %vm3493, 1, 0
        %v3622 = vsel %vm3494, 1, 0
        %v3623 = vsel %vm3495, 1, 0
        %v3624 = vsel %vm3496, 1, 0
        %v3625 = vsel %vm3497, 1, 0
        %v3626 = vsel %vm3498, 1, 0
        %v3627 = vsel %vm3499, 1, 0
        %v3628 = vsel %vm3500, 1, 0
        %v3629 = vsel %vm3501, 1, 0
        %v3630 = vsel %vm3502, 1, 0
        %v3631 = vsel %vm3503, 1, 0
        %v3632 = vsel %vm3504, 1, 0
        %v3633 = vsel %vm3505, 1, 0
        %v3634 = vsel %vm3506, 1, 0
        %v3635 = vsel %vm3507, 1, 0
        %v3636 = vsel %vm3508, 1, 0
        %v3637 = vsel %vm3509, 1, 0
        %v3638 = vsel %vm3510, 1, 0
        %v3639 = vsel %vm3511, 1, 0
        %v3640 = vsel %vm3512, 1, 0
        %v3641 = vsel %vm3513, 1, 0
        %v3642 = vsel %vm3514, 1, 0
        %v3643 = vsel %vm3515, 1, 0
        %v3644 = vsel %vm3516, 1, 0
        %v3645 = vsel %vm3517, 1, 0
        %v3646 = vsel %vm3518, 1, 0
        %v3647 = vsel %vm3519, 1, 0
        %v3648 = vsel %vm3520, 1, 0
        %v3649 = vsel %vm3521, 1, 0
        %v3650 = vsel %vm3522, 1, 0
        %v3651 = vsel %vm3523, 1, 0
        %v3652 = vsel %vm3524, 1, 0
        %v3653 = vsel %vm3525, 1, 0
        %v3654 = vsel %vm3526, 1, 0
        %v3655 = vsel %vm3527, 1, 0
        %v3656 = vsel %vm3528, 1, 0
        %v3657 = vsel %vm3529, 1, 0
        %v3658 = vsel %vm3530, 1, 0
        %v3659 = vsel %vm3531, 1, 0
        %v3660 = vsel %vm3532, 1, 0
        %v3661 = vsel %vm3533, 1, 0
        %v3662 = vsel %vm3534, 1, 0
        %v3663 = vsel %vm3535, 1, 0
        %v3664 = vcvt.s32.f32 %v3536
        %v3665 = vcvt.s32.f32 %v3537
        %v3666 = vcvt.s32.f32 %v3538
        %v3667 = vcvt.s32.f32 %v3539
        %v3668 = vcvt.s32.f32 %v3540
        %v3669 = vcvt.s32.f32 %v3541
        %v3670 = vcvt.s32.f32 %v3542
        %v3671 = vcvt.s32.f32 %v3543
        %v3672 = vcvt.s32.f32 %v3544
        %v3673 = vcvt.s32.f32 %v3545
        %v3674 = vcvt.s32.f32 %v3546
        %v3675 = vcvt.s32.f32 %v3547
        %v3676 = vcvt.s32.f32 %v3548
        %v3677 = vcvt.s32.f32 %v3549
        %v3678 = vcvt.s32.f32 %v3550
        %v3679 = vcvt.s32.f32 %v3551
        %v3680 = vcvt.s32.f32 %v3552
        %v3681 = vcvt.s32.f32 %v3553
        %v3682 = vcvt.s32.f32 %v3554
        %v3683 = vcvt.s32.f32 %v3555
        %v3684 = vcvt.s32.f32 %v3556
        %v3685 = vcvt.s32.f32 %v3557
        %v3686 = vcvt.s32.f32 %v3558
        %v3687 = vcvt.s32.f32 %v3559
        %v3688 = vcvt.s32.f32 %v3560
        %v3689 = vcvt.s32.f32 %v3561
        %v3690 = vcvt.s32.f32 %v3562
        %v3691 = vcvt.s32.f32 %v3563
        %v3692 = vcvt.s32.f32 %v3564
        %v3693 = vcvt.s32.f32 %v3565
        %v3694 = vcvt.s32.f32 %v3566
        %v3695 = vcvt.s32.f32 %v3567
        %v3696 = vcvt.s32.f32 %v3568
        %v3697 = vcvt.s32.f32 %v3569
        %v3698 = vcvt.s32.f32 %v3570
        %v3699 = vcvt.s32.f32 %v3571
        %v3700 = vcvt.s32.f32 %v3572
        %v3701 = vcvt.s32.f32 %v3573
        %v3702 = vcvt.s32.f32 %v3574
        %v3703 = vcvt.s32.f32 %v3575
        %v3704 = vcvt.s32.f32 %v3576
        %v3705 = vcvt.s32.f32 %v3577
        %v3706 = vcvt.s32.f32 %v3578
        %v3707 = vcvt.s32.f32 %v3579
        %v3708 = vcvt.s32.f32 %v3580
        %v3709 = vcvt.s32.f32 %v3581
        %v3710 = vcvt.s32.f32 %v3582
        %v3711 = vcvt.s32.f32 %v3583
        %v3712 = vcvt.s32.f32 %v3584
        %v3713 = vcvt.s32.f32 %v3585
        %v3714 = vcvt.s32.f32 %v3586
        %v3715 = vcvt.s32.f32 %v3587
        %v3716 = vcvt.s32.f32 %v3588
        %v3717 = vcvt.s32.f32 %v3589
        %v3718 = vcvt.s32.f32 %v3590
        %v3719 = vcvt.s32.f32 %v3591
        %v3720 = vcvt.s32.f32 %v3592
        %v3721 = vcvt.s32.f32 %v3593
        %v3722 = vcvt.s32.f32 %v3594
        %v3723 = vcvt.s32.f32 %v3595
        %v3724 = vcvt.s32.f32 %v3596
        %v3725 = vcvt.s32.f32 %v3597
        %v3726 = vcvt.s32.f32 %v3598
        %v3727 = vcvt.s32.f32 %v3599
        %v3728 = vcvt.s32.f32 %v3600
        %v3729 = vcvt.s32.f32 %v3601
        %v3730 = vcvt.s32.f32 %v3602
        %v3731 = vcvt.s32.f32 %v3603
        %v3732 = vcvt.s32.f32 %v3604
        %v3733 = vcvt.s32.f32 %v3605
        %v3734 = vcvt.s32.f32 %v3606
        %v3735 = vcvt.s32.f32 %v3607
        %v3736 = vcvt.s32.f32 %v3608
        %v3737 = vcvt.s32.f32 %v3609
        %v3738 = vcvt.s32.f32 %v3610
        %v3739 = vcvt.s32.f32 %v3611
        %v3740 = vcvt.s32.f32 %v3612
        %v3741 = vcvt.s32.f32 %v3613
        %v3742 = vcvt.s32.f32 %v3614
        %v3743 = vcvt.s32.f32 %v3615
        %v3744 = vcvt.s32.f32 %v3616
        %v3745 = vcvt.s32.f32 %v3617
        %v3746 = vcvt.s32.f32 %v3618
        %v3747 = vcvt.s32.f32 %v3619
        %v3748 = vcvt.s32.f32 %v3620
        %v3749 = vcvt.s32.f32 %v3621
        %v3750 = vcvt.s32.f32 %v3622
        %v3751 = vcvt.s32.f32 %v3623
        %v3752 = vcvt.s32.f32 %v3624
        %v3753 = vcvt.s32.f32 %v3625
        %v3754 = vcvt.s32.f32 %v3626
        %v3755 = vcvt.s32.f32 %v3627
        %v3756 = vcvt.s32.f32 %v3628
        %v3757 = vcvt.s32.f32 %v3629
        %v3758 = vcvt.s32.f32 %v3630
        %v3759 = vcvt.s32.f32 %v3631
        %v3760 = vcvt.s32.f32 %v3632
        %v3761 = vcvt.s32.f32 %v3633
        %v3762 = vcvt.s32.f32 %v3634
        %v3763 = vcvt.s32.f32 %v3635
        %v3764 = vcvt.s32.f32 %v3636
        %v3765 = vcvt.s32.f32 %v3637
        %v3766 = vcvt.s32.f32 %v3638
        %v3767 = vcvt.s32.f32 %v3639
        %v3768 = vcvt.s32.f32 %v3640
        %v3769 = vcvt.s32.f32 %v3641
        %v3770 = vcvt.s32.f32 %v3642
        %v3771 = vcvt.s32.f32 %v3643
        %v3772 = vcvt.s32.f32 %v3644
        %v3773 = vcvt.s32.f32 %v3645
        %v3774 = vcvt.s32.f32 %v3646
        %v3775 = vcvt.s32.f32 %v3647
        %v3776 = vcvt.s32.f32 %v3648
        %v3777 = vcvt.s32.f32 %v3649
        %v3778 = vcvt.s32.f32 %v3650
        %v3779 = vcvt.s32.f32 %v3651
        %v3780 = vcvt.s32.f32 %v3652
        %v3781 = vcvt.s32.f32 %v3653
        %v3782 = vcvt.s32.f32 %v3654
        %v3783 = vcvt.s32.f32 %v3655
        %v3784 = vcvt.s32.f32 %v3656
        %v3785 = vcvt.s32.f32 %v3657
        %v3786 = vcvt.s32.f32 %v3658
        %v3787 = vcvt.s32.f32 %v3659
        %v3788 = vcvt.s32.f32 %v3660
        %v3789 = vcvt.s32.f32 %v3661
        %v3790 = vcvt.s32.f32 %v3662
        %v3791 = vcvt.s32.f32 %v3663
        %v3792 = vpack.c.bf16 %v3666, %v3664
        %v3793 = vpack.c.bf16 %v3667, %v3665
        %v3794 = vpack.c.bf16 %v3670, %v3668
        %v3795 = vpack.c.bf16 %v3671, %v3669
        %v3796 = vpack.c.bf16 %v3674, %v3672
        %v3797 = vpack.c.bf16 %v3675, %v3673
        %v3798 = vpack.c.bf16 %v3678, %v3676
        %v3799 = vpack.c.bf16 %v3679, %v3677
        %v3800 = vpack.c.bf16 %v3682, %v3680
        %v3801 = vpack.c.bf16 %v3683, %v3681
        %v3802 = vpack.c.bf16 %v3686, %v3684
        %v3803 = vpack.c.bf16 %v3687, %v3685
        %v3804 = vpack.c.bf16 %v3690, %v3688
        %v3805 = vpack.c.bf16 %v3691, %v3689
        %v3806 = vpack.c.bf16 %v3694, %v3692
        %v3807 = vpack.c.bf16 %v3695, %v3693
        %v3808 = vpack.c.bf16 %v3698, %v3696
        %v3809 = vpack.c.bf16 %v3699, %v3697
        %v3810 = vpack.c.bf16 %v3702, %v3700
        %v3811 = vpack.c.bf16 %v3703, %v3701
        %v3812 = vpack.c.bf16 %v3706, %v3704
        %v3813 = vpack.c.bf16 %v3707, %v3705
        %v3814 = vpack.c.bf16 %v3710, %v3708
        %v3815 = vpack.c.bf16 %v3711, %v3709
        %v3816 = vpack.c.bf16 %v3714, %v3712
        %v3817 = vpack.c.bf16 %v3715, %v3713
        %v3818 = vpack.c.bf16 %v3718, %v3716
        %v3819 = vpack.c.bf16 %v3719, %v3717
        %v3820 = vpack.c.bf16 %v3722, %v3720
        %v3821 = vpack.c.bf16 %v3723, %v3721
        %v3822 = vpack.c.bf16 %v3726, %v3724
        %v3823 = vpack.c.bf16 %v3727, %v3725
        %v3824 = vpack.c.bf16 %v3730, %v3728
        %v3825 = vpack.c.bf16 %v3731, %v3729
        %v3826 = vpack.c.bf16 %v3734, %v3732
        %v3827 = vpack.c.bf16 %v3735, %v3733
        %v3828 = vpack.c.bf16 %v3738, %v3736
        %v3829 = vpack.c.bf16 %v3739, %v3737
        %v3830 = vpack.c.bf16 %v3742, %v3740
        %v3831 = vpack.c.bf16 %v3743, %v3741
        %v3832 = vpack.c.bf16 %v3746, %v3744
        %v3833 = vpack.c.bf16 %v3747, %v3745
        %v3834 = vpack.c.bf16 %v3750, %v3748
        %v3835 = vpack.c.bf16 %v3751, %v3749
        %v3836 = vpack.c.bf16 %v3754, %v3752
        %v3837 = vpack.c.bf16 %v3755, %v3753
        %v3838 = vpack.c.bf16 %v3758, %v3756
        %v3839 = vpack.c.bf16 %v3759, %v3757
        %v3840 = vpack.c.bf16 %v3762, %v3760
        %v3841 = vpack.c.bf16 %v3763, %v3761
        %v3842 = vpack.c.bf16 %v3766, %v3764
        %v3843 = vpack.c.bf16 %v3767, %v3765
        %v3844 = vpack.c.bf16 %v3770, %v3768
        %v3845 = vpack.c.bf16 %v3771, %v3769
        %v3846 = vpack.c.bf16 %v3774, %v3772
        %v3847 = vpack.c.bf16 %v3775, %v3773
        %v3848 = vpack.c.bf16 %v3778, %v3776
        %v3849 = vpack.c.bf16 %v3779, %v3777
        %v3850 = vpack.c.bf16 %v3782, %v3780
        %v3851 = vpack.c.bf16 %v3783, %v3781
        %v3852 = vpack.c.bf16 %v3786, %v3784
        %v3853 = vpack.c.bf16 %v3787, %v3785
        %v3854 = vpack.c.bf16 %v3790, %v3788
        %v3855 = vpack.c.bf16 %v3791, %v3789
        %v3856 = vld [vmem:[%s4] sm:$0xf]
        %v3857 = vld [vmem:[%s4 + $0x4] sm:$0xf]
        %v3858 = vld [vmem:[%s4 + $0x8] sm:$0xf]
        %v3859 = vld [vmem:[%s4 + $0xc] sm:$0xf]
        %v3860 = vld [vmem:[%s4 + $0x10] sm:$0xf]
        %v3861 = vld [vmem:[%s4 + $0x14] sm:$0xf]
        %v3862 = vld [vmem:[%s4 + $0x18] sm:$0xf]
        %v3863 = vld [vmem:[%s4 + $0x1c] sm:$0xf]
        %v3864 = vld [vmem:[%s4 + $0x20] sm:$0xf]
        %v3865 = vld [vmem:[%s4 + $0x24] sm:$0xf]
        %v3866 = vld [vmem:[%s4 + $0x28] sm:$0xf]
        %v3867 = vld [vmem:[%s4 + $0x2c] sm:$0xf]
        %v3868 = vld [vmem:[%s4 + $0x30] sm:$0xf]
        %v3869 = vld [vmem:[%s4 + $0x34] sm:$0xf]
        %v3870 = vld [vmem:[%s4 + $0x38] sm:$0xf]
        %v3871 = vld [vmem:[%s4 + $0x3c] sm:$0xf]
        %v3872 = vld [vmem:[%s4 + $0x40] sm:$0xf]
        %v3873 = vld [vmem:[%s4 + $0x44] sm:$0xf]
        %v3874 = vld [vmem:[%s4 + $0x48] sm:$0xf]
        %v3875 = vld [vmem:[%s4 + $0x4c] sm:$0xf]
        %v3876 = vld [vmem:[%s4 + $0x50] sm:$0xf]
        %v3877 = vld [vmem:[%s4 + $0x54] sm:$0xf]
        %v3878 = vld [vmem:[%s4 + $0x58] sm:$0xf]
        %v3879 = vld [vmem:[%s4 + $0x5c] sm:$0xf]
        %v3880 = vld [vmem:[%s4 + $0x60] sm:$0xf]
        %v3881 = vld [vmem:[%s4 + $0x64] sm:$0xf]
        %v3882 = vld [vmem:[%s4 + $0x68] sm:$0xf]
        %v3883 = vld [vmem:[%s4 + $0x6c] sm:$0xf]
        %v3884 = vld [vmem:[%s4 + $0x70] sm:$0xf]
        %v3885 = vld [vmem:[%s4 + $0x74] sm:$0xf]
        %v3886 = vld [vmem:[%s4 + $0x78] sm:$0xf]
        %v3887 = vld [vmem:[%s4 + $0x7c] sm:$0xf]
        %v3920 = vunpack.c.l.b16 %v3856
        %v3921 = vunpack.c.l.b16 %v3857
        %v3922 = vunpack.c.l.b16 %v3858
        %v3923 = vunpack.c.l.b16 %v3859
        %v3924 = vunpack.c.l.b16 %v3860
        %v3925 = vunpack.c.l.b16 %v3861
        %v3926 = vunpack.c.l.b16 %v3862
        %v3927 = vunpack.c.l.b16 %v3863
        %v3928 = vunpack.c.l.b16 %v3864
        %v3929 = vunpack.c.l.b16 %v3865
        %v3930 = vunpack.c.l.b16 %v3866
        %v3931 = vunpack.c.l.b16 %v3867
        %v3932 = vunpack.c.l.b16 %v3868
        %v3933 = vunpack.c.l.b16 %v3869
        %v3934 = vunpack.c.l.b16 %v3870
        %v3935 = vunpack.c.l.b16 %v3871
        %v3936 = vunpack.c.l.b16 %v3872
        %v3937 = vunpack.c.l.b16 %v3873
        %v3938 = vunpack.c.l.b16 %v3874
        %v3939 = vunpack.c.l.b16 %v3875
        %v3940 = vunpack.c.l.b16 %v3876
        %v3941 = vunpack.c.l.b16 %v3877
        %v3942 = vunpack.c.l.b16 %v3878
        %v3943 = vunpack.c.l.b16 %v3879
        %v3944 = vunpack.c.l.b16 %v3880
        %v3945 = vunpack.c.l.b16 %v3881
        %v3946 = vunpack.c.l.b16 %v3882
        %v3947 = vunpack.c.l.b16 %v3883
        %v3948 = vunpack.c.l.b16 %v3884
        %v3949 = vunpack.c.l.b16 %v3885
        %v3950 = vunpack.c.l.b16 %v3886
        %v3951 = vunpack.c.l.b16 %v3887
        %v3952 = vpack.c.b16 %v3921, %v3920
        %v3953 = vpack.c.b16 %v3923, %v3922
        %v3954 = vpack.c.b16 %v3925, %v3924
        %v3955 = vpack.c.b16 %v3927, %v3926
        %v3956 = vpack.c.b16 %v3929, %v3928
        %v3957 = vpack.c.b16 %v3931, %v3930
        %v3958 = vpack.c.b16 %v3933, %v3932
        %v3959 = vpack.c.b16 %v3935, %v3934
        %v3960 = vpack.c.b16 %v3937, %v3936
        %v3961 = vpack.c.b16 %v3939, %v3938
        %v3962 = vpack.c.b16 %v3941, %v3940
        %v3963 = vpack.c.b16 %v3943, %v3942
        %v3964 = vpack.c.b16 %v3945, %v3944
        %v3965 = vpack.c.b16 %v3947, %v3946
        %v3966 = vpack.c.b16 %v3949, %v3948
        %v3967 = vpack.c.b16 %v3951, %v3950
        %3984 = vmatprep.subr.bf16.mxu0 0
        %3985 = vmatpush1.bf16.msra.mxu0 %v3952
        %3986 = vmatprep.subr.bf16.mxu0 0
        %3987 = vmatpush1.bf16.msra.mxu0 %v3953
        %3988 = vmatprep.subr.bf16.mxu0 0
        %3989 = vmatpush1.bf16.msra.mxu0 %v3954
        %3990 = vmatprep.subr.bf16.mxu0 0
        %3991 = vmatpush1.bf16.msra.mxu0 %v3955
        %3992 = vmatprep.subr.bf16.mxu0 0
        %3993 = vmatpush1.bf16.msra.mxu0 %v3956
        %3994 = vmatprep.subr.bf16.mxu0 0
        %3995 = vmatpush1.bf16.msra.mxu0 %v3957
        %3996 = vmatprep.subr.bf16.mxu0 0
        %3997 = vmatpush1.bf16.msra.mxu0 %v3958
        %3998 = vmatprep.subr.bf16.mxu0 0
        %3999 = vmatpush1.bf16.msra.mxu0 %v3959
        %4000 = vmatprep.subr.bf16.mxu0 0
        %4001 = vmatpush1.bf16.msra.mxu0 %v3960
        %4002 = vmatprep.subr.bf16.mxu0 0
        %4003 = vmatpush1.bf16.msra.mxu0 %v3961
        %4004 = vmatprep.subr.bf16.mxu0 0
        %4005 = vmatpush1.bf16.msra.mxu0 %v3962
        %4006 = vmatprep.subr.bf16.mxu0 0
        %4007 = vmatpush1.bf16.msra.mxu0 %v3963
        %4008 = vmatprep.subr.bf16.mxu0 0
        %4009 = vmatpush1.bf16.msra.mxu0 %v3964
        %4010 = vmatprep.subr.bf16.mxu0 0
        %4011 = vmatpush1.bf16.msra.mxu0 %v3965
        %4012 = vmatprep.subr.bf16.mxu0 0
        %4013 = vmatpush1.bf16.msra.mxu0 %v3966
        %4014 = vmatprep.subr.bf16.mxu0 0
        %4015 = vmatpush1.bf16.msra.mxu0 %v3967
        %4016 = vmatprep.mubr.bf16.mxu0 %v3793
        %4017 = vmatmul.mubr.bf16.gmra.mrb[0].mxu0 %v3792
        %v4018 = vpop.f32.mrb[0].mxu0
        %v4019 = vadd.f32 0.0, %v4018
        %v4020 = vpop.f32.mrb[0].mxu0
        %v4021 = vpop.f32.mrb[0].mxu0
        %v4022 = vadd.f32 0.0, %v4021
        %v4023 = vpop.f32.mrb[0].mxu0
        %4024 = vmatprep.mubr.bf16.mxu0 %v3795
        %4025 = vmatmul.mubr.bf16.gmra.mrb[0].mxu0 %v3794
        %v4026 = vpop.f32.mrb[0].mxu0
        %v4027 = vadd.f32 0.0, %v4026
        %v4028 = vpop.f32.mrb[0].mxu0
        %v4029 = vpop.f32.mrb[0].mxu0
        %v4030 = vadd.f32 0.0, %v4029
        %v4031 = vpop.f32.mrb[0].mxu0
        %4032 = vmatprep.mubr.bf16.mxu0 %v3797
        %4033 = vmatmul.mubr.bf16.gmra.mrb[0].mxu0 %v3796
        %v4034 = vpop.f32.mrb[0].mxu0
        %v4035 = vadd.f32 0.0, %v4034
        %v4036 = vpop.f32.mrb[0].mxu0
        %v4037 = vpop.f32.mrb[0].mxu0
        %v4038 = vadd.f32 0.0, %v4037
        %v4039 = vpop.f32.mrb[0].mxu0
        %4040 = vmatprep.mubr.bf16.mxu0 %v3799
        %4041 = vmatmul.mubr.bf16.gmra.mrb[0].mxu0 %v3798
        %v4042 = vpop.f32.mrb[0].mxu0
        %v4043 = vadd.f32 0.0, %v4042
        %v4044 = vpop.f32.mrb[0].mxu0
        %v4045 = vpop.f32.mrb[0].mxu0
        %v4046 = vadd.f32 0.0, %v4045
        %v4047 = vpop.f32.mrb[0].mxu0
        %4048 = vmatprep.mubr.bf16.mxu0 %v3801
        %4049 = vmatmul.mubr.bf16.gmra.mrb[0].mxu0 %v3800
        %v4050 = vpop.f32.mrb[0].mxu0
        %v4051 = vadd.f32 0.0, %v4050
        %v4052 = vpop.f32.mrb[0].mxu0
        %v4053 = vpop.f32.mrb[0].mxu0
        %v4054 = vadd.f32 0.0, %v4053
        %v4055 = vpop.f32.mrb[0].mxu0
        %4056 = vmatprep.mubr.bf16.mxu0 %v3803
        %4057 = vmatmul.mubr.bf16.gmra.mrb[0].mxu0 %v3802
        %v4058 = vpop.f32.mrb[0].mxu0
        %v4059 = vadd.f32 0.0, %v4058
        %v4060 = vpop.f32.mrb[0].mxu0
        %v4061 = vpop.f32.mrb[0].mxu0
        %v4062 = vadd.f32 0.0, %v4061
        %v4063 = vpop.f32.mrb[0].mxu0
        %4064 = vmatprep.mubr.bf16.mxu0 %v3805
        %4065 = vmatmul.mubr.bf16.gmra.mrb[0].mxu0 %v3804
        %v4066 = vpop.f32.mrb[0].mxu0
        %v4067 = vadd.f32 0.0, %v4066
        %v4068 = vpop.f32.mrb[0].mxu0
        %v4069 = vpop.f32.mrb[0].mxu0
        %v4070 = vadd.f32 0.0, %v4069
        %v4071 = vpop.f32.mrb[0].mxu0
        %4072 = vmatprep.mubr.bf16.mxu0 %v3807
        %4073 = vmatmul.mubr.bf16.gmra.mrb[0].mxu0 %v3806
        %v4074 = vpop.f32.mrb[0].mxu0
        %v4075 = vadd.f32 0.0, %v4074
        %v4076 = vpop.f32.mrb[0].mxu0
        %v4077 = vpop.f32.mrb[0].mxu0
        %v4078 = vadd.f32 0.0, %v4077
        %v4079 = vpop.f32.mrb[0].mxu0
        %4080 = vmatprep.mubr.bf16.mxu0 %v3809
        %4081 = vmatmul.mubr.bf16.gmra.mrb[0].mxu0 %v3808
        %v4082 = vpop.f32.mrb[0].mxu0
        %v4083 = vadd.f32 0.0, %v4082
        %v4084 = vpop.f32.mrb[0].mxu0
        %v4085 = vpop.f32.mrb[0].mxu0
        %v4086 = vadd.f32 0.0, %v4085
        %v4087 = vpop.f32.mrb[0].mxu0
        %4088 = vmatprep.mubr.bf16.mxu0 %v3811
        %4089 = vmatmul.mubr.bf16.gmra.mrb[0].mxu0 %v3810
        %v4090 = vpop.f32.mrb[0].mxu0
        %v4091 = vadd.f32 0.0, %v4090
        %v4092 = vpop.f32.mrb[0].mxu0
        %v4093 = vpop.f32.mrb[0].mxu0
        %v4094 = vadd.f32 0.0, %v4093
        %v4095 = vpop.f32.mrb[0].mxu0
        %4096 = vmatprep.mubr.bf16.mxu0 %v3813
        %4097 = vmatmul.mubr.bf16.gmra.mrb[0].mxu0 %v3812
        %v4098 = vpop.f32.mrb[0].mxu0
        %v4099 = vadd.f32 0.0, %v4098
        %v4100 = vpop.f32.mrb[0].mxu0
        %v4101 = vpop.f32.mrb[0].mxu0
        %v4102 = vadd.f32 0.0, %v4101
        %v4103 = vpop.f32.mrb[0].mxu0
        %4104 = vmatprep.mubr.bf16.mxu0 %v3815
        %4105 = vmatmul.mubr.bf16.gmra.mrb[0].mxu0 %v3814
        %v4106 = vpop.f32.mrb[0].mxu0
        %v4107 = vadd.f32 0.0, %v4106
        %v4108 = vpop.f32.mrb[0].mxu0
        %v4109 = vpop.f32.mrb[0].mxu0
        %v4110 = vadd.f32 0.0, %v4109
        %v4111 = vpop.f32.mrb[0].mxu0
        %4112 = vmatprep.mubr.bf16.mxu0 %v3817
        %4113 = vmatmul.mubr.bf16.gmra.mrb[0].mxu0 %v3816
        %v4114 = vpop.f32.mrb[0].mxu0
        %v4115 = vadd.f32 0.0, %v4114
        %v4116 = vpop.f32.mrb[0].mxu0
        %v4117 = vpop.f32.mrb[0].mxu0
        %v4118 = vadd.f32 0.0, %v4117
        %v4119 = vpop.f32.mrb[0].mxu0
        %4120 = vmatprep.mubr.bf16.mxu0 %v3819
        %4121 = vmatmul.mubr.bf16.gmra.mrb[0].mxu0 %v3818
        %v4122 = vpop.f32.mrb[0].mxu0
        %v4123 = vadd.f32 0.0, %v4122
        %v4124 = vpop.f32.mrb[0].mxu0
        %v4125 = vpop.f32.mrb[0].mxu0
        %v4126 = vadd.f32 0.0, %v4125
        %v4127 = vpop.f32.mrb[0].mxu0
        %4128 = vmatprep.mubr.bf16.mxu0 %v3821
        %4129 = vmatmul.mubr.bf16.gmra.mrb[0].mxu0 %v3820
        %v4130 = vpop.f32.mrb[0].mxu0
        %v4131 = vadd.f32 0.0, %v4130
        %v4132 = vpop.f32.mrb[0].mxu0
        %v4133 = vpop.f32.mrb[0].mxu0
        %v4134 = vadd.f32 0.0, %v4133
        %v4135 = vpop.f32.mrb[0].mxu0
        %4136 = vmatprep.mubr.bf16.mxu0 %v3823
        %4137 = vmatmul.mubr.bf16.gmra.mrb[0].mxu0 %v3822
        %v4138 = vpop.f32.mrb[0].mxu0
        %v4139 = vadd.f32 0.0, %v4138
        %v4140 = vpop.f32.mrb[0].mxu0
        %v4141 = vpop.f32.mrb[0].mxu0
        %v4142 = vadd.f32 0.0, %v4141
        %v4143 = vpop.f32.mrb[0].mxu0
        %4144 = vmatprep.mubr.bf16.mxu0 %v3825
        %4145 = vmatmul.mubr.bf16.gmra.mrb[0].mxu0 %v3824
        %v4146 = vpop.f32.mrb[0].mxu0
        %v4147 = vadd.f32 0.0, %v4146
        %v4148 = vpop.f32.mrb[0].mxu0
        %v4149 = vpop.f32.mrb[0].mxu0
        %v4150 = vadd.f32 0.0, %v4149
        %v4151 = vpop.f32.mrb[0].mxu0
        %4152 = vmatprep.mubr.bf16.mxu0 %v3827
        %4153 = vmatmul.mubr.bf16.gmra.mrb[0].mxu0 %v3826
        %v4154 = vpop.f32.mrb[0].mxu0
        %v4155 = vadd.f32 0.0, %v4154
        %v4156 = vpop.f32.mrb[0].mxu0
        %v4157 = vpop.f32.mrb[0].mxu0
        %v4158 = vadd.f32 0.0, %v4157
        %v4159 = vpop.f32.mrb[0].mxu0
        %4160 = vmatprep.mubr.bf16.mxu0 %v3829
        %4161 = vmatmul.mubr.bf16.gmra.mrb[0].mxu0 %v3828
        %v4162 = vpop.f32.mrb[0].mxu0
        %v4163 = vadd.f32 0.0, %v4162
        %v4164 = vpop.f32.mrb[0].mxu0
        %v4165 = vpop.f32.mrb[0].mxu0
        %v4166 = vadd.f32 0.0, %v4165
        %v4167 = vpop.f32.mrb[0].mxu0
        %4168 = vmatprep.mubr.bf16.mxu0 %v3831
        %4169 = vmatmul.mubr.bf16.gmra.mrb[0].mxu0 %v3830
        %v4170 = vpop.f32.mrb[0].mxu0
        %v4171 = vadd.f32 0.0, %v4170
        %v4172 = vpop.f32.mrb[0].mxu0
        %v4173 = vpop.f32.mrb[0].mxu0
        %v4174 = vadd.f32 0.0, %v4173
        %v4175 = vpop.f32.mrb[0].mxu0
        %4176 = vmatprep.mubr.bf16.mxu0 %v3833
        %4177 = vmatmul.mubr.bf16.gmra.mrb[0].mxu0 %v3832
        %v4178 = vpop.f32.mrb[0].mxu0
        %v4179 = vadd.f32 0.0, %v4178
        %v4180 = vpop.f32.mrb[0].mxu0
        %v4181 = vpop.f32.mrb[0].mxu0
        %v4182 = vadd.f32 0.0, %v4181
        %v4183 = vpop.f32.mrb[0].mxu0
        %4184 = vmatprep.mubr.bf16.mxu0 %v3835
        %4185 = vmatmul.mubr.bf16.gmra.mrb[0].mxu0 %v3834
        %v4186 = vpop.f32.mrb[0].mxu0
        %v4187 = vadd.f32 0.0, %v4186
        %v4188 = vpop.f32.mrb[0].mxu0
        %v4189 = vpop.f32.mrb[0].mxu0
        %v4190 = vadd.f32 0.0, %v4189
        %v4191 = vpop.f32.mrb[0].mxu0
        %4192 = vmatprep.mubr.bf16.mxu0 %v3837
        %4193 = vmatmul.mubr.bf16.gmra.mrb[0].mxu0 %v3836
        %v4194 = vpop.f32.mrb[0].mxu0
        %v4195 = vadd.f32 0.0, %v4194
        %v4196 = vpop.f32.mrb[0].mxu0
        %v4197 = vpop.f32.mrb[0].mxu0
        %v4198 = vadd.f32 0.0, %v4197
        %v4199 = vpop.f32.mrb[0].mxu0
        %4200 = vmatprep.mubr.bf16.mxu0 %v3839
        %4201 = vmatmul.mubr.bf16.gmra.mrb[0].mxu0 %v3838
        %v4202 = vpop.f32.mrb[0].mxu0
        %v4203 = vadd.f32 0.0, %v4202
        %v4204 = vpop.f32.mrb[0].mxu0
        %v4205 = vpop.f32.mrb[0].mxu0
        %v4206 = vadd.f32 0.0, %v4205
        %v4207 = vpop.f32.mrb[0].mxu0
        %4208 = vmatprep.mubr.bf16.mxu0 %v3841
        %4209 = vmatmul.mubr.bf16.gmra.mrb[0].mxu0 %v3840
        %v4210 = vpop.f32.mrb[0].mxu0
        %v4211 = vadd.f32 0.0, %v4210
        %v4212 = vpop.f32.mrb[0].mxu0
        %v4213 = vpop.f32.mrb[0].mxu0
        %v4214 = vadd.f32 0.0, %v4213
        %v4215 = vpop.f32.mrb[0].mxu0
        %4216 = vmatprep.mubr.bf16.mxu0 %v3843
        %4217 = vmatmul.mubr.bf16.gmra.mrb[0].mxu0 %v3842
        %v4218 = vpop.f32.mrb[0].mxu0
        %v4219 = vadd.f32 0.0, %v4218
        %v4220 = vpop.f32.mrb[0].mxu0
        %v4221 = vpop.f32.mrb[0].mxu0
        %v4222 = vadd.f32 0.0, %v4221
        %v4223 = vpop.f32.mrb[0].mxu0
        %4224 = vmatprep.mubr.bf16.mxu0 %v3845
        %4225 = vmatmul.mubr.bf16.gmra.mrb[0].mxu0 %v3844
        %v4226 = vpop.f32.mrb[0].mxu0
        %v4227 = vadd.f32 0.0, %v4226
        %v4228 = vpop.f32.mrb[0].mxu0
        %v4229 = vpop.f32.mrb[0].mxu0
        %v4230 = vadd.f32 0.0, %v4229
        %v4231 = vpop.f32.mrb[0].mxu0
        %4232 = vmatprep.mubr.bf16.mxu0 %v3847
        %4233 = vmatmul.mubr.bf16.gmra.mrb[0].mxu0 %v3846
        %v4234 = vpop.f32.mrb[0].mxu0
        %v4235 = vadd.f32 0.0, %v4234
        %v4236 = vpop.f32.mrb[0].mxu0
        %v4237 = vpop.f32.mrb[0].mxu0
        %v4238 = vadd.f32 0.0, %v4237
        %v4239 = vpop.f32.mrb[0].mxu0
        %4240 = vmatprep.mubr.bf16.mxu0 %v3849
        %4241 = vmatmul.mubr.bf16.gmra.mrb[0].mxu0 %v3848
        %v4242 = vpop.f32.mrb[0].mxu0
        %v4243 = vadd.f32 0.0, %v4242
        %v4244 = vpop.f32.mrb[0].mxu0
        %v4245 = vpop.f32.mrb[0].mxu0
        %v4246 = vadd.f32 0.0, %v4245
        %v4247 = vpop.f32.mrb[0].mxu0
        %4248 = vmatprep.mubr.bf16.mxu0 %v3851
        %4249 = vmatmul.mubr.bf16.gmra.mrb[0].mxu0 %v3850
        %v4250 = vpop.f32.mrb[0].mxu0
        %v4251 = vadd.f32 0.0, %v4250
        %v4252 = vpop.f32.mrb[0].mxu0
        %v4253 = vpop.f32.mrb[0].mxu0
        %v4254 = vadd.f32 0.0, %v4253
        %v4255 = vpop.f32.mrb[0].mxu0
        %4256 = vmatprep.mubr.bf16.mxu0 %v3853
        %4257 = vmatmul.mubr.bf16.gmra.mrb[0].mxu0 %v3852
        %v4258 = vpop.f32.mrb[0].mxu0
        %v4259 = vadd.f32 0.0, %v4258
        %v4260 = vpop.f32.mrb[0].mxu0
        %v4261 = vpop.f32.mrb[0].mxu0
        %v4262 = vadd.f32 0.0, %v4261
        %v4263 = vpop.f32.mrb[0].mxu0
        %4264 = vmatprep.mubr.bf16.mxu0 %v3855
        %4265 = vmatmul.mubr.bf16.gmra.mrb[0].mxu0 %v3854
        %v4266 = vpop.f32.mrb[0].mxu0
        %v4267 = vadd.f32 0.0, %v4266
        %v4268 = vpop.f32.mrb[0].mxu0
        %v4269 = vpop.f32.mrb[0].mxu0
        %v4270 = vadd.f32 0.0, %v4269
        %v4271 = vpop.f32.mrb[0].mxu0
        %4272 = vdwg.mxu0
        %v4273 = vmul.f32 %v4019, %v2279
        %v4274 = vmul.f32 %v4022, %v2282
        %v4275 = vmul.f32 %v4027, %v2287
        %v4276 = vmul.f32 %v4030, %v2290
        %v4277 = vmul.f32 %v4035, %v2295
        %v4278 = vmul.f32 %v4038, %v2298
        %v4279 = vmul.f32 %v4043, %v2303
        %v4280 = vmul.f32 %v4046, %v2306
        %v4281 = vmul.f32 %v4051, %v2311
        %v4282 = vmul.f32 %v4054, %v2314
        %v4283 = vmul.f32 %v4059, %v2319
        %v4284 = vmul.f32 %v4062, %v2322
        %v4285 = vmul.f32 %v4067, %v2327
        %v4286 = vmul.f32 %v4070, %v2330
        %v4287 = vmul.f32 %v4075, %v2335
        %v4288 = vmul.f32 %v4078, %v2338
        %v4289 = vmul.f32 %v4083, %v2343
        %v4290 = vmul.f32 %v4086, %v2346
        %v4291 = vmul.f32 %v4091, %v2351
        %v4292 = vmul.f32 %v4094, %v2354
        %v4293 = vmul.f32 %v4099, %v2359
        %v4294 = vmul.f32 %v4102, %v2362
        %v4295 = vmul.f32 %v4107, %v2367
        %v4296 = vmul.f32 %v4110, %v2370
        %v4297 = vmul.f32 %v4115, %v2375
        %v4298 = vmul.f32 %v4118, %v2378
        %v4299 = vmul.f32 %v4123, %v2383
        %v4300 = vmul.f32 %v4126, %v2386
        %v4301 = vmul.f32 %v4131, %v2391
        %v4302 = vmul.f32 %v4134, %v2394
        %v4303 = vmul.f32 %v4139, %v2399
        %v4304 = vmul.f32 %v4142, %v2402
        %v4305 = vmul.f32 %v4147, %v2407
        %v4306 = vmul.f32 %v4150, %v2410
        %v4307 = vmul.f32 %v4155, %v2415
        %v4308 = vmul.f32 %v4158, %v2418
        %v4309 = vmul.f32 %v4163, %v2423
        %v4310 = vmul.f32 %v4166, %v2426
        %v4311 = vmul.f32 %v4171, %v2431
        %v4312 = vmul.f32 %v4174, %v2434
        %v4313 = vmul.f32 %v4179, %v2439
        %v4314 = vmul.f32 %v4182, %v2442
        %v4315 = vmul.f32 %v4187, %v2447
        %v4316 = vmul.f32 %v4190, %v2450
        %v4317 = vmul.f32 %v4195, %v2455
        %v4318 = vmul.f32 %v4198, %v2458
        %v4319 = vmul.f32 %v4203, %v2463
        %v4320 = vmul.f32 %v4206, %v2466
        %v4321 = vmul.f32 %v4211, %v2471
        %v4322 = vmul.f32 %v4214, %v2474
        %v4323 = vmul.f32 %v4219, %v2479
        %v4324 = vmul.f32 %v4222, %v2482
        %v4325 = vmul.f32 %v4227, %v2487
        %v4326 = vmul.f32 %v4230, %v2490
        %v4327 = vmul.f32 %v4235, %v2495
        %v4328 = vmul.f32 %v4238, %v2498
        %v4329 = vmul.f32 %v4243, %v2503
        %v4330 = vmul.f32 %v4246, %v2506
        %v4331 = vmul.f32 %v4251, %v2511
        %v4332 = vmul.f32 %v4254, %v2514
        %v4333 = vmul.f32 %v4259, %v2519
        %v4334 = vmul.f32 %v4262, %v2522
        %v4335 = vmul.f32 %v4267, %v2527
        %v4336 = vmul.f32 %v4270, %v2530
        %v4337 = vadd.f32 %v4273, %v2895
        %v4338 = vadd.f32 %v4274, %v2898
        %v4339 = vadd.f32 %v4275, %v2903
        %v4340 = vadd.f32 %v4276, %v2906
        %v4341 = vadd.f32 %v4277, %v2911
        %v4342 = vadd.f32 %v4278, %v2914
        %v4343 = vadd.f32 %v4279, %v2919
        %v4344 = vadd.f32 %v4280, %v2922
        %v4345 = vadd.f32 %v4281, %v2927
        %v4346 = vadd.f32 %v4282, %v2930
        %v4347 = vadd.f32 %v4283, %v2935
        %v4348 = vadd.f32 %v4284, %v2938
        %v4349 = vadd.f32 %v4285, %v2943
        %v4350 = vadd.f32 %v4286, %v2946
        %v4351 = vadd.f32 %v4287, %v2951
        %v4352 = vadd.f32 %v4288, %v2954
        %v4353 = vadd.f32 %v4289, %v2959
        %v4354 = vadd.f32 %v4290, %v2962
        %v4355 = vadd.f32 %v4291, %v2967
        %v4356 = vadd.f32 %v4292, %v2970
        %v4357 = vadd.f32 %v4293, %v2975
        %v4358 = vadd.f32 %v4294, %v2978
        %v4359 = vadd.f32 %v4295, %v2983
        %v4360 = vadd.f32 %v4296, %v2986
        %v4361 = vadd.f32 %v4297, %v2991
        %v4362 = vadd.f32 %v4298, %v2994
        %v4363 = vadd.f32 %v4299, %v2999
        %v4364 = vadd.f32 %v4300, %v3002
        %v4365 = vadd.f32 %v4301, %v3007
        %v4366 = vadd.f32 %v4302, %v3010
        %v4367 = vadd.f32 %v4303, %v3015
        %v4368 = vadd.f32 %v4304, %v3018
        %v4369 = vadd.f32 %v4305, %v3023
        %v4370 = vadd.f32 %v4306, %v3026
        %v4371 = vadd.f32 %v4307, %v3031
        %v4372 = vadd.f32 %v4308, %v3034
        %v4373 = vadd.f32 %v4309, %v3039
        %v4374 = vadd.f32 %v4310, %v3042
        %v4375 = vadd.f32 %v4311, %v3047
        %v4376 = vadd.f32 %v4312, %v3050
        %v4377 = vadd.f32 %v4313, %v3055
        %v4378 = vadd.f32 %v4314, %v3058
        %v4379 = vadd.f32 %v4315, %v3063
        %v4380 = vadd.f32 %v4316, %v3066
        %v4381 = vadd.f32 %v4317, %v3071
        %v4382 = vadd.f32 %v4318, %v3074
        %v4383 = vadd.f32 %v4319, %v3079
        %v4384 = vadd.f32 %v4320, %v3082
        %v4385 = vadd.f32 %v4321, %v3087
        %v4386 = vadd.f32 %v4322, %v3090
        %v4387 = vadd.f32 %v4323, %v3095
        %v4388 = vadd.f32 %v4324, %v3098
        %v4389 = vadd.f32 %v4325, %v3103
        %v4390 = vadd.f32 %v4326, %v3106
        %v4391 = vadd.f32 %v4327, %v3111
        %v4392 = vadd.f32 %v4328, %v3114
        %v4393 = vadd.f32 %v4329, %v3119
        %v4394 = vadd.f32 %v4330, %v3122
        %v4395 = vadd.f32 %v4331, %v3127
        %v4396 = vadd.f32 %v4332, %v3130
        %v4397 = vadd.f32 %v4333, %v3135
        %v4398 = vadd.f32 %v4334, %v3138
        %v4399 = vadd.f32 %v4335, %v3143
        %v4400 = vadd.f32 %v4336, %v3146
        %v4401 = vpack.c.bf16 %v4338, %v4337
        %v4402 = vpack.c.bf16 %v4340, %v4339
        %v4403 = vpack.c.bf16 %v4342, %v4341
        %v4404 = vpack.c.bf16 %v4344, %v4343
        %v4405 = vpack.c.bf16 %v4346, %v4345
        %v4406 = vpack.c.bf16 %v4348, %v4347
        %v4407 = vpack.c.bf16 %v4350, %v4349
        %v4408 = vpack.c.bf16 %v4352, %v4351
        %v4409 = vpack.c.bf16 %v4354, %v4353
        %v4410 = vpack.c.bf16 %v4356, %v4355
        %v4411 = vpack.c.bf16 %v4358, %v4357
        %v4412 = vpack.c.bf16 %v4360, %v4359
        %v4413 = vpack.c.bf16 %v4362, %v4361
        %v4414 = vpack.c.bf16 %v4364, %v4363
        %v4415 = vpack.c.bf16 %v4366, %v4365
        %v4416 = vpack.c.bf16 %v4368, %v4367
        %v4417 = vpack.c.bf16 %v4370, %v4369
        %v4418 = vpack.c.bf16 %v4372, %v4371
        %v4419 = vpack.c.bf16 %v4374, %v4373
        %v4420 = vpack.c.bf16 %v4376, %v4375
        %v4421 = vpack.c.bf16 %v4378, %v4377
        %v4422 = vpack.c.bf16 %v4380, %v4379
        %v4423 = vpack.c.bf16 %v4382, %v4381
        %v4424 = vpack.c.bf16 %v4384, %v4383
        %v4425 = vpack.c.bf16 %v4386, %v4385
        %v4426 = vpack.c.bf16 %v4388, %v4387
        %v4427 = vpack.c.bf16 %v4390, %v4389
        %v4428 = vpack.c.bf16 %v4392, %v4391
        %v4429 = vpack.c.bf16 %v4394, %v4393
        %v4430 = vpack.c.bf16 %v4396, %v4395
        %v4431 = vpack.c.bf16 %v4398, %v4397
        %v4432 = vpack.c.bf16 %v4400, %v4399
        %v4433 = vlaneseq
        %v4434 = vshrl.u32 %v4433, 7
        %v4435 = vadd.s32 %v4434, 8
        %v4436 = vadd.s32 %v4434, 16
        %v4437 = vadd.s32 %v4434, 24
        %v4438 = vadd.s32 %v4434, 32
        %v4439 = vadd.s32 %v4434, 40
        %v4440 = vadd.s32 %v4434, 48
        %v4441 = vadd.s32 %v4434, 56
        %v4442 = vadd.s32 %v4434, 64
        %v4443 = vadd.s32 %v4434, 72
        %v4444 = vadd.s32 %v4434, 80
        %v4445 = vadd.s32 %v4434, 88
        %v4446 = vadd.s32 %v4434, 96
        %v4447 = vadd.s32 %v4434, 104
        %v4448 = vadd.s32 %v4434, 112
        %v4449 = vadd.s32 %v4434, 120
        %s4450 = smul.u32 %s29, 128
        %v4451 = vstv %s4450
        %v4452 = vadd.s32 %v4434, %v4451
        %v4453 = vadd.s32 %v4435, %v4451
        %v4454 = vadd.s32 %v4436, %v4451
        %v4455 = vadd.s32 %v4437, %v4451
        %v4456 = vadd.s32 %v4438, %v4451
        %v4457 = vadd.s32 %v4439, %v4451
        %v4458 = vadd.s32 %v4440, %v4451
        %v4459 = vadd.s32 %v4441, %v4451
        %v4460 = vadd.s32 %v4442, %v4451
        %v4461 = vadd.s32 %v4443, %v4451
        %v4462 = vadd.s32 %v4444, %v4451
        %v4463 = vadd.s32 %v4445, %v4451
        %v4464 = vadd.s32 %v4446, %v4451
        %v4465 = vadd.s32 %v4447, %v4451
        %v4466 = vadd.s32 %v4448, %v4451
        %v4467 = vadd.s32 %v4449, %v4451
        %v4468 = vld [vmem:[%s448] sm:$0xf]
        %v4469 = vlaneseq
        %v4470 = vshrl.u32 %v4469, 7
        %v4471 = vsub.s32 0, %v4470
        %v4472 = vrot.slane %v4468, %v4471
        %v4473 = vlaneseq
        %v4474 = vshrl.u32 %v4473, 7
        %v4475 = vsub.s32 1, %v4474
        %v4476 = vrot.slane %v4468, %v4475
        %v4477 = vlaneseq
        %v4478 = vshrl.u32 %v4477, 7
        %v4479 = vsub.s32 2, %v4478
        %v4480 = vrot.slane %v4468, %v4479
        %v4481 = vlaneseq
        %v4482 = vshrl.u32 %v4481, 7
        %v4483 = vsub.s32 3, %v4482
        %v4484 = vrot.slane %v4468, %v4483
        %vm4485 = vcmp.eq.s32.totalorder %v4452, %v4472
        %vm4486 = vcmp.eq.s32.totalorder %v4452, %v4476
        %vm4487 = vcmp.eq.s32.totalorder %v4452, %v4480
        %vm4488 = vcmp.eq.s32.totalorder %v4452, %v4484
        %vm4489 = vcmp.eq.s32.totalorder %v4453, %v4472
        %vm4490 = vcmp.eq.s32.totalorder %v4453, %v4476
        %vm4491 = vcmp.eq.s32.totalorder %v4453, %v4480
        %vm4492 = vcmp.eq.s32.totalorder %v4453, %v4484
        %vm4493 = vcmp.eq.s32.totalorder %v4454, %v4472
        %vm4494 = vcmp.eq.s32.totalorder %v4454, %v4476
        %vm4495 = vcmp.eq.s32.totalorder %v4454, %v4480
        %vm4496 = vcmp.eq.s32.totalorder %v4454, %v4484
        %vm4497 = vcmp.eq.s32.totalorder %v4455, %v4472
        %vm4498 = vcmp.eq.s32.totalorder %v4455, %v4476
        %vm4499 = vcmp.eq.s32.totalorder %v4455, %v4480
        %vm4500 = vcmp.eq.s32.totalorder %v4455, %v4484
        %vm4501 = vcmp.eq.s32.totalorder %v4456, %v4472
        %vm4502 = vcmp.eq.s32.totalorder %v4456, %v4476
        %vm4503 = vcmp.eq.s32.totalorder %v4456, %v4480
        %vm4504 = vcmp.eq.s32.totalorder %v4456, %v4484
        %vm4505 = vcmp.eq.s32.totalorder %v4457, %v4472
        %vm4506 = vcmp.eq.s32.totalorder %v4457, %v4476
        %vm4507 = vcmp.eq.s32.totalorder %v4457, %v4480
        %vm4508 = vcmp.eq.s32.totalorder %v4457, %v4484
        %vm4509 = vcmp.eq.s32.totalorder %v4458, %v4472
        %vm4510 = vcmp.eq.s32.totalorder %v4458, %v4476
        %vm4511 = vcmp.eq.s32.totalorder %v4458, %v4480
        %vm4512 = vcmp.eq.s32.totalorder %v4458, %v4484
        %vm4513 = vcmp.eq.s32.totalorder %v4459, %v4472
        %vm4514 = vcmp.eq.s32.totalorder %v4459, %v4476
        %vm4515 = vcmp.eq.s32.totalorder %v4459, %v4480
        %vm4516 = vcmp.eq.s32.totalorder %v4459, %v4484
        %vm4517 = vcmp.eq.s32.totalorder %v4460, %v4472
        %vm4518 = vcmp.eq.s32.totalorder %v4460, %v4476
        %vm4519 = vcmp.eq.s32.totalorder %v4460, %v4480
        %vm4520 = vcmp.eq.s32.totalorder %v4460, %v4484
        %vm4521 = vcmp.eq.s32.totalorder %v4461, %v4472
        %vm4522 = vcmp.eq.s32.totalorder %v4461, %v4476
        %vm4523 = vcmp.eq.s32.totalorder %v4461, %v4480
        %vm4524 = vcmp.eq.s32.totalorder %v4461, %v4484
        %vm4525 = vcmp.eq.s32.totalorder %v4462, %v4472
        %vm4526 = vcmp.eq.s32.totalorder %v4462, %v4476
        %vm4527 = vcmp.eq.s32.totalorder %v4462, %v4480
        %vm4528 = vcmp.eq.s32.totalorder %v4462, %v4484
        %vm4529 = vcmp.eq.s32.totalorder %v4463, %v4472
        %vm4530 = vcmp.eq.s32.totalorder %v4463, %v4476
        %vm4531 = vcmp.eq.s32.totalorder %v4463, %v4480
        %vm4532 = vcmp.eq.s32.totalorder %v4463, %v4484
        %vm4533 = vcmp.eq.s32.totalorder %v4464, %v4472
        %vm4534 = vcmp.eq.s32.totalorder %v4464, %v4476
        %vm4535 = vcmp.eq.s32.totalorder %v4464, %v4480
        %vm4536 = vcmp.eq.s32.totalorder %v4464, %v4484
        %vm4537 = vcmp.eq.s32.totalorder %v4465, %v4472
        %vm4538 = vcmp.eq.s32.totalorder %v4465, %v4476
        %vm4539 = vcmp.eq.s32.totalorder %v4465, %v4480
        %vm4540 = vcmp.eq.s32.totalorder %v4465, %v4484
        %vm4541 = vcmp.eq.s32.totalorder %v4466, %v4472
        %vm4542 = vcmp.eq.s32.totalorder %v4466, %v4476
        %vm4543 = vcmp.eq.s32.totalorder %v4466, %v4480
        %vm4544 = vcmp.eq.s32.totalorder %v4466, %v4484
        %vm4545 = vcmp.eq.s32.totalorder %v4467, %v4472
        %vm4546 = vcmp.eq.s32.totalorder %v4467, %v4476
        %vm4547 = vcmp.eq.s32.totalorder %v4467, %v4480
        %vm4548 = vcmp.eq.s32.totalorder %v4467, %v4484
        %v4549 = vsel %vm4485, 1, 0
        %v4550 = vsel %vm4486, 1, 0
        %v4551 = vsel %vm4487, 1, 0
        %v4552 = vsel %vm4488, 1, 0
        %v4553 = vsel %vm4489, 1, 0
        %v4554 = vsel %vm4490, 1, 0
        %v4555 = vsel %vm4491, 1, 0
        %v4556 = vsel %vm4492, 1, 0
        %v4557 = vsel %vm4493, 1, 0
        %v4558 = vsel %vm4494, 1, 0
        %v4559 = vsel %vm4495, 1, 0
        %v4560 = vsel %vm4496, 1, 0
        %v4561 = vsel %vm4497, 1, 0
        %v4562 = vsel %vm4498, 1, 0
        %v4563 = vsel %vm4499, 1, 0
        %v4564 = vsel %vm4500, 1, 0
        %v4565 = vsel %vm4501, 1, 0
        %v4566 = vsel %vm4502, 1, 0
        %v4567 = vsel %vm4503, 1, 0
        %v4568 = vsel %vm4504, 1, 0
        %v4569 = vsel %vm4505, 1, 0
        %v4570 = vsel %vm4506, 1, 0
        %v4571 = vsel %vm4507, 1, 0
        %v4572 = vsel %vm4508, 1, 0
        %v4573 = vsel %vm4509, 1, 0
        %v4574 = vsel %vm4510, 1, 0
        %v4575 = vsel %vm4511, 1, 0
        %v4576 = vsel %vm4512, 1, 0
        %v4577 = vsel %vm4513, 1, 0
        %v4578 = vsel %vm4514, 1, 0
        %v4579 = vsel %vm4515, 1, 0
        %v4580 = vsel %vm4516, 1, 0
        %v4581 = vsel %vm4517, 1, 0
        %v4582 = vsel %vm4518, 1, 0
        %v4583 = vsel %vm4519, 1, 0
        %v4584 = vsel %vm4520, 1, 0
        %v4585 = vsel %vm4521, 1, 0
        %v4586 = vsel %vm4522, 1, 0
        %v4587 = vsel %vm4523, 1, 0
        %v4588 = vsel %vm4524, 1, 0
        %v4589 = vsel %vm4525, 1, 0
        %v4590 = vsel %vm4526, 1, 0
        %v4591 = vsel %vm4527, 1, 0
        %v4592 = vsel %vm4528, 1, 0
        %v4593 = vsel %vm4529, 1, 0
        %v4594 = vsel %vm4530, 1, 0
        %v4595 = vsel %vm4531, 1, 0
        %v4596 = vsel %vm4532, 1, 0
        %v4597 = vsel %vm4533, 1, 0
        %v4598 = vsel %vm4534, 1, 0
        %v4599 = vsel %vm4535, 1, 0
        %v4600 = vsel %vm4536, 1, 0
        %v4601 = vsel %vm4537, 1, 0
        %v4602 = vsel %vm4538, 1, 0
        %v4603 = vsel %vm4539, 1, 0
        %v4604 = vsel %vm4540, 1, 0
        %v4605 = vsel %vm4541, 1, 0
        %v4606 = vsel %vm4542, 1, 0
        %v4607 = vsel %vm4543, 1, 0
        %v4608 = vsel %vm4544, 1, 0
        %v4609 = vsel %vm4545, 1, 0
        %v4610 = vsel %vm4546, 1, 0
        %v4611 = vsel %vm4547, 1, 0
        %v4612 = vsel %vm4548, 1, 0
        %v4613 = vcvt.s32.f32 %v4549
        %v4614 = vcvt.s32.f32 %v4550
        %v4615 = vcvt.s32.f32 %v4551
        %v4616 = vcvt.s32.f32 %v4552
        %v4617 = vcvt.s32.f32 %v4553
        %v4618 = vcvt.s32.f32 %v4554
        %v4619 = vcvt.s32.f32 %v4555
        %v4620 = vcvt.s32.f32 %v4556
        %v4621 = vcvt.s32.f32 %v4557
        %v4622 = vcvt.s32.f32 %v4558
        %v4623 = vcvt.s32.f32 %v4559
        %v4624 = vcvt.s32.f32 %v4560
        %v4625 = vcvt.s32.f32 %v4561
        %v4626 = vcvt.s32.f32 %v4562
        %v4627 = vcvt.s32.f32 %v4563
        %v4628 = vcvt.s32.f32 %v4564
        %v4629 = vcvt.s32.f32 %v4565
        %v4630 = vcvt.s32.f32 %v4566
        %v4631 = vcvt.s32.f32 %v4567
        %v4632 = vcvt.s32.f32 %v4568
        %v4633 = vcvt.s32.f32 %v4569
        %v4634 = vcvt.s32.f32 %v4570
        %v4635 = vcvt.s32.f32 %v4571
        %v4636 = vcvt.s32.f32 %v4572
        %v4637 = vcvt.s32.f32 %v4573
        %v4638 = vcvt.s32.f32 %v4574
        %v4639 = vcvt.s32.f32 %v4575
        %v4640 = vcvt.s32.f32 %v4576
        %v4641 = vcvt.s32.f32 %v4577
        %v4642 = vcvt.s32.f32 %v4578
        %v4643 = vcvt.s32.f32 %v4579
        %v4644 = vcvt.s32.f32 %v4580
        %v4645 = vcvt.s32.f32 %v4581
        %v4646 = vcvt.s32.f32 %v4582
        %v4647 = vcvt.s32.f32 %v4583
        %v4648 = vcvt.s32.f32 %v4584
        %v4649 = vcvt.s32.f32 %v4585
        %v4650 = vcvt.s32.f32 %v4586
        %v4651 = vcvt.s32.f32 %v4587
        %v4652 = vcvt.s32.f32 %v4588
        %v4653 = vcvt.s32.f32 %v4589
        %v4654 = vcvt.s32.f32 %v4590
        %v4655 = vcvt.s32.f32 %v4591
        %v4656 = vcvt.s32.f32 %v4592
        %v4657 = vcvt.s32.f32 %v4593
        %v4658 = vcvt.s32.f32 %v4594
        %v4659 = vcvt.s32.f32 %v4595
        %v4660 = vcvt.s32.f32 %v4596
        %v4661 = vcvt.s32.f32 %v4597
        %v4662 = vcvt.s32.f32 %v4598
        %v4663 = vcvt.s32.f32 %v4599
        %v4664 = vcvt.s32.f32 %v4600
        %v4665 = vcvt.s32.f32 %v4601
        %v4666 = vcvt.s32.f32 %v4602
        %v4667 = vcvt.s32.f32 %v4603
        %v4668 = vcvt.s32.f32 %v4604
        %v4669 = vcvt.s32.f32 %v4605
        %v4670 = vcvt.s32.f32 %v4606
        %v4671 = vcvt.s32.f32 %v4607
        %v4672 = vcvt.s32.f32 %v4608
        %v4673 = vcvt.s32.f32 %v4609
        %v4674 = vcvt.s32.f32 %v4610
        %v4675 = vcvt.s32.f32 %v4611
        %v4676 = vcvt.s32.f32 %v4612
        %v4677 = vpack.c.bf16 %v4617, %v4613
        %v4678 = vpack.c.bf16 %v4618, %v4614
        %v4679 = vpack.c.bf16 %v4619, %v4615
        %v4680 = vpack.c.bf16 %v4620, %v4616
        %v4681 = vpack.c.bf16 %v4625, %v4621
        %v4682 = vpack.c.bf16 %v4626, %v4622
        %v4683 = vpack.c.bf16 %v4627, %v4623
        %v4684 = vpack.c.bf16 %v4628, %v4624
        %v4685 = vpack.c.bf16 %v4633, %v4629
        %v4686 = vpack.c.bf16 %v4634, %v4630
        %v4687 = vpack.c.bf16 %v4635, %v4631
        %v4688 = vpack.c.bf16 %v4636, %v4632
        %v4689 = vpack.c.bf16 %v4641, %v4637
        %v4690 = vpack.c.bf16 %v4642, %v4638
        %v4691 = vpack.c.bf16 %v4643, %v4639
        %v4692 = vpack.c.bf16 %v4644, %v4640
        %v4693 = vpack.c.bf16 %v4649, %v4645
        %v4694 = vpack.c.bf16 %v4650, %v4646
        %v4695 = vpack.c.bf16 %v4651, %v4647
        %v4696 = vpack.c.bf16 %v4652, %v4648
        %v4697 = vpack.c.bf16 %v4657, %v4653
        %v4698 = vpack.c.bf16 %v4658, %v4654
        %v4699 = vpack.c.bf16 %v4659, %v4655
        %v4700 = vpack.c.bf16 %v4660, %v4656
        %v4701 = vpack.c.bf16 %v4665, %v4661
        %v4702 = vpack.c.bf16 %v4666, %v4662
        %v4703 = vpack.c.bf16 %v4667, %v4663
        %v4704 = vpack.c.bf16 %v4668, %v4664
        %v4705 = vpack.c.bf16 %v4673, %v4669
        %v4706 = vpack.c.bf16 %v4674, %v4670
        %v4707 = vpack.c.bf16 %v4675, %v4671
        %v4708 = vpack.c.bf16 %v4676, %v4672
        %v4709 = vld [vmem:[%s438] sm:$0xff]
        %v4710 = vld [vmem:[%s438 + $0x8] sm:$0xff]
        %v4711 = vld [vmem:[%s438 + $0x10] sm:$0xff]
        %v4712 = vld [vmem:[%s438 + $0x18] sm:$0xff]
        %v4713 = vld [vmem:[%s438 + $0x20] sm:$0xff]
        %v4714 = vld [vmem:[%s438 + $0x28] sm:$0xff]
        %v4715 = vld [vmem:[%s438 + $0x30] sm:$0xff]
        %v4716 = vld [vmem:[%s438 + $0x38] sm:$0xff]
        %v4717 = vld [vmem:[%s438 + $0x40] sm:$0xff]
        %v4718 = vld [vmem:[%s438 + $0x48] sm:$0xff]
        %v4719 = vld [vmem:[%s438 + $0x50] sm:$0xff]
        %v4720 = vld [vmem:[%s438 + $0x58] sm:$0xff]
        %v4721 = vld [vmem:[%s438 + $0x60] sm:$0xff]
        %v4722 = vld [vmem:[%s438 + $0x68] sm:$0xff]
        %v4723 = vld [vmem:[%s438 + $0x70] sm:$0xff]
        %v4724 = vld [vmem:[%s438 + $0x78] sm:$0xff]
        %4725 = vmatprep.subr.bf16.mxu0 0
        %4726 = vmatpush1.bf16.msra.mxu0 %v4401
        %4727 = vmatprep.subr.bf16.mxu0 0
        %4728 = vmatpush1.bf16.msra.mxu0 %v4402
        %4729 = vmatprep.subr.bf16.mxu0 0
        %4730 = vmatpush1.bf16.msra.mxu0 %v4403
        %4731 = vmatprep.subr.bf16.mxu0 0
        %4732 = vmatpush1.bf16.msra.mxu0 %v4404
        %4733 = vmatprep.subr.bf16.mxu0 0
        %4734 = vmatpush1.bf16.msra.mxu0 %v4405
        %4735 = vmatprep.subr.bf16.mxu0 0
        %4736 = vmatpush1.bf16.msra.mxu0 %v4406
        %4737 = vmatprep.subr.bf16.mxu0 0
        %4738 = vmatpush1.bf16.msra.mxu0 %v4407
        %4739 = vmatprep.subr.bf16.mxu0 0
        %4740 = vmatpush1.bf16.msra.mxu0 %v4408
        %4741 = vmatprep.subr.bf16.mxu0 0
        %4742 = vmatpush1.bf16.msra.mxu0 %v4409
        %4743 = vmatprep.subr.bf16.mxu0 0
        %4744 = vmatpush1.bf16.msra.mxu0 %v4410
        %4745 = vmatprep.subr.bf16.mxu0 0
        %4746 = vmatpush1.bf16.msra.mxu0 %v4411
        %4747 = vmatprep.subr.bf16.mxu0 0
        %4748 = vmatpush1.bf16.msra.mxu0 %v4412
        %4749 = vmatprep.subr.bf16.mxu0 0
        %4750 = vmatpush1.bf16.msra.mxu0 %v4413
        %4751 = vmatprep.subr.bf16.mxu0 0
        %4752 = vmatpush1.bf16.msra.mxu0 %v4414
        %4753 = vmatprep.subr.bf16.mxu0 0
        %4754 = vmatpush1.bf16.msra.mxu0 %v4415
        %4755 = vmatprep.subr.bf16.mxu0 0
        %4756 = vmatpush1.bf16.msra.mxu0 %v4416
        %4757 = vmatprep.mubr.bf16.mxu0 %v4678
        %4758 = vmatmul.mubr.bf16.gmra.mrb[0].mxu0 %v4677
        %v4759 = vpop.f32.mrb[0].mxu0
        %v4760 = vadd.f32 0.0, %v4759
        %v4761 = vpop.f32.mrb[0].mxu0
        %v4762 = vpop.f32.mrb[0].mxu0
        %v4763 = vadd.f32 0.0, %v4762
        %v4764 = vpop.f32.mrb[0].mxu0
        %4765 = vmatprep.mubr.bf16.mxu0 %v4682
        %4766 = vmatmul.mubr.bf16.gmra.mrb[0].mxu0 %v4681
        %v4767 = vpop.f32.mrb[0].mxu0
        %v4768 = vadd.f32 0.0, %v4767
        %v4769 = vpop.f32.mrb[0].mxu0
        %v4770 = vpop.f32.mrb[0].mxu0
        %v4771 = vadd.f32 0.0, %v4770
        %v4772 = vpop.f32.mrb[0].mxu0
        %4773 = vmatprep.mubr.bf16.mxu0 %v4686
        %4774 = vmatmul.mubr.bf16.gmra.mrb[0].mxu0 %v4685
        %v4775 = vpop.f32.mrb[0].mxu0
        %v4776 = vadd.f32 0.0, %v4775
        %v4777 = vpop.f32.mrb[0].mxu0
        %v4778 = vpop.f32.mrb[0].mxu0
        %v4779 = vadd.f32 0.0, %v4778
        %v4780 = vpop.f32.mrb[0].mxu0
        %4781 = vmatprep.mubr.bf16.mxu0 %v4690
        %4782 = vmatmul.mubr.bf16.gmra.mrb[0].mxu0 %v4689
        %v4783 = vpop.f32.mrb[0].mxu0
        %v4784 = vadd.f32 0.0, %v4783
        %v4785 = vpop.f32.mrb[0].mxu0
        %v4786 = vpop.f32.mrb[0].mxu0
        %v4787 = vadd.f32 0.0, %v4786
        %v4788 = vpop.f32.mrb[0].mxu0
        %4789 = vmatprep.mubr.bf16.mxu0 %v4694
        %4790 = vmatmul.mubr.bf16.gmra.mrb[0].mxu0 %v4693
        %v4791 = vpop.f32.mrb[0].mxu0
        %v4792 = vadd.f32 0.0, %v4791
        %v4793 = vpop.f32.mrb[0].mxu0
        %v4794 = vpop.f32.mrb[0].mxu0
        %v4795 = vadd.f32 0.0, %v4794
        %v4796 = vpop.f32.mrb[0].mxu0
        %4797 = vmatprep.mubr.bf16.mxu0 %v4698
        %4798 = vmatmul.mubr.bf16.gmra.mrb[0].mxu0 %v4697
        %v4799 = vpop.f32.mrb[0].mxu0
        %v4800 = vadd.f32 0.0, %v4799
        %v4801 = vpop.f32.mrb[0].mxu0
        %v4802 = vpop.f32.mrb[0].mxu0
        %v4803 = vadd.f32 0.0, %v4802
        %v4804 = vpop.f32.mrb[0].mxu0
        %4805 = vmatprep.mubr.bf16.mxu0 %v4702
        %4806 = vmatmul.mubr.bf16.gmra.mrb[0].mxu0 %v4701
        %v4807 = vpop.f32.mrb[0].mxu0
        %v4808 = vadd.f32 0.0, %v4807
        %v4809 = vpop.f32.mrb[0].mxu0
        %v4810 = vpop.f32.mrb[0].mxu0
        %v4811 = vadd.f32 0.0, %v4810
        %v4812 = vpop.f32.mrb[0].mxu0
        %4813 = vmatprep.mubr.bf16.mxu0 %v4706
        %4814 = vmatmul.mubr.bf16.gmra.mrb[0].mxu0 %v4705
        %v4815 = vpop.f32.mrb[0].mxu0
        %v4816 = vadd.f32 0.0, %v4815
        %v4817 = vpop.f32.mrb[0].mxu0
        %v4818 = vpop.f32.mrb[0].mxu0
        %v4819 = vadd.f32 0.0, %v4818
        %v4820 = vpop.f32.mrb[0].mxu0
        %4821 = vdwg.mxu0
        %4822 = vmatprep.subr.bf16.mxu0 0
        %4823 = vmatpush1.bf16.msra.mxu0 %v4417
        %4824 = vmatprep.subr.bf16.mxu0 0
        %4825 = vmatpush1.bf16.msra.mxu0 %v4418
        %4826 = vmatprep.subr.bf16.mxu0 0
        %4827 = vmatpush1.bf16.msra.mxu0 %v4419
        %4828 = vmatprep.subr.bf16.mxu0 0
        %4829 = vmatpush1.bf16.msra.mxu0 %v4420
        %4830 = vmatprep.subr.bf16.mxu0 0
        %4831 = vmatpush1.bf16.msra.mxu0 %v4421
        %4832 = vmatprep.subr.bf16.mxu0 0
        %4833 = vmatpush1.bf16.msra.mxu0 %v4422
        %4834 = vmatprep.subr.bf16.mxu0 0
        %4835 = vmatpush1.bf16.msra.mxu0 %v4423
        %4836 = vmatprep.subr.bf16.mxu0 0
        %4837 = vmatpush1.bf16.msra.mxu0 %v4424
        %4838 = vmatprep.subr.bf16.mxu0 0
        %4839 = vmatpush1.bf16.msra.mxu0 %v4425
        %4840 = vmatprep.subr.bf16.mxu0 0
        %4841 = vmatpush1.bf16.msra.mxu0 %v4426
        %4842 = vmatprep.subr.bf16.mxu0 0
        %4843 = vmatpush1.bf16.msra.mxu0 %v4427
        %4844 = vmatprep.subr.bf16.mxu0 0
        %4845 = vmatpush1.bf16.msra.mxu0 %v4428
        %4846 = vmatprep.subr.bf16.mxu0 0
        %4847 = vmatpush1.bf16.msra.mxu0 %v4429
        %4848 = vmatprep.subr.bf16.mxu0 0
        %4849 = vmatpush1.bf16.msra.mxu0 %v4430
        %4850 = vmatprep.subr.bf16.mxu0 0
        %4851 = vmatpush1.bf16.msra.mxu0 %v4431
        %4852 = vmatprep.subr.bf16.mxu0 0
        %4853 = vmatpush1.bf16.msra.mxu0 %v4432
        %4854 = vmatprep.mubr.bf16.mxu0 %v4680
        %4855 = vmatmul.mubr.bf16.gmra.mrb[0].mxu0 %v4679
        %v4856 = vpop.f32.mrb[0].mxu0
        %v4857 = vadd.f32 %v4760, %v4856
        %v4858 = vpop.f32.mrb[0].mxu0
        %v4859 = vpop.f32.mrb[0].mxu0
        %v4860 = vadd.f32 %v4763, %v4859
        %v4861 = vpop.f32.mrb[0].mxu0
        %4862 = vmatprep.mubr.bf16.mxu0 %v4684
        %4863 = vmatmul.mubr.bf16.gmra.mrb[0].mxu0 %v4683
        %v4864 = vpop.f32.mrb[0].mxu0
        %v4865 = vadd.f32 %v4768, %v4864
        %v4866 = vpop.f32.mrb[0].mxu0
        %v4867 = vpop.f32.mrb[0].mxu0
        %v4868 = vadd.f32 %v4771, %v4867
        %v4869 = vpop.f32.mrb[0].mxu0
        %4870 = vmatprep.mubr.bf16.mxu0 %v4688
        %4871 = vmatmul.mubr.bf16.gmra.mrb[0].mxu0 %v4687
        %v4872 = vpop.f32.mrb[0].mxu0
        %v4873 = vadd.f32 %v4776, %v4872
        %v4874 = vpop.f32.mrb[0].mxu0
        %v4875 = vpop.f32.mrb[0].mxu0
        %v4876 = vadd.f32 %v4779, %v4875
        %v4877 = vpop.f32.mrb[0].mxu0
        %4878 = vmatprep.mubr.bf16.mxu0 %v4692
        %4879 = vmatmul.mubr.bf16.gmra.mrb[0].mxu0 %v4691
        %v4880 = vpop.f32.mrb[0].mxu0
        %v4881 = vadd.f32 %v4784, %v4880
        %v4882 = vpop.f32.mrb[0].mxu0
        %v4883 = vpop.f32.mrb[0].mxu0
        %v4884 = vadd.f32 %v4787, %v4883
        %v4885 = vpop.f32.mrb[0].mxu0
        %4886 = vmatprep.mubr.bf16.mxu0 %v4696
        %4887 = vmatmul.mubr.bf16.gmra.mrb[0].mxu0 %v4695
        %v4888 = vpop.f32.mrb[0].mxu0
        %v4889 = vadd.f32 %v4792, %v4888
        %v4890 = vpop.f32.mrb[0].mxu0
        %v4891 = vpop.f32.mrb[0].mxu0
        %v4892 = vadd.f32 %v4795, %v4891
        %v4893 = vpop.f32.mrb[0].mxu0
        %4894 = vmatprep.mubr.bf16.mxu0 %v4700
        %4895 = vmatmul.mubr.bf16.gmra.mrb[0].mxu0 %v4699
        %v4896 = vpop.f32.mrb[0].mxu0
        %v4897 = vadd.f32 %v4800, %v4896
        %v4898 = vpop.f32.mrb[0].mxu0
        %v4899 = vpop.f32.mrb[0].mxu0
        %v4900 = vadd.f32 %v4803, %v4899
        %v4901 = vpop.f32.mrb[0].mxu0
        %4902 = vmatprep.mubr.bf16.mxu0 %v4704
        %4903 = vmatmul.mubr.bf16.gmra.mrb[0].mxu0 %v4703
        %v4904 = vpop.f32.mrb[0].mxu0
        %v4905 = vadd.f32 %v4808, %v4904
        %v4906 = vpop.f32.mrb[0].mxu0
        %v4907 = vpop.f32.mrb[0].mxu0
        %v4908 = vadd.f32 %v4811, %v4907
        %v4909 = vpop.f32.mrb[0].mxu0
        %4910 = vmatprep.mubr.bf16.mxu0 %v4708
        %4911 = vmatmul.mubr.bf16.gmra.mrb[0].mxu0 %v4707
        %v4912 = vpop.f32.mrb[0].mxu0
        %v4913 = vadd.f32 %v4816, %v4912
        %v4914 = vpop.f32.mrb[0].mxu0
        %v4915 = vpop.f32.mrb[0].mxu0
        %v4916 = vadd.f32 %v4819, %v4915
        %v4917 = vpop.f32.mrb[0].mxu0
        %4918 = vdwg.mxu0
        %v4919 = vadd.f32 %v4709, %v4857
        %v4920 = vadd.f32 %v4710, %v4860
        %v4921 = vadd.f32 %v4711, %v4865
        %v4922 = vadd.f32 %v4712, %v4868
        %v4923 = vadd.f32 %v4713, %v4873
        %v4924 = vadd.f32 %v4714, %v4876
        %v4925 = vadd.f32 %v4715, %v4881
        %v4926 = vadd.f32 %v4716, %v4884
        %v4927 = vadd.f32 %v4717, %v4889
        %v4928 = vadd.f32 %v4718, %v4892
        %v4929 = vadd.f32 %v4719, %v4897
        %v4930 = vadd.f32 %v4720, %v4900
        %v4931 = vadd.f32 %v4721, %v4905
        %v4932 = vadd.f32 %v4722, %v4908
        %v4933 = vadd.f32 %v4723, %v4913
        %v4934 = vadd.f32 %v4724, %v4916
        %4935 = vst [vmem:[%s438] sm:$0xff] %v4919
        %4936 = vst [vmem:[%s438 + $0x8] sm:$0xff] %v4920
        %4937 = vst [vmem:[%s438 + $0x10] sm:$0xff] %v4921
        %4938 = vst [vmem:[%s438 + $0x18] sm:$0xff] %v4922
        %4939 = vst [vmem:[%s438 + $0x20] sm:$0xff] %v4923
        %4940 = vst [vmem:[%s438 + $0x28] sm:$0xff] %v4924
        %4941 = vst [vmem:[%s438 + $0x30] sm:$0xff] %v4925
        %4942 = vst [vmem:[%s438 + $0x38] sm:$0xff] %v4926
        %4943 = vst [vmem:[%s438 + $0x40] sm:$0xff] %v4927
        %4944 = vst [vmem:[%s438 + $0x48] sm:$0xff] %v4928
        %4945 = vst [vmem:[%s438 + $0x50] sm:$0xff] %v4929
        %4946 = vst [vmem:[%s438 + $0x58] sm:$0xff] %v4930
        %4947 = vst [vmem:[%s438 + $0x60] sm:$0xff] %v4931
        %4948 = vst [vmem:[%s438 + $0x68] sm:$0xff] %v4932
        %4949 = vst [vmem:[%s438 + $0x70] sm:$0xff] %v4933
        %4950 = vst [vmem:[%s438 + $0x78] sm:$0xff] %v4934
        %s4951 = sand.u32 %s296, 1
        %s4952 = scalar_lea.sflag [#allocation3], %s4951
        %s4953 = sand.u32 %s296, 1
        %s4954 = smul.addr %s4953, 128
        %s4955 = scalar_lea.vmem [#allocation2], %s4954
        // Predicated region
        $region69: #{tpu_custom_call.1} parent=63 // pred_check
          %p4956 = pneg %p306
        $region70: #{tpu_custom_call.1} parent=63 // pred_check_branch
          %4958 = sbr.rel (%p4956) target = $region72
        $region71: #{tpu_custom_call.1} parent=63 // pred_region
          %s4959 = smul.u32 16, %s29
          %s4961 = ssub.s32 2048, 2048
          %4962 = vsyncadd %s4952, %s4961
          %s4963 = smul.addr %s4959, 128
          %s4964 = scalar_lea.hbm %s11, %s4963
          %s4965 = sshll.u32 %s4955, 4
          %s4966 = int_to_ptr.vmem [resolvable:$true] %s4965
          %4971 = dma.vmem_to_hbm [thread:$0]  %s4966, 2048, %s4964, %s4952, 128, 128, 8
        $region72: #{tpu_custom_call.1} parent=63 // pred_fallthru
          _
      $region64: #{tpu_custom_call.1} parent=5 // pred_fallthru
        _
      %p4972 = scmp.le.s32.totalorder 2, %s20
      // Predicated region
      $region73: #{tpu_custom_call.1} parent=5 // pred_check
        %p4973 = pneg %p4972
      $region74: #{tpu_custom_call.1} parent=5 // pred_check_branch
        %4975 = sbr.rel (%p4973) target = $region76
      $region75: #{tpu_custom_call.1} parent=5 // pred_region
        %s4976 = ssub.s32 %s20, 2
        // Predicated region
        $region77: #{tpu_custom_call.1} parent=75 // pred_check
          %p4977 = pneg %p312
        $region78: #{tpu_custom_call.1} parent=75 // pred_check_branch
          %4979 = sbr.rel (%p4977) target = $region80
        $region79: #{tpu_custom_call.1} parent=75 // pred_region
          %s4980 = sand.u32 %s297, 1
          %s4981 = scalar_lea.sflag [#allocation3], %s4980
          %s4982 = sand.u32 %s297, 1
          %s4983 = smul.addr %s4982, 128
          %s4984 = scalar_lea.vmem [#allocation2], %s4983
          %4985 = dma.done %s4981, 2048
        $region80: #{tpu_custom_call.1} parent=75 // pred_fallthru
          _
      $region76: #{tpu_custom_call.1} parent=5 // pred_fallthru
        _
    $region6: #{tpu_custom_call.1} parent=1 // loop_footer
      %s24 = sadd.s32 1, %s20
    $region7: #{tpu_custom_call.1} parent=1 // loop_footer_branch
      %19 = sbr.rel target = $region3
    $region8: #{tpu_custom_call.1} parent=1 // loop_exit
      _
    %4986 = vsyncpa [#allocation3], 1
    %s4987 = scalar_lea.sflag [#allocation3], 1
    %4988 = vsyncpa %s4987, 1

</llo_original>
